<compile_context>
chip_gen: v7x
topology: tpu7x:2x2x1
jax: 0.10.0
libtpu: 0.0.40
codegen_flags: <defaults>
</compile_context>

<pallas_src>
import functools
import math

import jax
import jax.numpy as jnp
from jax.experimental import pallas as pl
from jax.experimental.pallas import tpu as pltpu


# ----------------------------------------------------------------------------
# In-kernel building blocks (operate on values already resident in VMEM/vregs)
# ----------------------------------------------------------------------------
def _mha(xq_bf, xkv_bf, wqkv, bqkv, wo, bo, head_masks, dh, d, *, self_attn):
    """Multi-head attention, all heads fused in the lane axis.

    xq_bf/xkv_bf: bf16 inputs (already cast once by the caller).
    wqkv: bf16 (d, 3d) fused [Wq|Wk|Wv]; bqkv: f32 (1, 3d).
    wo: bf16 (d, d); bo: f32 (1, d).
    head_masks: list of (1, d) bool lane masks, one per head.
    """
    f32, bf16 = jnp.float32, jnp.bfloat16
    scale = 1.0 / math.sqrt(dh)

    if self_attn:
        # one fused MXU push produces q|k|v side-by-side (3d lanes dense)
        qkv = jnp.dot(xq_bf, wqkv, preferred_element_type=f32) + bqkv
        q, k, v = qkv[:, :d], qkv[:, d:2 * d], qkv[:, 2 * d:]
    else:
        q = jnp.dot(xq_bf, wqkv[:, :d], preferred_element_type=f32) + bqkv[:, :d]
        kv = jnp.dot(xkv_bf, wqkv[:, d:], preferred_element_type=f32) + bqkv[:, d:]
        k, v = kv[:, :d], kv[:, d:]

    q_bf = q.astype(bf16)
    k_bf = k.astype(bf16)
    v_bf = v.astype(bf16)

    o = None
    for m in head_masks:
        # masked contraction over full d == per-head q_h @ k_h^T
        # (lanes outside head h are zeroed in q, so k's other lanes contribute 0)
        qm = jnp.where(m, q_bf, 0.0)
        s = jax.lax.dot_general(
            qm, k_bf, (((1,), (1,)), ((), ())),
            preferred_element_type=f32) * scale
        s = s - jnp.max(s, axis=-1, keepdims=True)
        p = jnp.exp(s)
        p = p * pl.reciprocal(jnp.sum(p, axis=-1, keepdims=True), approx=True)
        vh = jnp.where(m, v_bf, 0.0)          # head-h value lanes, zeros elsewhere
        oh = jnp.dot(p.astype(bf16), vh, preferred_element_type=f32)
        o = oh if o is None else o + oh       # heads occupy disjoint lanes
    return jnp.dot(o.astype(bf16), wo, preferred_element_type=f32) + bo


def _add_ln(x, y, g, b):
    z = x + y
    mu = jnp.mean(z, axis=-1, keepdims=True)
    ms = jnp.mean(z * z, axis=-1, keepdims=True)     # independent reduce (no chain)
    var = ms - mu * mu
    return (z - mu) * jax.lax.rsqrt(var + 1e-5) * g + b


def _ln(x, g, b):
    mu = jnp.mean(x, axis=-1, keepdims=True)
    ms = jnp.mean(x * x, axis=-1, keepdims=True)
    var = ms - mu * mu
    return (x - mu) * jax.lax.rsqrt(var + 1e-5) * g + b


def _ffn(x_bf, w1, b1, w2, b2):
    f32, bf16 = jnp.float32, jnp.bfloat16
    h = jnp.dot(x_bf, w1, preferred_element_type=f32) + b1
    h = jnp.maximum(h, 0.0)
    return jnp.dot(h.astype(bf16), w2, preferred_element_type=f32) + b2


# ----------------------------------------------------------------------------
# Fused decoder kernel: all layers, all sub-blocks, one pallas_call
# ----------------------------------------------------------------------------
def _p2p_decoder_kernel(pair_ref, mem_ref, ctx_ref,
                        wqkv_ref, bqkv_ref, wo_ref, bo_ref,
                        ffn_w1_ref, ffn_b1_ref, ffn_w2_ref, ffn_b2_ref,
                        ln_g_ref, ln_b_ref, fn_ref,
                        *out_refs,
                        num_layers, nhead, apply_final_norm, unary_output,
                        out_pad):
    f32, bf16 = jnp.float32, jnp.bfloat16
    pair = pair_ref[...]
    mem = mem_ref[...]
    ctx = ctx_ref[...]
    M, d = pair.shape
    dh = d // nhead

    # per-head lane masks (static, hoisted out of the layer loop)
    lane = jax.lax.broadcasted_iota(jnp.int32, (1, d), 1)
    head_masks = [(lane >= h * dh) & (lane < (h + 1) * dh) for h in range(nhead)]

    mem_bf = mem.astype(bf16)      # loop-invariant: cast once

    e2e_pair = None
    e2n_pair = None
    unary = None

    # TODO(synk): switch to lax.fori_loop over the stacked weights if
    # num_layers grows beyond ~4 (static unroll does not bound vreg live ranges).
    for l in range(num_layers):
        ln_g = ln_g_ref[l]
        ln_b = ln_b_ref[l]

        # --- edge-to-edge self-attention over pair + subject/object context ---
        pair_ctx_bf = (pair + ctx).astype(bf16)
        e2e_attn = _mha(pair_ctx_bf, pair_ctx_bf,
                        wqkv_ref[l, 0], bqkv_ref[l, 0],
                        wo_ref[l, 0], bo_ref[l, 0],
                        head_masks, dh, d, self_attn=True)
        if not unary_output:
            e2e_pair = e2e_attn if e2e_pair is None else e2e_pair + e2e_attn
        pair = _add_ln(pair, e2e_attn, ln_g[0], ln_b[0])

        # --- edge-to-node cross-attention ---
        e2n_attn = _mha(pair.astype(bf16), mem_bf,
                        wqkv_ref[l, 1], bqkv_ref[l, 1],
                        wo_ref[l, 1], bo_ref[l, 1],
                        head_masks, dh, d, self_attn=False)
        if not unary_output:
            e2n_pair = e2n_attn if e2n_pair is None else e2n_pair + e2n_attn
        pair = _add_ln(pair, e2n_attn, ln_g[1], ln_b[1])

        # --- feed-forward ---
        ff = _ffn(pair.astype(bf16), ffn_w1_ref[l], ffn_b1_ref[l],
                  ffn_w2_ref[l], ffn_b2_ref[l])
        pair = _add_ln(pair, ff, ln_g[2], ln_b[2])

        # --- node-to-edge cross-attention -> refreshed unary features ---
        # (dead branch when unary is not returned: skipped entirely)
        if unary_output:
            n2e_attn = _mha(mem_bf, pair.astype(bf16),
                            wqkv_ref[l, 2], bqkv_ref[l, 2],
                            wo_ref[l, 2], bo_ref[l, 2],
                            head_masks, dh, d, self_attn=False)
            unary = _add_ln(mem, n2e_attn, ln_g[3], ln_b[3])

    if apply_final_norm:
        g, b = fn_ref[0], fn_ref[1]
        pair = _ln(pair, g, b)
        if unary_output:
            unary = _ln(unary, g, b)

    if unary_output:
        unary_out_ref, pair_out_ref = out_refs
        unary_out_ref[...] = unary
        pair_out_ref[...] = pair
    else:
        # single lane-dense (multiple-of-128) slab store: [pair | e2e | e2n | pad]
        (slab_ref,) = out_refs
        parts = [pair, e2e_pair, e2n_pair]
        if out_pad > 0:
            parts.append(jnp.zeros((M, out_pad), f32))
        slab_ref[...] = jnp.concatenate(parts, axis=-1)


def _full_spec(shape):
    nd = len(shape)
    return pl.BlockSpec(shape, lambda i, _nd=nd: (0,) * _nd)


# ----------------------------------------------------------------------------
# P2PDecoder forward (mirrors the PyTorch module semantics)
# ----------------------------------------------------------------------------
def p2p_decoder_forward(params, tgt, memory, ind, *, num_layers, nhead,
                        norm_params=None, unary_output=False,
                        tgt_mask=None, memory_mask=None,
                        tgt_key_padding_mask=None, memory_key_padding_mask=None):
    assert (tgt_mask is None and memory_mask is None and
            tgt_key_padding_mask is None and memory_key_padding_mask is None), \
        "attention masks are not supported by the fused Pallas P2PDecoder"
    # TODO(synk): dropout (training mode) of the original layer is not implemented.

    if num_layers == 0:
        return (memory[0], tgt) if unary_output else tgt

    tgt = tgt.astype(jnp.float32)
    mem = memory[0].astype(jnp.float32)
    M, d = tgt.shape
    N = mem.shape[0]
    assert d % nhead == 0

    # subject/object node context: tiny (M, d) XLA gather, layer-invariant
    # (replaces the previous (M, N) one-hot matrix + in-kernel f32 matmul).
    ctx = jnp.take(mem, ind[:, 0], axis=0) + jnp.take(mem, ind[:, 1], axis=0)

    apply_final_norm = norm_params is not None
    if apply_final_norm:
        fn = jnp.stack([norm_params["g"].reshape(1, d),
                        norm_params["b"].reshape(1, d)], axis=0)
    else:
        fn = jnp.zeros((2, 1, d), jnp.float32)

    inputs = (
        tgt, mem, ctx,
        params["attn_wqkv"], params["attn_bqkv"],
        params["attn_wo"], params["attn_bo"],
        params["ffn_w1"], params["ffn_b1"],
        params["ffn_w2"], params["ffn_b2"],
        params["ln_g"], params["ln_b"], fn,
    )

    if unary_output:
        out_shape = (jax.ShapeDtypeStruct((N, d), jnp.float32),   # unary
                     jax.ShapeDtypeStruct((M, d), jnp.float32))   # pair
        out_pad = 0
    else:
        slab_w = -(-(3 * d) // 128) * 128          # round 3d up to multiple of 128
        out_pad = slab_w - 3 * d
        out_shape = (jax.ShapeDtypeStruct((M, slab_w), jnp.float32),)

    kernel = functools.partial(
        _p2p_decoder_kernel,
        num_layers=num_layers, nhead=nhead,
        apply_final_norm=apply_final_norm,
        unary_output=unary_output, out_pad=out_pad)

    outs = pl.pallas_call(
        kernel,
        out_shape=out_shape,
        grid=(1,),
        in_specs=[_full_spec(x.shape) for x in inputs],
        out_specs=tuple(_full_spec(s.shape) for s in out_shape),
        compiler_params=pltpu.CompilerParams(
            dimension_semantics=("arbitrary",),
            # v7x has only 64 MiB physical VMEM; keep the scoped limit explicit.
            vmem_limit_bytes=64 * 1024 * 1024),
    )(*inputs)
    # TODO(synk): for large M, add an M-tile "parallel" grid axis + flash-style
    #             e2e attention so v7x's second TensorCore is used and the
    #             O(M^2) score matrix is tiled.

    if unary_output:
        unary, pair = outs
        return (unary, pair)
    (slab,) = outs
    pair = slab[:, :d]
    e2e_pair = slab[:, d:2 * d]
    e2n_pair = slab[:, 2 * d:3 * d]
    return (pair, e2e_pair, e2n_pair)


# ----------------------------------------------------------------------------
# Deterministic parameter initialization (weights stored bf16 for the MXU)
# ----------------------------------------------------------------------------
def _init_linear(key, din, dout):
    k1, k2 = jax.random.split(key)
    bound = 1.0 / math.sqrt(din)
    w = jax.random.uniform(k1, (din, dout), jnp.float32, -bound, bound)
    b = jax.random.uniform(k2, (dout,), jnp.float32, -bound, bound)
    return w, b


def _init_attn(key, d):
    ks = jax.random.split(key, 4)
    wq, bq = _init_linear(ks[0], d, d)
    wk, bk = _init_linear(ks[1], d, d)
    wv, bv = _init_linear(ks[2], d, d)
    wo, bo = _init_linear(ks[3], d, d)
    wqkv = jnp.concatenate([wq, wk, wv], axis=1).astype(jnp.bfloat16)  # (d, 3d)
    bqkv = jnp.concatenate([bq, bk, bv], axis=0).reshape(1, 3 * d)     # (1, 3d) f32
    return wqkv, bqkv, wo.astype(jnp.bfloat16), bo.reshape(1, d)


def init_layer_params(key, d_model, dim_ff):
    ks = jax.random.split(key, 5)
    blocks = [_init_attn(ks[i], d_model) for i in range(3)]   # e2e, e2n, n2e
    wqkv = jnp.stack([b[0] for b in blocks], axis=0)          # (3, d, 3d) bf16
    bqkv = jnp.stack([b[1] for b in blocks], axis=0)          # (3, 1, 3d) f32
    wo = jnp.stack([b[2] for b in blocks], axis=0)            # (3, d, d)  bf16
    bo = jnp.stack([b[3] for b in blocks], axis=0)            # (3, 1, d)  f32
    w1, b1 = _init_linear(ks[3], d_model, dim_ff)
    w2, b2 = _init_linear(ks[4], dim_ff, d_model)
    return dict(
        attn_wqkv=wqkv, attn_bqkv=bqkv, attn_wo=wo, attn_bo=bo,
        ffn_w1=w1.astype(jnp.bfloat16), ffn_b1=b1.reshape(1, dim_ff),
        ffn_w2=w2.astype(jnp.bfloat16), ffn_b2=b2.reshape(1, d_model),
        ln_g=jnp.ones((4, 1, d_model), jnp.float32),   # ln1..ln4 gammas
        ln_b=jnp.zeros((4, 1, d_model), jnp.float32),  # ln1..ln4 betas
    )


def init_p2p_decoder(key, num_layers, d_model, dim_ff):
    # _get_clones deep-copies one layer => all layers start from identical weights.
    layer = init_layer_params(key, d_model, dim_ff)
    return {k: jnp.stack([v] * num_layers, axis=0) for k, v in layer.items()}


# ----------------------------------------------------------------------------
if __name__ == "__main__":
    key = jax.random.PRNGKey(0)
    k_tgt, k_mem, k_ind, k_par = jax.random.split(key, 4)

    d_model = 32
    nhead = 2
    dim_ff = 64
    num_layers = 2
    num_pairs = 8    # tgt length (relation pair proposals)
    num_nodes = 8    # memory[0] length (object/unary proposals)

    tgt = jax.random.normal(k_tgt, (num_pairs, d_model), jnp.float32)
    mem0 = jax.random.normal(k_mem, (num_nodes, d_model), jnp.float32)
    memory = [mem0]
    ind = jax.random.randint(k_ind, (num_pairs, 2), 0, num_nodes)

    params = init_p2p_decoder(k_par, num_layers, d_model, dim_ff)
    norm_params = dict(g=jnp.ones((d_model,), jnp.float32),
                       b=jnp.zeros((d_model,), jnp.float32))

    # default path: (pair, e2e_pair, e2n_pair)
    pair_out, e2e_pair, e2n_pair = p2p_decoder_forward(
        params, tgt, memory, ind,
        num_layers=num_layers, nhead=nhead,
        norm_params=norm_params, unary_output=False,
    )
    jax.block_until_ready((pair_out, e2e_pair, e2n_pair))
    assert pair_out.shape == (num_pairs, d_model)
    assert e2e_pair.shape == (num_pairs, d_model)
    assert e2n_pair.shape == (num_pairs, d_model)
    assert bool(jnp.all(jnp.isfinite(pair_out)))
    assert bool(jnp.all(jnp.isfinite(e2e_pair)))
    assert bool(jnp.all(jnp.isfinite(e2n_pair)))

    # unary path: (unary, pair)
    unary_out, pair_out2 = p2p_decoder_forward(
        params, tgt, memory, ind,
        num_layers=num_layers, nhead=nhead,
        norm_params=norm_params, unary_output=True,
    )
    jax.block_until_ready((unary_out, pair_out2))
    assert unary_out.shape == (num_nodes, d_model)
    assert pair_out2.shape == (num_pairs, d_model)
    assert bool(jnp.all(jnp.isfinite(unary_out)))
    assert bool(jnp.all(jnp.isfinite(pair_out2)))

    print("KERNEL_OK")
</pallas_src>

<mosaic_0001>
module attributes {stable_mosaic.version = 11 : i64} {
  func.func @_p2p_decoder_kernel(%arg0: i32, %arg1: memref<8x32xf32, #tpu.memory_space<vmem>>, %arg2: memref<8x32xf32, #tpu.memory_space<vmem>>, %arg3: memref<8x32xf32, #tpu.memory_space<vmem>>, %arg4: memref<2x3x32x96xbf16, #tpu.memory_space<vmem>>, %arg5: memref<2x3x1x96xf32, #tpu.memory_space<vmem>>, %arg6: memref<2x3x32x32xbf16, #tpu.memory_space<vmem>>, %arg7: memref<2x3x1x32xf32, #tpu.memory_space<vmem>>, %arg8: memref<2x32x64xbf16, #tpu.memory_space<vmem>>, %arg9: memref<2x1x64xf32, #tpu.memory_space<vmem>>, %arg10: memref<2x64x32xbf16, #tpu.memory_space<vmem>>, %arg11: memref<2x1x32xf32, #tpu.memory_space<vmem>>, %arg12: memref<2x4x1x32xf32, #tpu.memory_space<vmem>>, %arg13: memref<2x4x1x32xf32, #tpu.memory_space<vmem>>, %arg14: memref<2x1x32xf32, #tpu.memory_space<vmem>>, %arg15: memref<8x128xf32, #tpu.memory_space<vmem>>) attributes {dimension_semantics = [#tpu.dimension_semantics<arbitrary>], iteration_bounds = array<i64: 1>, scalar_prefetch = 0 : i64, scratch_operands = 0 : i64, tpu.core_type = #tpu.core_type<tc>, window_params = [{pipeline_mode = #tpu.pipeline_mode<synchronous>, transform_indices = @transform_0, window_bounds = array<i64: 8, 32>}, {pipeline_mode = #tpu.pipeline_mode<synchronous>, transform_indices = @transform_1, window_bounds = array<i64: 8, 32>}, {pipeline_mode = #tpu.pipeline_mode<synchronous>, transform_indices = @transform_2, window_bounds = array<i64: 8, 32>}, {pipeline_mode = #tpu.pipeline_mode<synchronous>, transform_indices = @transform_3, window_bounds = array<i64: 2, 3, 32, 96>}, {pipeline_mode = #tpu.pipeline_mode<synchronous>, transform_indices = @transform_4, window_bounds = array<i64: 2, 3, 1, 96>}, {pipeline_mode = #tpu.pipeline_mode<synchronous>, transform_indices = @transform_5, window_bounds = array<i64: 2, 3, 32, 32>}, {pipeline_mode = #tpu.pipeline_mode<synchronous>, transform_indices = @transform_6, window_bounds = array<i64: 2, 3, 1, 32>}, {pipeline_mode = #tpu.pipeline_mode<synchronous>, transform_indices = @transform_7, window_bounds = array<i64: 2, 32, 64>}, {pipeline_mode = #tpu.pipeline_mode<synchronous>, transform_indices = @transform_8, window_bounds = array<i64: 2, 1, 64>}, {pipeline_mode = #tpu.pipeline_mode<synchronous>, transform_indices = @transform_9, window_bounds = array<i64: 2, 64, 32>}, {pipeline_mode = #tpu.pipeline_mode<synchronous>, transform_indices = @transform_10, window_bounds = array<i64: 2, 1, 32>}, {pipeline_mode = #tpu.pipeline_mode<synchronous>, transform_indices = @transform_11, window_bounds = array<i64: 2, 4, 1, 32>}, {pipeline_mode = #tpu.pipeline_mode<synchronous>, transform_indices = @transform_12, window_bounds = array<i64: 2, 4, 1, 32>}, {pipeline_mode = #tpu.pipeline_mode<synchronous>, transform_indices = @transform_13, window_bounds = array<i64: 2, 1, 32>}, {pipeline_mode = #tpu.pipeline_mode<synchronous>, transform_indices = @transform_14, window_bounds = array<i64: 8, 128>}]} {
    %c0 = arith.constant 0 : index
    %c0_0 = arith.constant 0 : index
    %0 = vector.load %arg1[%c0, %c0_0] : memref<8x32xf32, #tpu.memory_space<vmem>>, vector<8x32xf32>
    %c0_1 = arith.constant 0 : index
    %c0_2 = arith.constant 0 : index
    %1 = vector.load %arg2[%c0_1, %c0_2] : memref<8x32xf32, #tpu.memory_space<vmem>>, vector<8x32xf32>
    %c0_3 = arith.constant 0 : index
    %c0_4 = arith.constant 0 : index
    %2 = vector.load %arg3[%c0_3, %c0_4] : memref<8x32xf32, #tpu.memory_space<vmem>>, vector<8x32xf32>
    %3 = tpu.iota {dimensions = array<i32: 1>} : vector<1x32xi32>
    %c0_i32 = arith.constant 0 : i32
    %4 = vector.broadcast %c0_i32 : i32 to vector<1x32xi32>
    %5 = arith.cmpi sge, %3, %4 : vector<1x32xi32>
    %c16_i32 = arith.constant 16 : i32
    %6 = vector.broadcast %c16_i32 : i32 to vector<1x32xi32>
    %7 = arith.cmpi slt, %3, %6 : vector<1x32xi32>
    %8 = arith.andi %5, %7 : vector<1x32xi1>
    %c16_i32_5 = arith.constant 16 : i32
    %9 = vector.broadcast %c16_i32_5 : i32 to vector<1x32xi32>
    %10 = arith.cmpi sge, %3, %9 : vector<1x32xi32>
    %c32_i32 = arith.constant 32 : i32
    %11 = vector.broadcast %c32_i32 : i32 to vector<1x32xi32>
    %12 = arith.cmpi slt, %3, %11 : vector<1x32xi32>
    %13 = arith.andi %10, %12 : vector<1x32xi1>
    %14 = arith.truncf %1 : vector<8x32xf32> to vector<8x32xbf16>
    %c0_6 = arith.constant 0 : index
    %c0_7 = arith.constant 0 : index
    %c0_8 = arith.constant 0 : index
    %c0_9 = arith.constant 0 : index
    %15 = vector.load %arg12[%c0_6, %c0_7, %c0_8, %c0_9] : memref<2x4x1x32xf32, #tpu.memory_space<vmem>>, vector<1x4x1x32xf32>
    %16 = vector.shape_cast %15 : vector<1x4x1x32xf32> to vector<4x1x32xf32>
    %c0_10 = arith.constant 0 : index
    %c0_11 = arith.constant 0 : index
    %c0_12 = arith.constant 0 : index
    %c0_13 = arith.constant 0 : index
    %17 = vector.load %arg13[%c0_10, %c0_11, %c0_12, %c0_13] : memref<2x4x1x32xf32, #tpu.memory_space<vmem>>, vector<1x4x1x32xf32>
    %18 = vector.shape_cast %17 : vector<1x4x1x32xf32> to vector<4x1x32xf32>
    %19 = arith.addf %0, %2 : vector<8x32xf32>
    %20 = arith.truncf %19 : vector<8x32xf32> to vector<8x32xbf16>
    %c0_14 = arith.constant 0 : index
    %c0_15 = arith.constant 0 : index
    %c0_16 = arith.constant 0 : index
    %c0_17 = arith.constant 0 : index
    %21 = vector.load %arg4[%c0_14, %c0_15, %c0_16, %c0_17] : memref<2x3x32x96xbf16, #tpu.memory_space<vmem>>, vector<1x1x32x96xbf16>
    %22 = vector.shape_cast %21 : vector<1x1x32x96xbf16> to vector<32x96xbf16>
    %c0_18 = arith.constant 0 : index
    %c0_19 = arith.constant 0 : index
    %c0_20 = arith.constant 0 : index
    %c0_21 = arith.constant 0 : index
    %23 = vector.load %arg5[%c0_18, %c0_19, %c0_20, %c0_21] : memref<2x3x1x96xf32, #tpu.memory_space<vmem>>, vector<1x1x1x96xf32>
    %24 = vector.shape_cast %23 : vector<1x1x1x96xf32> to vector<1x96xf32>
    %c0_22 = arith.constant 0 : index
    %c0_23 = arith.constant 0 : index
    %c0_24 = arith.constant 0 : index
    %c0_25 = arith.constant 0 : index
    %25 = vector.load %arg6[%c0_22, %c0_23, %c0_24, %c0_25] : memref<2x3x32x32xbf16, #tpu.memory_space<vmem>>, vector<1x1x32x32xbf16>
    %26 = vector.shape_cast %25 : vector<1x1x32x32xbf16> to vector<32x32xbf16>
    %c0_26 = arith.constant 0 : index
    %c0_27 = arith.constant 0 : index
    %c0_28 = arith.constant 0 : index
    %c0_29 = arith.constant 0 : index
    %27 = vector.load %arg7[%c0_26, %c0_27, %c0_28, %c0_29] : memref<2x3x1x32xf32, #tpu.memory_space<vmem>>, vector<1x1x1x32xf32>
    %28 = vector.shape_cast %27 : vector<1x1x1x32xf32> to vector<1x32xf32>
    %cst = arith.constant dense<0.000000e+00> : vector<8x96xf32>
    %29 = tpu.matmul %20, %22, %cst {dimension_numbers = #tpu.dot_dimension_numbers<[1], [0], [0], [1], [0, 0, 1, 1], [], []>} : vector<8x32xbf16>, vector<32x96xbf16>, vector<8x96xf32> -> vector<8x96xf32>
    %30 = vector.broadcast %24 : vector<1x96xf32> to vector<8x96xf32>
    %31 = arith.addf %29, %30 : vector<8x96xf32>
    %32 = vector.extract_strided_slice %31 {offsets = [0, 0], sizes = [8, 32], strides = [1, 1]} : vector<8x96xf32> to vector<8x32xf32>
    %33 = vector.extract_strided_slice %31 {offsets = [0, 32], sizes = [8, 32], strides = [1, 1]} : vector<8x96xf32> to vector<8x32xf32>
    %34 = vector.extract_strided_slice %31 {offsets = [0, 64], sizes = [8, 32], strides = [1, 1]} : vector<8x96xf32> to vector<8x32xf32>
    %35 = arith.truncf %32 : vector<8x32xf32> to vector<8x32xbf16>
    %36 = arith.truncf %33 : vector<8x32xf32> to vector<8x32xbf16>
    %37 = arith.truncf %34 : vector<8x32xf32> to vector<8x32xbf16>
    %cst_30 = arith.constant 0.000000e+00 : f32
    %38 = arith.truncf %cst_30 : f32 to bf16
    %39 = vector.shape_cast %8 : vector<1x32xi1> to vector<1x32xi1>
    %40 = vector.broadcast %39 : vector<1x32xi1> to vector<8x32xi1>
    %41 = vector.broadcast %38 : bf16 to vector<8x32xbf16>
    %42 = arith.select %40, %35, %41 : vector<8x32xi1>, vector<8x32xbf16>
    %cst_31 = arith.constant dense<0.000000e+00> : vector<8x8xf32>
    %43 = tpu.matmul %42, %36, %cst_31 {dimension_numbers = #tpu.dot_dimension_numbers<[1], [1], [0], [0], [0, 0, 1, 0], [], []>} : vector<8x32xbf16>, vector<8x32xbf16>, vector<8x8xf32> -> vector<8x8xf32>
    %cst_32 = arith.constant 2.500000e-01 : f32
    %44 = vector.broadcast %cst_32 : f32 to vector<8x8xf32>
    %45 = arith.mulf %43, %44 : vector<8x8xf32>
    %cst_33 = arith.constant dense<0xFF800000> : vector<8xf32>
    %46 = vector.multi_reduction <maximumf>, %45, %cst_33 [1] : vector<8x8xf32> to vector<8xf32>
    %47 = vector.shape_cast %46 : vector<8xf32> to vector<8x1xf32>
    %48 = vector.broadcast %47 : vector<8x1xf32> to vector<8x8xf32>
    %49 = arith.subf %45, %48 : vector<8x8xf32>
    %50 = math.exp %49 : vector<8x8xf32>
    %cst_34 = arith.constant dense<0.000000e+00> : vector<8xf32>
    %51 = vector.multi_reduction <add>, %50, %cst_34 [1] : vector<8x8xf32> to vector<8xf32>
    %52 = vector.shape_cast %51 : vector<8xf32> to vector<8x1xf32>
    %53 = tpu.reciprocal %52 {approx = true} : vector<8x1xf32> -> vector<8x1xf32>
    %54 = vector.broadcast %53 : vector<8x1xf32> to vector<8x8xf32>
    %55 = arith.mulf %50, %54 : vector<8x8xf32>
    %cst_35 = arith.constant 0.000000e+00 : f32
    %56 = arith.truncf %cst_35 : f32 to bf16
    %57 = vector.shape_cast %8 : vector<1x32xi1> to vector<1x32xi1>
    %58 = vector.broadcast %57 : vector<1x32xi1> to vector<8x32xi1>
    %59 = vector.broadcast %56 : bf16 to vector<8x32xbf16>
    %60 = arith.select %58, %37, %59 : vector<8x32xi1>, vector<8x32xbf16>
    %61 = arith.truncf %55 : vector<8x8xf32> to vector<8x8xbf16>
    %cst_36 = arith.constant dense<0.000000e+00> : vector<8x32xf32>
    %62 = tpu.matmul %61, %60, %cst_36 {dimension_numbers = #tpu.dot_dimension_numbers<[1], [0], [0], [1], [0, 0, 1, 1], [], []>} : vector<8x8xbf16>, vector<8x32xbf16>, vector<8x32xf32> -> vector<8x32xf32>
    %cst_37 = arith.constant 0.000000e+00 : f32
    %63 = arith.truncf %cst_37 : f32 to bf16
    %64 = vector.shape_cast %13 : vector<1x32xi1> to vector<1x32xi1>
    %65 = vector.broadcast %64 : vector<1x32xi1> to vector<8x32xi1>
    %66 = vector.broadcast %63 : bf16 to vector<8x32xbf16>
    %67 = arith.select %65, %35, %66 : vector<8x32xi1>, vector<8x32xbf16>
    %cst_38 = arith.constant dense<0.000000e+00> : vector<8x8xf32>
    %68 = tpu.matmul %67, %36, %cst_38 {dimension_numbers = #tpu.dot_dimension_numbers<[1], [1], [0], [0], [0, 0, 1, 0], [], []>} : vector<8x32xbf16>, vector<8x32xbf16>, vector<8x8xf32> -> vector<8x8xf32>
    %cst_39 = arith.constant 2.500000e-01 : f32
    %69 = vector.broadcast %cst_39 : f32 to vector<8x8xf32>
    %70 = arith.mulf %68, %69 : vector<8x8xf32>
    %cst_40 = arith.constant dense<0xFF800000> : vector<8xf32>
    %71 = vector.multi_reduction <maximumf>, %70, %cst_40 [1] : vector<8x8xf32> to vector<8xf32>
    %72 = vector.shape_cast %71 : vector<8xf32> to vector<8x1xf32>
    %73 = vector.broadcast %72 : vector<8x1xf32> to vector<8x8xf32>
    %74 = arith.subf %70, %73 : vector<8x8xf32>
    %75 = math.exp %74 : vector<8x8xf32>
    %cst_41 = arith.constant dense<0.000000e+00> : vector<8xf32>
    %76 = vector.multi_reduction <add>, %75, %cst_41 [1] : vector<8x8xf32> to vector<8xf32>
    %77 = vector.shape_cast %76 : vector<8xf32> to vector<8x1xf32>
    %78 = tpu.reciprocal %77 {approx = true} : vector<8x1xf32> -> vector<8x1xf32>
    %79 = vector.broadcast %78 : vector<8x1xf32> to vector<8x8xf32>
    %80 = arith.mulf %75, %79 : vector<8x8xf32>
    %cst_42 = arith.constant 0.000000e+00 : f32
    %81 = arith.truncf %cst_42 : f32 to bf16
    %82 = vector.shape_cast %13 : vector<1x32xi1> to vector<1x32xi1>
    %83 = vector.broadcast %82 : vector<1x32xi1> to vector<8x32xi1>
    %84 = vector.broadcast %81 : bf16 to vector<8x32xbf16>
    %85 = arith.select %83, %37, %84 : vector<8x32xi1>, vector<8x32xbf16>
    %86 = arith.truncf %80 : vector<8x8xf32> to vector<8x8xbf16>
    %cst_43 = arith.constant dense<0.000000e+00> : vector<8x32xf32>
    %87 = tpu.matmul %86, %85, %cst_43 {dimension_numbers = #tpu.dot_dimension_numbers<[1], [0], [0], [1], [0, 0, 1, 1], [], []>} : vector<8x8xbf16>, vector<8x32xbf16>, vector<8x32xf32> -> vector<8x32xf32>
    %88 = arith.addf %62, %87 : vector<8x32xf32>
    %89 = arith.truncf %88 : vector<8x32xf32> to vector<8x32xbf16>
    %cst_44 = arith.constant dense<0.000000e+00> : vector<8x32xf32>
    %90 = tpu.matmul %89, %26, %cst_44 {dimension_numbers = #tpu.dot_dimension_numbers<[1], [0], [0], [1], [0, 0, 1, 1], [], []>} : vector<8x32xbf16>, vector<32x32xbf16>, vector<8x32xf32> -> vector<8x32xf32>
    %91 = vector.broadcast %28 : vector<1x32xf32> to vector<8x32xf32>
    %92 = arith.addf %90, %91 : vector<8x32xf32>
    %93 = vector.extract_strided_slice %16 {offsets = [0, 0, 0], sizes = [1, 1, 32], strides = [1, 1, 1]} : vector<4x1x32xf32> to vector<1x1x32xf32>
    %94 = vector.shape_cast %93 : vector<1x1x32xf32> to vector<1x32xf32>
    %95 = vector.extract_strided_slice %18 {offsets = [0, 0, 0], sizes = [1, 1, 32], strides = [1, 1, 1]} : vector<4x1x32xf32> to vector<1x1x32xf32>
    %96 = vector.shape_cast %95 : vector<1x1x32xf32> to vector<1x32xf32>
    %97 = arith.addf %0, %92 : vector<8x32xf32>
    %cst_45 = arith.constant dense<0.000000e+00> : vector<8xf32>
    %98 = vector.multi_reduction <add>, %97, %cst_45 [1] : vector<8x32xf32> to vector<8xf32>
    %99 = vector.shape_cast %98 : vector<8xf32> to vector<8x1xf32>
    %cst_46 = arith.constant 3.200000e+01 : f32
    %100 = vector.broadcast %cst_46 : f32 to vector<8x1xf32>
    %101 = arith.divf %99, %100 : vector<8x1xf32>
    %102 = arith.mulf %97, %97 : vector<8x32xf32>
    %cst_47 = arith.constant dense<0.000000e+00> : vector<8xf32>
    %103 = vector.multi_reduction <add>, %102, %cst_47 [1] : vector<8x32xf32> to vector<8xf32>
    %104 = vector.shape_cast %103 : vector<8xf32> to vector<8x1xf32>
    %cst_48 = arith.constant 3.200000e+01 : f32
    %105 = vector.broadcast %cst_48 : f32 to vector<8x1xf32>
    %106 = arith.divf %104, %105 : vector<8x1xf32>
    %107 = arith.mulf %101, %101 : vector<8x1xf32>
    %108 = arith.subf %106, %107 : vector<8x1xf32>
    %109 = vector.broadcast %101 : vector<8x1xf32> to vector<8x32xf32>
    %110 = arith.subf %97, %109 : vector<8x32xf32>
    %cst_49 = arith.constant 9.99999974E-6 : f32
    %111 = vector.broadcast %cst_49 : f32 to vector<8x1xf32>
    %112 = arith.addf %108, %111 : vector<8x1xf32>
    %113 = math.rsqrt %112 : vector<8x1xf32>
    %114 = vector.broadcast %113 : vector<8x1xf32> to vector<8x32xf32>
    %115 = arith.mulf %110, %114 : vector<8x32xf32>
    %116 = vector.broadcast %94 : vector<1x32xf32> to vector<8x32xf32>
    %117 = arith.mulf %115, %116 : vector<8x32xf32>
    %118 = vector.broadcast %96 : vector<1x32xf32> to vector<8x32xf32>
    %119 = arith.addf %117, %118 : vector<8x32xf32>
    %120 = arith.truncf %119 : vector<8x32xf32> to vector<8x32xbf16>
    %c0_50 = arith.constant 0 : index
    %c1 = arith.constant 1 : index
    %c0_51 = arith.constant 0 : index
    %c0_52 = arith.constant 0 : index
    %121 = vector.load %arg4[%c0_50, %c1, %c0_51, %c0_52] : memref<2x3x32x96xbf16, #tpu.memory_space<vmem>>, vector<1x1x32x96xbf16>
    %122 = vector.shape_cast %121 : vector<1x1x32x96xbf16> to vector<32x96xbf16>
    %c0_53 = arith.constant 0 : index
    %c1_54 = arith.constant 1 : index
    %c0_55 = arith.constant 0 : index
    %c0_56 = arith.constant 0 : index
    %123 = vector.load %arg5[%c0_53, %c1_54, %c0_55, %c0_56] : memref<2x3x1x96xf32, #tpu.memory_space<vmem>>, vector<1x1x1x96xf32>
    %124 = vector.shape_cast %123 : vector<1x1x1x96xf32> to vector<1x96xf32>
    %c0_57 = arith.constant 0 : index
    %c1_58 = arith.constant 1 : index
    %c0_59 = arith.constant 0 : index
    %c0_60 = arith.constant 0 : index
    %125 = vector.load %arg6[%c0_57, %c1_58, %c0_59, %c0_60] : memref<2x3x32x32xbf16, #tpu.memory_space<vmem>>, vector<1x1x32x32xbf16>
    %126 = vector.shape_cast %125 : vector<1x1x32x32xbf16> to vector<32x32xbf16>
    %c0_61 = arith.constant 0 : index
    %c1_62 = arith.constant 1 : index
    %c0_63 = arith.constant 0 : index
    %c0_64 = arith.constant 0 : index
    %127 = vector.load %arg7[%c0_61, %c1_62, %c0_63, %c0_64] : memref<2x3x1x32xf32, #tpu.memory_space<vmem>>, vector<1x1x1x32xf32>
    %128 = vector.shape_cast %127 : vector<1x1x1x32xf32> to vector<1x32xf32>
    %129 = vector.extract_strided_slice %122 {offsets = [0, 0], sizes = [32, 32], strides = [1, 1]} : vector<32x96xbf16> to vector<32x32xbf16>
    %cst_65 = arith.constant dense<0.000000e+00> : vector<8x32xf32>
    %130 = tpu.matmul %120, %129, %cst_65 {dimension_numbers = #tpu.dot_dimension_numbers<[1], [0], [0], [1], [0, 0, 1, 1], [], []>} : vector<8x32xbf16>, vector<32x32xbf16>, vector<8x32xf32> -> vector<8x32xf32>
    %131 = vector.extract_strided_slice %124 {offsets = [0, 0], sizes = [1, 32], strides = [1, 1]} : vector<1x96xf32> to vector<1x32xf32>
    %132 = vector.broadcast %131 : vector<1x32xf32> to vector<8x32xf32>
    %133 = arith.addf %130, %132 : vector<8x32xf32>
    %134 = vector.extract_strided_slice %122 {offsets = [0, 32], sizes = [32, 64], strides = [1, 1]} : vector<32x96xbf16> to vector<32x64xbf16>
    %cst_66 = arith.constant dense<0.000000e+00> : vector<8x64xf32>
    %135 = tpu.matmul %14, %134, %cst_66 {dimension_numbers = #tpu.dot_dimension_numbers<[1], [0], [0], [1], [0, 0, 1, 1], [], []>} : vector<8x32xbf16>, vector<32x64xbf16>, vector<8x64xf32> -> vector<8x64xf32>
    %136 = vector.extract_strided_slice %124 {offsets = [0, 32], sizes = [1, 64], strides = [1, 1]} : vector<1x96xf32> to vector<1x64xf32>
    %137 = vector.broadcast %136 : vector<1x64xf32> to vector<8x64xf32>
    %138 = arith.addf %135, %137 : vector<8x64xf32>
    %139 = vector.extract_strided_slice %138 {offsets = [0, 0], sizes = [8, 32], strides = [1, 1]} : vector<8x64xf32> to vector<8x32xf32>
    %140 = vector.extract_strided_slice %138 {offsets = [0, 32], sizes = [8, 32], strides = [1, 1]} : vector<8x64xf32> to vector<8x32xf32>
    %141 = arith.truncf %133 : vector<8x32xf32> to vector<8x32xbf16>
    %142 = arith.truncf %139 : vector<8x32xf32> to vector<8x32xbf16>
    %143 = arith.truncf %140 : vector<8x32xf32> to vector<8x32xbf16>
    %cst_67 = arith.constant 0.000000e+00 : f32
    %144 = arith.truncf %cst_67 : f32 to bf16
    %145 = vector.shape_cast %8 : vector<1x32xi1> to vector<1x32xi1>
    %146 = vector.broadcast %145 : vector<1x32xi1> to vector<8x32xi1>
    %147 = vector.broadcast %144 : bf16 to vector<8x32xbf16>
    %148 = arith.select %146, %141, %147 : vector<8x32xi1>, vector<8x32xbf16>
    %cst_68 = arith.constant dense<0.000000e+00> : vector<8x8xf32>
    %149 = tpu.matmul %148, %142, %cst_68 {dimension_numbers = #tpu.dot_dimension_numbers<[1], [1], [0], [0], [0, 0, 1, 0], [], []>} : vector<8x32xbf16>, vector<8x32xbf16>, vector<8x8xf32> -> vector<8x8xf32>
    %cst_69 = arith.constant 2.500000e-01 : f32
    %150 = vector.broadcast %cst_69 : f32 to vector<8x8xf32>
    %151 = arith.mulf %149, %150 : vector<8x8xf32>
    %cst_70 = arith.constant dense<0xFF800000> : vector<8xf32>
    %152 = vector.multi_reduction <maximumf>, %151, %cst_70 [1] : vector<8x8xf32> to vector<8xf32>
    %153 = vector.shape_cast %152 : vector<8xf32> to vector<8x1xf32>
    %154 = vector.broadcast %153 : vector<8x1xf32> to vector<8x8xf32>
    %155 = arith.subf %151, %154 : vector<8x8xf32>
    %156 = math.exp %155 : vector<8x8xf32>
    %cst_71 = arith.constant dense<0.000000e+00> : vector<8xf32>
    %157 = vector.multi_reduction <add>, %156, %cst_71 [1] : vector<8x8xf32> to vector<8xf32>
    %158 = vector.shape_cast %157 : vector<8xf32> to vector<8x1xf32>
    %159 = tpu.reciprocal %158 {approx = true} : vector<8x1xf32> -> vector<8x1xf32>
    %160 = vector.broadcast %159 : vector<8x1xf32> to vector<8x8xf32>
    %161 = arith.mulf %156, %160 : vector<8x8xf32>
    %cst_72 = arith.constant 0.000000e+00 : f32
    %162 = arith.truncf %cst_72 : f32 to bf16
    %163 = vector.shape_cast %8 : vector<1x32xi1> to vector<1x32xi1>
    %164 = vector.broadcast %163 : vector<1x32xi1> to vector<8x32xi1>
    %165 = vector.broadcast %162 : bf16 to vector<8x32xbf16>
    %166 = arith.select %164, %143, %165 : vector<8x32xi1>, vector<8x32xbf16>
    %167 = arith.truncf %161 : vector<8x8xf32> to vector<8x8xbf16>
    %cst_73 = arith.constant dense<0.000000e+00> : vector<8x32xf32>
    %168 = tpu.matmul %167, %166, %cst_73 {dimension_numbers = #tpu.dot_dimension_numbers<[1], [0], [0], [1], [0, 0, 1, 1], [], []>} : vector<8x8xbf16>, vector<8x32xbf16>, vector<8x32xf32> -> vector<8x32xf32>
    %cst_74 = arith.constant 0.000000e+00 : f32
    %169 = arith.truncf %cst_74 : f32 to bf16
    %170 = vector.shape_cast %13 : vector<1x32xi1> to vector<1x32xi1>
    %171 = vector.broadcast %170 : vector<1x32xi1> to vector<8x32xi1>
    %172 = vector.broadcast %169 : bf16 to vector<8x32xbf16>
    %173 = arith.select %171, %141, %172 : vector<8x32xi1>, vector<8x32xbf16>
    %cst_75 = arith.constant dense<0.000000e+00> : vector<8x8xf32>
    %174 = tpu.matmul %173, %142, %cst_75 {dimension_numbers = #tpu.dot_dimension_numbers<[1], [1], [0], [0], [0, 0, 1, 0], [], []>} : vector<8x32xbf16>, vector<8x32xbf16>, vector<8x8xf32> -> vector<8x8xf32>
    %cst_76 = arith.constant 2.500000e-01 : f32
    %175 = vector.broadcast %cst_76 : f32 to vector<8x8xf32>
    %176 = arith.mulf %174, %175 : vector<8x8xf32>
    %cst_77 = arith.constant dense<0xFF800000> : vector<8xf32>
    %177 = vector.multi_reduction <maximumf>, %176, %cst_77 [1] : vector<8x8xf32> to vector<8xf32>
    %178 = vector.shape_cast %177 : vector<8xf32> to vector<8x1xf32>
    %179 = vector.broadcast %178 : vector<8x1xf32> to vector<8x8xf32>
    %180 = arith.subf %176, %179 : vector<8x8xf32>
    %181 = math.exp %180 : vector<8x8xf32>
    %cst_78 = arith.constant dense<0.000000e+00> : vector<8xf32>
    %182 = vector.multi_reduction <add>, %181, %cst_78 [1] : vector<8x8xf32> to vector<8xf32>
    %183 = vector.shape_cast %182 : vector<8xf32> to vector<8x1xf32>
    %184 = tpu.reciprocal %183 {approx = true} : vector<8x1xf32> -> vector<8x1xf32>
    %185 = vector.broadcast %184 : vector<8x1xf32> to vector<8x8xf32>
    %186 = arith.mulf %181, %185 : vector<8x8xf32>
    %cst_79 = arith.constant 0.000000e+00 : f32
    %187 = arith.truncf %cst_79 : f32 to bf16
    %188 = vector.shape_cast %13 : vector<1x32xi1> to vector<1x32xi1>
    %189 = vector.broadcast %188 : vector<1x32xi1> to vector<8x32xi1>
    %190 = vector.broadcast %187 : bf16 to vector<8x32xbf16>
    %191 = arith.select %189, %143, %190 : vector<8x32xi1>, vector<8x32xbf16>
    %192 = arith.truncf %186 : vector<8x8xf32> to vector<8x8xbf16>
    %cst_80 = arith.constant dense<0.000000e+00> : vector<8x32xf32>
    %193 = tpu.matmul %192, %191, %cst_80 {dimension_numbers = #tpu.dot_dimension_numbers<[1], [0], [0], [1], [0, 0, 1, 1], [], []>} : vector<8x8xbf16>, vector<8x32xbf16>, vector<8x32xf32> -> vector<8x32xf32>
    %194 = arith.addf %168, %193 : vector<8x32xf32>
    %195 = arith.truncf %194 : vector<8x32xf32> to vector<8x32xbf16>
    %cst_81 = arith.constant dense<0.000000e+00> : vector<8x32xf32>
    %196 = tpu.matmul %195, %126, %cst_81 {dimension_numbers = #tpu.dot_dimension_numbers<[1], [0], [0], [1], [0, 0, 1, 1], [], []>} : vector<8x32xbf16>, vector<32x32xbf16>, vector<8x32xf32> -> vector<8x32xf32>
    %197 = vector.broadcast %128 : vector<1x32xf32> to vector<8x32xf32>
    %198 = arith.addf %196, %197 : vector<8x32xf32>
    %199 = vector.extract_strided_slice %16 {offsets = [1, 0, 0], sizes = [1, 1, 32], strides = [1, 1, 1]} : vector<4x1x32xf32> to vector<1x1x32xf32>
    %200 = vector.shape_cast %199 : vector<1x1x32xf32> to vector<1x32xf32>
    %201 = vector.extract_strided_slice %18 {offsets = [1, 0, 0], sizes = [1, 1, 32], strides = [1, 1, 1]} : vector<4x1x32xf32> to vector<1x1x32xf32>
    %202 = vector.shape_cast %201 : vector<1x1x32xf32> to vector<1x32xf32>
    %203 = arith.addf %119, %198 : vector<8x32xf32>
    %cst_82 = arith.constant dense<0.000000e+00> : vector<8xf32>
    %204 = vector.multi_reduction <add>, %203, %cst_82 [1] : vector<8x32xf32> to vector<8xf32>
    %205 = vector.shape_cast %204 : vector<8xf32> to vector<8x1xf32>
    %cst_83 = arith.constant 3.200000e+01 : f32
    %206 = vector.broadcast %cst_83 : f32 to vector<8x1xf32>
    %207 = arith.divf %205, %206 : vector<8x1xf32>
    %208 = arith.mulf %203, %203 : vector<8x32xf32>
    %cst_84 = arith.constant dense<0.000000e+00> : vector<8xf32>
    %209 = vector.multi_reduction <add>, %208, %cst_84 [1] : vector<8x32xf32> to vector<8xf32>
    %210 = vector.shape_cast %209 : vector<8xf32> to vector<8x1xf32>
    %cst_85 = arith.constant 3.200000e+01 : f32
    %211 = vector.broadcast %cst_85 : f32 to vector<8x1xf32>
    %212 = arith.divf %210, %211 : vector<8x1xf32>
    %213 = arith.mulf %207, %207 : vector<8x1xf32>
    %214 = arith.subf %212, %213 : vector<8x1xf32>
    %215 = vector.broadcast %207 : vector<8x1xf32> to vector<8x32xf32>
    %216 = arith.subf %203, %215 : vector<8x32xf32>
    %cst_86 = arith.constant 9.99999974E-6 : f32
    %217 = vector.broadcast %cst_86 : f32 to vector<8x1xf32>
    %218 = arith.addf %214, %217 : vector<8x1xf32>
    %219 = math.rsqrt %218 : vector<8x1xf32>
    %220 = vector.broadcast %219 : vector<8x1xf32> to vector<8x32xf32>
    %221 = arith.mulf %216, %220 : vector<8x32xf32>
    %222 = vector.broadcast %200 : vector<1x32xf32> to vector<8x32xf32>
    %223 = arith.mulf %221, %222 : vector<8x32xf32>
    %224 = vector.broadcast %202 : vector<1x32xf32> to vector<8x32xf32>
    %225 = arith.addf %223, %224 : vector<8x32xf32>
    %226 = arith.truncf %225 : vector<8x32xf32> to vector<8x32xbf16>
    %c0_87 = arith.constant 0 : index
    %c0_88 = arith.constant 0 : index
    %c0_89 = arith.constant 0 : index
    %227 = vector.load %arg8[%c0_87, %c0_88, %c0_89] : memref<2x32x64xbf16, #tpu.memory_space<vmem>>, vector<1x32x64xbf16>
    %228 = vector.shape_cast %227 : vector<1x32x64xbf16> to vector<32x64xbf16>
    %c0_90 = arith.constant 0 : index
    %c0_91 = arith.constant 0 : index
    %c0_92 = arith.constant 0 : index
    %229 = vector.load %arg9[%c0_90, %c0_91, %c0_92] : memref<2x1x64xf32, #tpu.memory_space<vmem>>, vector<1x1x64xf32>
    %230 = vector.shape_cast %229 : vector<1x1x64xf32> to vector<1x64xf32>
    %c0_93 = arith.constant 0 : index
    %c0_94 = arith.constant 0 : index
    %c0_95 = arith.constant 0 : index
    %231 = vector.load %arg10[%c0_93, %c0_94, %c0_95] : memref<2x64x32xbf16, #tpu.memory_space<vmem>>, vector<1x64x32xbf16>
    %232 = vector.shape_cast %231 : vector<1x64x32xbf16> to vector<64x32xbf16>
    %c0_96 = arith.constant 0 : index
    %c0_97 = arith.constant 0 : index
    %c0_98 = arith.constant 0 : index
    %233 = vector.load %arg11[%c0_96, %c0_97, %c0_98] : memref<2x1x32xf32, #tpu.memory_space<vmem>>, vector<1x1x32xf32>
    %234 = vector.shape_cast %233 : vector<1x1x32xf32> to vector<1x32xf32>
    %cst_99 = arith.constant dense<0.000000e+00> : vector<8x64xf32>
    %235 = tpu.matmul %226, %228, %cst_99 {dimension_numbers = #tpu.dot_dimension_numbers<[1], [0], [0], [1], [0, 0, 1, 1], [], []>} : vector<8x32xbf16>, vector<32x64xbf16>, vector<8x64xf32> -> vector<8x64xf32>
    %236 = vector.broadcast %230 : vector<1x64xf32> to vector<8x64xf32>
    %237 = arith.addf %235, %236 : vector<8x64xf32>
    %cst_100 = arith.constant 0.000000e+00 : f32
    %238 = vector.broadcast %cst_100 : f32 to vector<8x64xf32>
    %239 = arith.maximumf %237, %238 : vector<8x64xf32>
    %240 = arith.truncf %239 : vector<8x64xf32> to vector<8x64xbf16>
    %cst_101 = arith.constant dense<0.000000e+00> : vector<8x32xf32>
    %241 = tpu.matmul %240, %232, %cst_101 {dimension_numbers = #tpu.dot_dimension_numbers<[1], [0], [0], [1], [0, 0, 1, 1], [], []>} : vector<8x64xbf16>, vector<64x32xbf16>, vector<8x32xf32> -> vector<8x32xf32>
    %242 = vector.broadcast %234 : vector<1x32xf32> to vector<8x32xf32>
    %243 = arith.addf %241, %242 : vector<8x32xf32>
    %244 = vector.extract_strided_slice %16 {offsets = [2, 0, 0], sizes = [1, 1, 32], strides = [1, 1, 1]} : vector<4x1x32xf32> to vector<1x1x32xf32>
    %245 = vector.shape_cast %244 : vector<1x1x32xf32> to vector<1x32xf32>
    %246 = vector.extract_strided_slice %18 {offsets = [2, 0, 0], sizes = [1, 1, 32], strides = [1, 1, 1]} : vector<4x1x32xf32> to vector<1x1x32xf32>
    %247 = vector.shape_cast %246 : vector<1x1x32xf32> to vector<1x32xf32>
    %248 = arith.addf %225, %243 : vector<8x32xf32>
    %cst_102 = arith.constant dense<0.000000e+00> : vector<8xf32>
    %249 = vector.multi_reduction <add>, %248, %cst_102 [1] : vector<8x32xf32> to vector<8xf32>
    %250 = vector.shape_cast %249 : vector<8xf32> to vector<8x1xf32>
    %cst_103 = arith.constant 3.200000e+01 : f32
    %251 = vector.broadcast %cst_103 : f32 to vector<8x1xf32>
    %252 = arith.divf %250, %251 : vector<8x1xf32>
    %253 = arith.mulf %248, %248 : vector<8x32xf32>
    %cst_104 = arith.constant dense<0.000000e+00> : vector<8xf32>
    %254 = vector.multi_reduction <add>, %253, %cst_104 [1] : vector<8x32xf32> to vector<8xf32>
    %255 = vector.shape_cast %254 : vector<8xf32> to vector<8x1xf32>
    %cst_105 = arith.constant 3.200000e+01 : f32
    %256 = vector.broadcast %cst_105 : f32 to vector<8x1xf32>
    %257 = arith.divf %255, %256 : vector<8x1xf32>
    %258 = arith.mulf %252, %252 : vector<8x1xf32>
    %259 = arith.subf %257, %258 : vector<8x1xf32>
    %260 = vector.broadcast %252 : vector<8x1xf32> to vector<8x32xf32>
    %261 = arith.subf %248, %260 : vector<8x32xf32>
    %cst_106 = arith.constant 9.99999974E-6 : f32
    %262 = vector.broadcast %cst_106 : f32 to vector<8x1xf32>
    %263 = arith.addf %259, %262 : vector<8x1xf32>
    %264 = math.rsqrt %263 : vector<8x1xf32>
    %265 = vector.broadcast %264 : vector<8x1xf32> to vector<8x32xf32>
    %266 = arith.mulf %261, %265 : vector<8x32xf32>
    %267 = vector.broadcast %245 : vector<1x32xf32> to vector<8x32xf32>
    %268 = arith.mulf %266, %267 : vector<8x32xf32>
    %269 = vector.broadcast %247 : vector<1x32xf32> to vector<8x32xf32>
    %270 = arith.addf %268, %269 : vector<8x32xf32>
    %c1_107 = arith.constant 1 : index
    %c0_108 = arith.constant 0 : index
    %c0_109 = arith.constant 0 : index
    %c0_110 = arith.constant 0 : index
    %271 = vector.load %arg12[%c1_107, %c0_108, %c0_109, %c0_110] : memref<2x4x1x32xf32, #tpu.memory_space<vmem>>, vector<1x4x1x32xf32>
    %272 = vector.shape_cast %271 : vector<1x4x1x32xf32> to vector<4x1x32xf32>
    %c1_111 = arith.constant 1 : index
    %c0_112 = arith.constant 0 : index
    %c0_113 = arith.constant 0 : index
    %c0_114 = arith.constant 0 : index
    %273 = vector.load %arg13[%c1_111, %c0_112, %c0_113, %c0_114] : memref<2x4x1x32xf32, #tpu.memory_space<vmem>>, vector<1x4x1x32xf32>
    %274 = vector.shape_cast %273 : vector<1x4x1x32xf32> to vector<4x1x32xf32>
    %275 = arith.addf %270, %2 : vector<8x32xf32>
    %276 = arith.truncf %275 : vector<8x32xf32> to vector<8x32xbf16>
    %c1_115 = arith.constant 1 : index
    %c0_116 = arith.constant 0 : index
    %c0_117 = arith.constant 0 : index
    %c0_118 = arith.constant 0 : index
    %277 = vector.load %arg4[%c1_115, %c0_116, %c0_117, %c0_118] : memref<2x3x32x96xbf16, #tpu.memory_space<vmem>>, vector<1x1x32x96xbf16>
    %278 = vector.shape_cast %277 : vector<1x1x32x96xbf16> to vector<32x96xbf16>
    %c1_119 = arith.constant 1 : index
    %c0_120 = arith.constant 0 : index
    %c0_121 = arith.constant 0 : index
    %c0_122 = arith.constant 0 : index
    %279 = vector.load %arg5[%c1_119, %c0_120, %c0_121, %c0_122] : memref<2x3x1x96xf32, #tpu.memory_space<vmem>>, vector<1x1x1x96xf32>
    %280 = vector.shape_cast %279 : vector<1x1x1x96xf32> to vector<1x96xf32>
    %c1_123 = arith.constant 1 : index
    %c0_124 = arith.constant 0 : index
    %c0_125 = arith.constant 0 : index
    %c0_126 = arith.constant 0 : index
    %281 = vector.load %arg6[%c1_123, %c0_124, %c0_125, %c0_126] : memref<2x3x32x32xbf16, #tpu.memory_space<vmem>>, vector<1x1x32x32xbf16>
    %282 = vector.shape_cast %281 : vector<1x1x32x32xbf16> to vector<32x32xbf16>
    %c1_127 = arith.constant 1 : index
    %c0_128 = arith.constant 0 : index
    %c0_129 = arith.constant 0 : index
    %c0_130 = arith.constant 0 : index
    %283 = vector.load %arg7[%c1_127, %c0_128, %c0_129, %c0_130] : memref<2x3x1x32xf32, #tpu.memory_space<vmem>>, vector<1x1x1x32xf32>
    %284 = vector.shape_cast %283 : vector<1x1x1x32xf32> to vector<1x32xf32>
    %cst_131 = arith.constant dense<0.000000e+00> : vector<8x96xf32>
    %285 = tpu.matmul %276, %278, %cst_131 {dimension_numbers = #tpu.dot_dimension_numbers<[1], [0], [0], [1], [0, 0, 1, 1], [], []>} : vector<8x32xbf16>, vector<32x96xbf16>, vector<8x96xf32> -> vector<8x96xf32>
    %286 = vector.broadcast %280 : vector<1x96xf32> to vector<8x96xf32>
    %287 = arith.addf %285, %286 : vector<8x96xf32>
    %288 = vector.extract_strided_slice %287 {offsets = [0, 0], sizes = [8, 32], strides = [1, 1]} : vector<8x96xf32> to vector<8x32xf32>
    %289 = vector.extract_strided_slice %287 {offsets = [0, 32], sizes = [8, 32], strides = [1, 1]} : vector<8x96xf32> to vector<8x32xf32>
    %290 = vector.extract_strided_slice %287 {offsets = [0, 64], sizes = [8, 32], strides = [1, 1]} : vector<8x96xf32> to vector<8x32xf32>
    %291 = arith.truncf %288 : vector<8x32xf32> to vector<8x32xbf16>
    %292 = arith.truncf %289 : vector<8x32xf32> to vector<8x32xbf16>
    %293 = arith.truncf %290 : vector<8x32xf32> to vector<8x32xbf16>
    %cst_132 = arith.constant 0.000000e+00 : f32
    %294 = arith.truncf %cst_132 : f32 to bf16
    %295 = vector.shape_cast %8 : vector<1x32xi1> to vector<1x32xi1>
    %296 = vector.broadcast %295 : vector<1x32xi1> to vector<8x32xi1>
    %297 = vector.broadcast %294 : bf16 to vector<8x32xbf16>
    %298 = arith.select %296, %291, %297 : vector<8x32xi1>, vector<8x32xbf16>
    %cst_133 = arith.constant dense<0.000000e+00> : vector<8x8xf32>
    %299 = tpu.matmul %298, %292, %cst_133 {dimension_numbers = #tpu.dot_dimension_numbers<[1], [1], [0], [0], [0, 0, 1, 0], [], []>} : vector<8x32xbf16>, vector<8x32xbf16>, vector<8x8xf32> -> vector<8x8xf32>
    %cst_134 = arith.constant 2.500000e-01 : f32
    %300 = vector.broadcast %cst_134 : f32 to vector<8x8xf32>
    %301 = arith.mulf %299, %300 : vector<8x8xf32>
    %cst_135 = arith.constant dense<0xFF800000> : vector<8xf32>
    %302 = vector.multi_reduction <maximumf>, %301, %cst_135 [1] : vector<8x8xf32> to vector<8xf32>
    %303 = vector.shape_cast %302 : vector<8xf32> to vector<8x1xf32>
    %304 = vector.broadcast %303 : vector<8x1xf32> to vector<8x8xf32>
    %305 = arith.subf %301, %304 : vector<8x8xf32>
    %306 = math.exp %305 : vector<8x8xf32>
    %cst_136 = arith.constant dense<0.000000e+00> : vector<8xf32>
    %307 = vector.multi_reduction <add>, %306, %cst_136 [1] : vector<8x8xf32> to vector<8xf32>
    %308 = vector.shape_cast %307 : vector<8xf32> to vector<8x1xf32>
    %309 = tpu.reciprocal %308 {approx = true} : vector<8x1xf32> -> vector<8x1xf32>
    %310 = vector.broadcast %309 : vector<8x1xf32> to vector<8x8xf32>
    %311 = arith.mulf %306, %310 : vector<8x8xf32>
    %cst_137 = arith.constant 0.000000e+00 : f32
    %312 = arith.truncf %cst_137 : f32 to bf16
    %313 = vector.shape_cast %8 : vector<1x32xi1> to vector<1x32xi1>
    %314 = vector.broadcast %313 : vector<1x32xi1> to vector<8x32xi1>
    %315 = vector.broadcast %312 : bf16 to vector<8x32xbf16>
    %316 = arith.select %314, %293, %315 : vector<8x32xi1>, vector<8x32xbf16>
    %317 = arith.truncf %311 : vector<8x8xf32> to vector<8x8xbf16>
    %cst_138 = arith.constant dense<0.000000e+00> : vector<8x32xf32>
    %318 = tpu.matmul %317, %316, %cst_138 {dimension_numbers = #tpu.dot_dimension_numbers<[1], [0], [0], [1], [0, 0, 1, 1], [], []>} : vector<8x8xbf16>, vector<8x32xbf16>, vector<8x32xf32> -> vector<8x32xf32>
    %cst_139 = arith.constant 0.000000e+00 : f32
    %319 = arith.truncf %cst_139 : f32 to bf16
    %320 = vector.shape_cast %13 : vector<1x32xi1> to vector<1x32xi1>
    %321 = vector.broadcast %320 : vector<1x32xi1> to vector<8x32xi1>
    %322 = vector.broadcast %319 : bf16 to vector<8x32xbf16>
    %323 = arith.select %321, %291, %322 : vector<8x32xi1>, vector<8x32xbf16>
    %cst_140 = arith.constant dense<0.000000e+00> : vector<8x8xf32>
    %324 = tpu.matmul %323, %292, %cst_140 {dimension_numbers = #tpu.dot_dimension_numbers<[1], [1], [0], [0], [0, 0, 1, 0], [], []>} : vector<8x32xbf16>, vector<8x32xbf16>, vector<8x8xf32> -> vector<8x8xf32>
    %cst_141 = arith.constant 2.500000e-01 : f32
    %325 = vector.broadcast %cst_141 : f32 to vector<8x8xf32>
    %326 = arith.mulf %324, %325 : vector<8x8xf32>
    %cst_142 = arith.constant dense<0xFF800000> : vector<8xf32>
    %327 = vector.multi_reduction <maximumf>, %326, %cst_142 [1] : vector<8x8xf32> to vector<8xf32>
    %328 = vector.shape_cast %327 : vector<8xf32> to vector<8x1xf32>
    %329 = vector.broadcast %328 : vector<8x1xf32> to vector<8x8xf32>
    %330 = arith.subf %326, %329 : vector<8x8xf32>
    %331 = math.exp %330 : vector<8x8xf32>
    %cst_143 = arith.constant dense<0.000000e+00> : vector<8xf32>
    %332 = vector.multi_reduction <add>, %331, %cst_143 [1] : vector<8x8xf32> to vector<8xf32>
    %333 = vector.shape_cast %332 : vector<8xf32> to vector<8x1xf32>
    %334 = tpu.reciprocal %333 {approx = true} : vector<8x1xf32> -> vector<8x1xf32>
    %335 = vector.broadcast %334 : vector<8x1xf32> to vector<8x8xf32>
    %336 = arith.mulf %331, %335 : vector<8x8xf32>
    %cst_144 = arith.constant 0.000000e+00 : f32
    %337 = arith.truncf %cst_144 : f32 to bf16
    %338 = vector.shape_cast %13 : vector<1x32xi1> to vector<1x32xi1>
    %339 = vector.broadcast %338 : vector<1x32xi1> to vector<8x32xi1>
    %340 = vector.broadcast %337 : bf16 to vector<8x32xbf16>
    %341 = arith.select %339, %293, %340 : vector<8x32xi1>, vector<8x32xbf16>
    %342 = arith.truncf %336 : vector<8x8xf32> to vector<8x8xbf16>
    %cst_145 = arith.constant dense<0.000000e+00> : vector<8x32xf32>
    %343 = tpu.matmul %342, %341, %cst_145 {dimension_numbers = #tpu.dot_dimension_numbers<[1], [0], [0], [1], [0, 0, 1, 1], [], []>} : vector<8x8xbf16>, vector<8x32xbf16>, vector<8x32xf32> -> vector<8x32xf32>
    %344 = arith.addf %318, %343 : vector<8x32xf32>
    %345 = arith.truncf %344 : vector<8x32xf32> to vector<8x32xbf16>
    %cst_146 = arith.constant dense<0.000000e+00> : vector<8x32xf32>
    %346 = tpu.matmul %345, %282, %cst_146 {dimension_numbers = #tpu.dot_dimension_numbers<[1], [0], [0], [1], [0, 0, 1, 1], [], []>} : vector<8x32xbf16>, vector<32x32xbf16>, vector<8x32xf32> -> vector<8x32xf32>
    %347 = vector.broadcast %284 : vector<1x32xf32> to vector<8x32xf32>
    %348 = arith.addf %346, %347 : vector<8x32xf32>
    %349 = arith.addf %92, %348 : vector<8x32xf32>
    %350 = vector.extract_strided_slice %272 {offsets = [0, 0, 0], sizes = [1, 1, 32], strides = [1, 1, 1]} : vector<4x1x32xf32> to vector<1x1x32xf32>
    %351 = vector.shape_cast %350 : vector<1x1x32xf32> to vector<1x32xf32>
    %352 = vector.extract_strided_slice %274 {offsets = [0, 0, 0], sizes = [1, 1, 32], strides = [1, 1, 1]} : vector<4x1x32xf32> to vector<1x1x32xf32>
    %353 = vector.shape_cast %352 : vector<1x1x32xf32> to vector<1x32xf32>
    %354 = arith.addf %270, %348 : vector<8x32xf32>
    %cst_147 = arith.constant dense<0.000000e+00> : vector<8xf32>
    %355 = vector.multi_reduction <add>, %354, %cst_147 [1] : vector<8x32xf32> to vector<8xf32>
    %356 = vector.shape_cast %355 : vector<8xf32> to vector<8x1xf32>
    %cst_148 = arith.constant 3.200000e+01 : f32
    %357 = vector.broadcast %cst_148 : f32 to vector<8x1xf32>
    %358 = arith.divf %356, %357 : vector<8x1xf32>
    %359 = arith.mulf %354, %354 : vector<8x32xf32>
    %cst_149 = arith.constant dense<0.000000e+00> : vector<8xf32>
    %360 = vector.multi_reduction <add>, %359, %cst_149 [1] : vector<8x32xf32> to vector<8xf32>
    %361 = vector.shape_cast %360 : vector<8xf32> to vector<8x1xf32>
    %cst_150 = arith.constant 3.200000e+01 : f32
    %362 = vector.broadcast %cst_150 : f32 to vector<8x1xf32>
    %363 = arith.divf %361, %362 : vector<8x1xf32>
    %364 = arith.mulf %358, %358 : vector<8x1xf32>
    %365 = arith.subf %363, %364 : vector<8x1xf32>
    %366 = vector.broadcast %358 : vector<8x1xf32> to vector<8x32xf32>
    %367 = arith.subf %354, %366 : vector<8x32xf32>
    %cst_151 = arith.constant 9.99999974E-6 : f32
    %368 = vector.broadcast %cst_151 : f32 to vector<8x1xf32>
    %369 = arith.addf %365, %368 : vector<8x1xf32>
    %370 = math.rsqrt %369 : vector<8x1xf32>
    %371 = vector.broadcast %370 : vector<8x1xf32> to vector<8x32xf32>
    %372 = arith.mulf %367, %371 : vector<8x32xf32>
    %373 = vector.broadcast %351 : vector<1x32xf32> to vector<8x32xf32>
    %374 = arith.mulf %372, %373 : vector<8x32xf32>
    %375 = vector.broadcast %353 : vector<1x32xf32> to vector<8x32xf32>
    %376 = arith.addf %374, %375 : vector<8x32xf32>
    %377 = arith.truncf %376 : vector<8x32xf32> to vector<8x32xbf16>
    %c1_152 = arith.constant 1 : index
    %c1_153 = arith.constant 1 : index
    %c0_154 = arith.constant 0 : index
    %c0_155 = arith.constant 0 : index
    %378 = vector.load %arg4[%c1_152, %c1_153, %c0_154, %c0_155] : memref<2x3x32x96xbf16, #tpu.memory_space<vmem>>, vector<1x1x32x96xbf16>
    %379 = vector.shape_cast %378 : vector<1x1x32x96xbf16> to vector<32x96xbf16>
    %c1_156 = arith.constant 1 : index
    %c1_157 = arith.constant 1 : index
    %c0_158 = arith.constant 0 : index
    %c0_159 = arith.constant 0 : index
    %380 = vector.load %arg5[%c1_156, %c1_157, %c0_158, %c0_159] : memref<2x3x1x96xf32, #tpu.memory_space<vmem>>, vector<1x1x1x96xf32>
    %381 = vector.shape_cast %380 : vector<1x1x1x96xf32> to vector<1x96xf32>
    %c1_160 = arith.constant 1 : index
    %c1_161 = arith.constant 1 : index
    %c0_162 = arith.constant 0 : index
    %c0_163 = arith.constant 0 : index
    %382 = vector.load %arg6[%c1_160, %c1_161, %c0_162, %c0_163] : memref<2x3x32x32xbf16, #tpu.memory_space<vmem>>, vector<1x1x32x32xbf16>
    %383 = vector.shape_cast %382 : vector<1x1x32x32xbf16> to vector<32x32xbf16>
    %c1_164 = arith.constant 1 : index
    %c1_165 = arith.constant 1 : index
    %c0_166 = arith.constant 0 : index
    %c0_167 = arith.constant 0 : index
    %384 = vector.load %arg7[%c1_164, %c1_165, %c0_166, %c0_167] : memref<2x3x1x32xf32, #tpu.memory_space<vmem>>, vector<1x1x1x32xf32>
    %385 = vector.shape_cast %384 : vector<1x1x1x32xf32> to vector<1x32xf32>
    %386 = vector.extract_strided_slice %379 {offsets = [0, 0], sizes = [32, 32], strides = [1, 1]} : vector<32x96xbf16> to vector<32x32xbf16>
    %cst_168 = arith.constant dense<0.000000e+00> : vector<8x32xf32>
    %387 = tpu.matmul %377, %386, %cst_168 {dimension_numbers = #tpu.dot_dimension_numbers<[1], [0], [0], [1], [0, 0, 1, 1], [], []>} : vector<8x32xbf16>, vector<32x32xbf16>, vector<8x32xf32> -> vector<8x32xf32>
    %388 = vector.extract_strided_slice %381 {offsets = [0, 0], sizes = [1, 32], strides = [1, 1]} : vector<1x96xf32> to vector<1x32xf32>
    %389 = vector.broadcast %388 : vector<1x32xf32> to vector<8x32xf32>
    %390 = arith.addf %387, %389 : vector<8x32xf32>
    %391 = vector.extract_strided_slice %379 {offsets = [0, 32], sizes = [32, 64], strides = [1, 1]} : vector<32x96xbf16> to vector<32x64xbf16>
    %cst_169 = arith.constant dense<0.000000e+00> : vector<8x64xf32>
    %392 = tpu.matmul %14, %391, %cst_169 {dimension_numbers = #tpu.dot_dimension_numbers<[1], [0], [0], [1], [0, 0, 1, 1], [], []>} : vector<8x32xbf16>, vector<32x64xbf16>, vector<8x64xf32> -> vector<8x64xf32>
    %393 = vector.extract_strided_slice %381 {offsets = [0, 32], sizes = [1, 64], strides = [1, 1]} : vector<1x96xf32> to vector<1x64xf32>
    %394 = vector.broadcast %393 : vector<1x64xf32> to vector<8x64xf32>
    %395 = arith.addf %392, %394 : vector<8x64xf32>
    %396 = vector.extract_strided_slice %395 {offsets = [0, 0], sizes = [8, 32], strides = [1, 1]} : vector<8x64xf32> to vector<8x32xf32>
    %397 = vector.extract_strided_slice %395 {offsets = [0, 32], sizes = [8, 32], strides = [1, 1]} : vector<8x64xf32> to vector<8x32xf32>
    %398 = arith.truncf %390 : vector<8x32xf32> to vector<8x32xbf16>
    %399 = arith.truncf %396 : vector<8x32xf32> to vector<8x32xbf16>
    %400 = arith.truncf %397 : vector<8x32xf32> to vector<8x32xbf16>
    %cst_170 = arith.constant 0.000000e+00 : f32
    %401 = arith.truncf %cst_170 : f32 to bf16
    %402 = vector.shape_cast %8 : vector<1x32xi1> to vector<1x32xi1>
    %403 = vector.broadcast %402 : vector<1x32xi1> to vector<8x32xi1>
    %404 = vector.broadcast %401 : bf16 to vector<8x32xbf16>
    %405 = arith.select %403, %398, %404 : vector<8x32xi1>, vector<8x32xbf16>
    %cst_171 = arith.constant dense<0.000000e+00> : vector<8x8xf32>
    %406 = tpu.matmul %405, %399, %cst_171 {dimension_numbers = #tpu.dot_dimension_numbers<[1], [1], [0], [0], [0, 0, 1, 0], [], []>} : vector<8x32xbf16>, vector<8x32xbf16>, vector<8x8xf32> -> vector<8x8xf32>
    %cst_172 = arith.constant 2.500000e-01 : f32
    %407 = vector.broadcast %cst_172 : f32 to vector<8x8xf32>
    %408 = arith.mulf %406, %407 : vector<8x8xf32>
    %cst_173 = arith.constant dense<0xFF800000> : vector<8xf32>
    %409 = vector.multi_reduction <maximumf>, %408, %cst_173 [1] : vector<8x8xf32> to vector<8xf32>
    %410 = vector.shape_cast %409 : vector<8xf32> to vector<8x1xf32>
    %411 = vector.broadcast %410 : vector<8x1xf32> to vector<8x8xf32>
    %412 = arith.subf %408, %411 : vector<8x8xf32>
    %413 = math.exp %412 : vector<8x8xf32>
    %cst_174 = arith.constant dense<0.000000e+00> : vector<8xf32>
    %414 = vector.multi_reduction <add>, %413, %cst_174 [1] : vector<8x8xf32> to vector<8xf32>
    %415 = vector.shape_cast %414 : vector<8xf32> to vector<8x1xf32>
    %416 = tpu.reciprocal %415 {approx = true} : vector<8x1xf32> -> vector<8x1xf32>
    %417 = vector.broadcast %416 : vector<8x1xf32> to vector<8x8xf32>
    %418 = arith.mulf %413, %417 : vector<8x8xf32>
    %cst_175 = arith.constant 0.000000e+00 : f32
    %419 = arith.truncf %cst_175 : f32 to bf16
    %420 = vector.shape_cast %8 : vector<1x32xi1> to vector<1x32xi1>
    %421 = vector.broadcast %420 : vector<1x32xi1> to vector<8x32xi1>
    %422 = vector.broadcast %419 : bf16 to vector<8x32xbf16>
    %423 = arith.select %421, %400, %422 : vector<8x32xi1>, vector<8x32xbf16>
    %424 = arith.truncf %418 : vector<8x8xf32> to vector<8x8xbf16>
    %cst_176 = arith.constant dense<0.000000e+00> : vector<8x32xf32>
    %425 = tpu.matmul %424, %423, %cst_176 {dimension_numbers = #tpu.dot_dimension_numbers<[1], [0], [0], [1], [0, 0, 1, 1], [], []>} : vector<8x8xbf16>, vector<8x32xbf16>, vector<8x32xf32> -> vector<8x32xf32>
    %cst_177 = arith.constant 0.000000e+00 : f32
    %426 = arith.truncf %cst_177 : f32 to bf16
    %427 = vector.shape_cast %13 : vector<1x32xi1> to vector<1x32xi1>
    %428 = vector.broadcast %427 : vector<1x32xi1> to vector<8x32xi1>
    %429 = vector.broadcast %426 : bf16 to vector<8x32xbf16>
    %430 = arith.select %428, %398, %429 : vector<8x32xi1>, vector<8x32xbf16>
    %cst_178 = arith.constant dense<0.000000e+00> : vector<8x8xf32>
    %431 = tpu.matmul %430, %399, %cst_178 {dimension_numbers = #tpu.dot_dimension_numbers<[1], [1], [0], [0], [0, 0, 1, 0], [], []>} : vector<8x32xbf16>, vector<8x32xbf16>, vector<8x8xf32> -> vector<8x8xf32>
    %cst_179 = arith.constant 2.500000e-01 : f32
    %432 = vector.broadcast %cst_179 : f32 to vector<8x8xf32>
    %433 = arith.mulf %431, %432 : vector<8x8xf32>
    %cst_180 = arith.constant dense<0xFF800000> : vector<8xf32>
    %434 = vector.multi_reduction <maximumf>, %433, %cst_180 [1] : vector<8x8xf32> to vector<8xf32>
    %435 = vector.shape_cast %434 : vector<8xf32> to vector<8x1xf32>
    %436 = vector.broadcast %435 : vector<8x1xf32> to vector<8x8xf32>
    %437 = arith.subf %433, %436 : vector<8x8xf32>
    %438 = math.exp %437 : vector<8x8xf32>
    %cst_181 = arith.constant dense<0.000000e+00> : vector<8xf32>
    %439 = vector.multi_reduction <add>, %438, %cst_181 [1] : vector<8x8xf32> to vector<8xf32>
    %440 = vector.shape_cast %439 : vector<8xf32> to vector<8x1xf32>
    %441 = tpu.reciprocal %440 {approx = true} : vector<8x1xf32> -> vector<8x1xf32>
    %442 = vector.broadcast %441 : vector<8x1xf32> to vector<8x8xf32>
    %443 = arith.mulf %438, %442 : vector<8x8xf32>
    %cst_182 = arith.constant 0.000000e+00 : f32
    %444 = arith.truncf %cst_182 : f32 to bf16
    %445 = vector.shape_cast %13 : vector<1x32xi1> to vector<1x32xi1>
    %446 = vector.broadcast %445 : vector<1x32xi1> to vector<8x32xi1>
    %447 = vector.broadcast %444 : bf16 to vector<8x32xbf16>
    %448 = arith.select %446, %400, %447 : vector<8x32xi1>, vector<8x32xbf16>
    %449 = arith.truncf %443 : vector<8x8xf32> to vector<8x8xbf16>
    %cst_183 = arith.constant dense<0.000000e+00> : vector<8x32xf32>
    %450 = tpu.matmul %449, %448, %cst_183 {dimension_numbers = #tpu.dot_dimension_numbers<[1], [0], [0], [1], [0, 0, 1, 1], [], []>} : vector<8x8xbf16>, vector<8x32xbf16>, vector<8x32xf32> -> vector<8x32xf32>
    %451 = arith.addf %425, %450 : vector<8x32xf32>
    %452 = arith.truncf %451 : vector<8x32xf32> to vector<8x32xbf16>
    %cst_184 = arith.constant dense<0.000000e+00> : vector<8x32xf32>
    %453 = tpu.matmul %452, %383, %cst_184 {dimension_numbers = #tpu.dot_dimension_numbers<[1], [0], [0], [1], [0, 0, 1, 1], [], []>} : vector<8x32xbf16>, vector<32x32xbf16>, vector<8x32xf32> -> vector<8x32xf32>
    %454 = vector.broadcast %385 : vector<1x32xf32> to vector<8x32xf32>
    %455 = arith.addf %453, %454 : vector<8x32xf32>
    %456 = arith.addf %198, %455 : vector<8x32xf32>
    %457 = vector.extract_strided_slice %272 {offsets = [1, 0, 0], sizes = [1, 1, 32], strides = [1, 1, 1]} : vector<4x1x32xf32> to vector<1x1x32xf32>
    %458 = vector.shape_cast %457 : vector<1x1x32xf32> to vector<1x32xf32>
    %459 = vector.extract_strided_slice %274 {offsets = [1, 0, 0], sizes = [1, 1, 32], strides = [1, 1, 1]} : vector<4x1x32xf32> to vector<1x1x32xf32>
    %460 = vector.shape_cast %459 : vector<1x1x32xf32> to vector<1x32xf32>
    %461 = arith.addf %376, %455 : vector<8x32xf32>
    %cst_185 = arith.constant dense<0.000000e+00> : vector<8xf32>
    %462 = vector.multi_reduction <add>, %461, %cst_185 [1] : vector<8x32xf32> to vector<8xf32>
    %463 = vector.shape_cast %462 : vector<8xf32> to vector<8x1xf32>
    %cst_186 = arith.constant 3.200000e+01 : f32
    %464 = vector.broadcast %cst_186 : f32 to vector<8x1xf32>
    %465 = arith.divf %463, %464 : vector<8x1xf32>
    %466 = arith.mulf %461, %461 : vector<8x32xf32>
    %cst_187 = arith.constant dense<0.000000e+00> : vector<8xf32>
    %467 = vector.multi_reduction <add>, %466, %cst_187 [1] : vector<8x32xf32> to vector<8xf32>
    %468 = vector.shape_cast %467 : vector<8xf32> to vector<8x1xf32>
    %cst_188 = arith.constant 3.200000e+01 : f32
    %469 = vector.broadcast %cst_188 : f32 to vector<8x1xf32>
    %470 = arith.divf %468, %469 : vector<8x1xf32>
    %471 = arith.mulf %465, %465 : vector<8x1xf32>
    %472 = arith.subf %470, %471 : vector<8x1xf32>
    %473 = vector.broadcast %465 : vector<8x1xf32> to vector<8x32xf32>
    %474 = arith.subf %461, %473 : vector<8x32xf32>
    %cst_189 = arith.constant 9.99999974E-6 : f32
    %475 = vector.broadcast %cst_189 : f32 to vector<8x1xf32>
    %476 = arith.addf %472, %475 : vector<8x1xf32>
    %477 = math.rsqrt %476 : vector<8x1xf32>
    %478 = vector.broadcast %477 : vector<8x1xf32> to vector<8x32xf32>
    %479 = arith.mulf %474, %478 : vector<8x32xf32>
    %480 = vector.broadcast %458 : vector<1x32xf32> to vector<8x32xf32>
    %481 = arith.mulf %479, %480 : vector<8x32xf32>
    %482 = vector.broadcast %460 : vector<1x32xf32> to vector<8x32xf32>
    %483 = arith.addf %481, %482 : vector<8x32xf32>
    %484 = arith.truncf %483 : vector<8x32xf32> to vector<8x32xbf16>
    %c1_190 = arith.constant 1 : index
    %c0_191 = arith.constant 0 : index
    %c0_192 = arith.constant 0 : index
    %485 = vector.load %arg8[%c1_190, %c0_191, %c0_192] : memref<2x32x64xbf16, #tpu.memory_space<vmem>>, vector<1x32x64xbf16>
    %486 = vector.shape_cast %485 : vector<1x32x64xbf16> to vector<32x64xbf16>
    %c1_193 = arith.constant 1 : index
    %c0_194 = arith.constant 0 : index
    %c0_195 = arith.constant 0 : index
    %487 = vector.load %arg9[%c1_193, %c0_194, %c0_195] : memref<2x1x64xf32, #tpu.memory_space<vmem>>, vector<1x1x64xf32>
    %488 = vector.shape_cast %487 : vector<1x1x64xf32> to vector<1x64xf32>
    %c1_196 = arith.constant 1 : index
    %c0_197 = arith.constant 0 : index
    %c0_198 = arith.constant 0 : index
    %489 = vector.load %arg10[%c1_196, %c0_197, %c0_198] : memref<2x64x32xbf16, #tpu.memory_space<vmem>>, vector<1x64x32xbf16>
    %490 = vector.shape_cast %489 : vector<1x64x32xbf16> to vector<64x32xbf16>
    %c1_199 = arith.constant 1 : index
    %c0_200 = arith.constant 0 : index
    %c0_201 = arith.constant 0 : index
    %491 = vector.load %arg11[%c1_199, %c0_200, %c0_201] : memref<2x1x32xf32, #tpu.memory_space<vmem>>, vector<1x1x32xf32>
    %492 = vector.shape_cast %491 : vector<1x1x32xf32> to vector<1x32xf32>
    %cst_202 = arith.constant dense<0.000000e+00> : vector<8x64xf32>
    %493 = tpu.matmul %484, %486, %cst_202 {dimension_numbers = #tpu.dot_dimension_numbers<[1], [0], [0], [1], [0, 0, 1, 1], [], []>} : vector<8x32xbf16>, vector<32x64xbf16>, vector<8x64xf32> -> vector<8x64xf32>
    %494 = vector.broadcast %488 : vector<1x64xf32> to vector<8x64xf32>
    %495 = arith.addf %493, %494 : vector<8x64xf32>
    %cst_203 = arith.constant 0.000000e+00 : f32
    %496 = vector.broadcast %cst_203 : f32 to vector<8x64xf32>
    %497 = arith.maximumf %495, %496 : vector<8x64xf32>
    %498 = arith.truncf %497 : vector<8x64xf32> to vector<8x64xbf16>
    %cst_204 = arith.constant dense<0.000000e+00> : vector<8x32xf32>
    %499 = tpu.matmul %498, %490, %cst_204 {dimension_numbers = #tpu.dot_dimension_numbers<[1], [0], [0], [1], [0, 0, 1, 1], [], []>} : vector<8x64xbf16>, vector<64x32xbf16>, vector<8x32xf32> -> vector<8x32xf32>
    %500 = vector.broadcast %492 : vector<1x32xf32> to vector<8x32xf32>
    %501 = arith.addf %499, %500 : vector<8x32xf32>
    %502 = vector.extract_strided_slice %272 {offsets = [2, 0, 0], sizes = [1, 1, 32], strides = [1, 1, 1]} : vector<4x1x32xf32> to vector<1x1x32xf32>
    %503 = vector.shape_cast %502 : vector<1x1x32xf32> to vector<1x32xf32>
    %504 = vector.extract_strided_slice %274 {offsets = [2, 0, 0], sizes = [1, 1, 32], strides = [1, 1, 1]} : vector<4x1x32xf32> to vector<1x1x32xf32>
    %505 = vector.shape_cast %504 : vector<1x1x32xf32> to vector<1x32xf32>
    %506 = arith.addf %483, %501 : vector<8x32xf32>
    %cst_205 = arith.constant dense<0.000000e+00> : vector<8xf32>
    %507 = vector.multi_reduction <add>, %506, %cst_205 [1] : vector<8x32xf32> to vector<8xf32>
    %508 = vector.shape_cast %507 : vector<8xf32> to vector<8x1xf32>
    %cst_206 = arith.constant 3.200000e+01 : f32
    %509 = vector.broadcast %cst_206 : f32 to vector<8x1xf32>
    %510 = arith.divf %508, %509 : vector<8x1xf32>
    %511 = arith.mulf %506, %506 : vector<8x32xf32>
    %cst_207 = arith.constant dense<0.000000e+00> : vector<8xf32>
    %512 = vector.multi_reduction <add>, %511, %cst_207 [1] : vector<8x32xf32> to vector<8xf32>
    %513 = vector.shape_cast %512 : vector<8xf32> to vector<8x1xf32>
    %cst_208 = arith.constant 3.200000e+01 : f32
    %514 = vector.broadcast %cst_208 : f32 to vector<8x1xf32>
    %515 = arith.divf %513, %514 : vector<8x1xf32>
    %516 = arith.mulf %510, %510 : vector<8x1xf32>
    %517 = arith.subf %515, %516 : vector<8x1xf32>
    %518 = vector.broadcast %510 : vector<8x1xf32> to vector<8x32xf32>
    %519 = arith.subf %506, %518 : vector<8x32xf32>
    %cst_209 = arith.constant 9.99999974E-6 : f32
    %520 = vector.broadcast %cst_209 : f32 to vector<8x1xf32>
    %521 = arith.addf %517, %520 : vector<8x1xf32>
    %522 = math.rsqrt %521 : vector<8x1xf32>
    %523 = vector.broadcast %522 : vector<8x1xf32> to vector<8x32xf32>
    %524 = arith.mulf %519, %523 : vector<8x32xf32>
    %525 = vector.broadcast %503 : vector<1x32xf32> to vector<8x32xf32>
    %526 = arith.mulf %524, %525 : vector<8x32xf32>
    %527 = vector.broadcast %505 : vector<1x32xf32> to vector<8x32xf32>
    %528 = arith.addf %526, %527 : vector<8x32xf32>
    %c0_210 = arith.constant 0 : index
    %c0_211 = arith.constant 0 : index
    %c0_212 = arith.constant 0 : index
    %529 = vector.load %arg14[%c0_210, %c0_211, %c0_212] : memref<2x1x32xf32, #tpu.memory_space<vmem>>, vector<1x1x32xf32>
    %530 = vector.shape_cast %529 : vector<1x1x32xf32> to vector<1x32xf32>
    %c1_213 = arith.constant 1 : index
    %c0_214 = arith.constant 0 : index
    %c0_215 = arith.constant 0 : index
    %531 = vector.load %arg14[%c1_213, %c0_214, %c0_215] : memref<2x1x32xf32, #tpu.memory_space<vmem>>, vector<1x1x32xf32>
    %532 = vector.shape_cast %531 : vector<1x1x32xf32> to vector<1x32xf32>
    %cst_216 = arith.constant dense<0.000000e+00> : vector<8xf32>
    %533 = vector.multi_reduction <add>, %528, %cst_216 [1] : vector<8x32xf32> to vector<8xf32>
    %534 = vector.shape_cast %533 : vector<8xf32> to vector<8x1xf32>
    %cst_217 = arith.constant 3.200000e+01 : f32
    %535 = vector.broadcast %cst_217 : f32 to vector<8x1xf32>
    %536 = arith.divf %534, %535 : vector<8x1xf32>
    %537 = arith.mulf %528, %528 : vector<8x32xf32>
    %cst_218 = arith.constant dense<0.000000e+00> : vector<8xf32>
    %538 = vector.multi_reduction <add>, %537, %cst_218 [1] : vector<8x32xf32> to vector<8xf32>
    %539 = vector.shape_cast %538 : vector<8xf32> to vector<8x1xf32>
    %cst_219 = arith.constant 3.200000e+01 : f32
    %540 = vector.broadcast %cst_219 : f32 to vector<8x1xf32>
    %541 = arith.divf %539, %540 : vector<8x1xf32>
    %542 = arith.mulf %536, %536 : vector<8x1xf32>
    %543 = arith.subf %541, %542 : vector<8x1xf32>
    %544 = vector.broadcast %536 : vector<8x1xf32> to vector<8x32xf32>
    %545 = arith.subf %528, %544 : vector<8x32xf32>
    %cst_220 = arith.constant 9.99999974E-6 : f32
    %546 = vector.broadcast %cst_220 : f32 to vector<8x1xf32>
    %547 = arith.addf %543, %546 : vector<8x1xf32>
    %548 = math.rsqrt %547 : vector<8x1xf32>
    %549 = vector.broadcast %548 : vector<8x1xf32> to vector<8x32xf32>
    %550 = arith.mulf %545, %549 : vector<8x32xf32>
    %551 = vector.broadcast %530 : vector<1x32xf32> to vector<8x32xf32>
    %552 = arith.mulf %550, %551 : vector<8x32xf32>
    %553 = vector.broadcast %532 : vector<1x32xf32> to vector<8x32xf32>
    %554 = arith.addf %552, %553 : vector<8x32xf32>
    %cst_221 = arith.constant 0.000000e+00 : f32
    %555 = vector.broadcast %cst_221 : f32 to vector<8x32xf32>
    %556 = tpu.concatenate %554, %349, %456, %555 in 1 : vector<8x32xf32>, vector<8x32xf32>, vector<8x32xf32>, vector<8x32xf32> -> vector<8x128xf32>
    %c0_222 = arith.constant 0 : index
    %c0_223 = arith.constant 0 : index
    %557 = vector.load %arg15[%c0_222, %c0_223] : memref<8x128xf32, #tpu.memory_space<vmem>>, vector<8x128xf32>
    tpu.vector_store %arg15[%c0_222, %c0_223], %556 {strides = array<i32>} : memref<8x128xf32, #tpu.memory_space<vmem>>, vector<8x128xf32>,
    return
  }
  func.func @transform_0(%arg0: i32) -> (i32, i32) {
    %c0_i32 = arith.constant 0 : i32
    %c0_i32_0 = arith.constant 0 : i32
    %c0_i32_1 = arith.constant 0 : i32
    return %c0_i32, %c0_i32_0 : i32, i32
  }
  func.func @transform_1(%arg0: i32) -> (i32, i32) {
    %c0_i32 = arith.constant 0 : i32
    %c0_i32_0 = arith.constant 0 : i32
    %c0_i32_1 = arith.constant 0 : i32
    return %c0_i32, %c0_i32_0 : i32, i32
  }
  func.func @transform_2(%arg0: i32) -> (i32, i32) {
    %c0_i32 = arith.constant 0 : i32
    %c0_i32_0 = arith.constant 0 : i32
    %c0_i32_1 = arith.constant 0 : i32
    return %c0_i32, %c0_i32_0 : i32, i32
  }
  func.func @transform_3(%arg0: i32) -> (i32, i32, i32, i32) {
    %c0_i32 = arith.constant 0 : i32
    %c0_i32_0 = arith.constant 0 : i32
    %c0_i32_1 = arith.constant 0 : i32
    %c0_i32_2 = arith.constant 0 : i32
    %c0_i32_3 = arith.constant 0 : i32
    return %c0_i32, %c0_i32_0, %c0_i32_1, %c0_i32_2 : i32, i32, i32, i32
  }
  func.func @transform_4(%arg0: i32) -> (i32, i32, i32, i32) {
    %c0_i32 = arith.constant 0 : i32
    %c0_i32_0 = arith.constant 0 : i32
    %c0_i32_1 = arith.constant 0 : i32
    %c0_i32_2 = arith.constant 0 : i32
    %c0_i32_3 = arith.constant 0 : i32
    return %c0_i32, %c0_i32_0, %c0_i32_1, %c0_i32_2 : i32, i32, i32, i32
  }
  func.func @transform_5(%arg0: i32) -> (i32, i32, i32, i32) {
    %c0_i32 = arith.constant 0 : i32
    %c0_i32_0 = arith.constant 0 : i32
    %c0_i32_1 = arith.constant 0 : i32
    %c0_i32_2 = arith.constant 0 : i32
    %c0_i32_3 = arith.constant 0 : i32
    return %c0_i32, %c0_i32_0, %c0_i32_1, %c0_i32_2 : i32, i32, i32, i32
  }
  func.func @transform_6(%arg0: i32) -> (i32, i32, i32, i32) {
    %c0_i32 = arith.constant 0 : i32
    %c0_i32_0 = arith.constant 0 : i32
    %c0_i32_1 = arith.constant 0 : i32
    %c0_i32_2 = arith.constant 0 : i32
    %c0_i32_3 = arith.constant 0 : i32
    return %c0_i32, %c0_i32_0, %c0_i32_1, %c0_i32_2 : i32, i32, i32, i32
  }
  func.func @transform_7(%arg0: i32) -> (i32, i32, i32) {
    %c0_i32 = arith.constant 0 : i32
    %c0_i32_0 = arith.constant 0 : i32
    %c0_i32_1 = arith.constant 0 : i32
    %c0_i32_2 = arith.constant 0 : i32
    return %c0_i32, %c0_i32_0, %c0_i32_1 : i32, i32, i32
  }
  func.func @transform_8(%arg0: i32) -> (i32, i32, i32) {
    %c0_i32 = arith.constant 0 : i32
    %c0_i32_0 = arith.constant 0 : i32
    %c0_i32_1 = arith.constant 0 : i32
    %c0_i32_2 = arith.constant 0 : i32
    return %c0_i32, %c0_i32_0, %c0_i32_1 : i32, i32, i32
  }
  func.func @transform_9(%arg0: i32) -> (i32, i32, i32) {
    %c0_i32 = arith.constant 0 : i32
    %c0_i32_0 = arith.constant 0 : i32
    %c0_i32_1 = arith.constant 0 : i32
    %c0_i32_2 = arith.constant 0 : i32
    return %c0_i32, %c0_i32_0, %c0_i32_1 : i32, i32, i32
  }
  func.func @transform_10(%arg0: i32) -> (i32, i32, i32) {
    %c0_i32 = arith.constant 0 : i32
    %c0_i32_0 = arith.constant 0 : i32
    %c0_i32_1 = arith.constant 0 : i32
    %c0_i32_2 = arith.constant 0 : i32
    return %c0_i32, %c0_i32_0, %c0_i32_1 : i32, i32, i32
  }
  func.func @transform_11(%arg0: i32) -> (i32, i32, i32, i32) {
    %c0_i32 = arith.constant 0 : i32
    %c0_i32_0 = arith.constant 0 : i32
    %c0_i32_1 = arith.constant 0 : i32
    %c0_i32_2 = arith.constant 0 : i32
    %c0_i32_3 = arith.constant 0 : i32
    return %c0_i32, %c0_i32_0, %c0_i32_1, %c0_i32_2 : i32, i32, i32, i32
  }
  func.func @transform_12(%arg0: i32) -> (i32, i32, i32, i32) {
    %c0_i32 = arith.constant 0 : i32
    %c0_i32_0 = arith.constant 0 : i32
    %c0_i32_1 = arith.constant 0 : i32
    %c0_i32_2 = arith.constant 0 : i32
    %c0_i32_3 = arith.constant 0 : i32
    return %c0_i32, %c0_i32_0, %c0_i32_1, %c0_i32_2 : i32, i32, i32, i32
  }
  func.func @transform_13(%arg0: i32) -> (i32, i32, i32) {
    %c0_i32 = arith.constant 0 : i32
    %c0_i32_0 = arith.constant 0 : i32
    %c0_i32_1 = arith.constant 0 : i32
    %c0_i32_2 = arith.constant 0 : i32
    return %c0_i32, %c0_i32_0, %c0_i32_1 : i32, i32, i32
  }
  func.func @transform_14(%arg0: i32) -> (i32, i32) {
    %c0_i32 = arith.constant 0 : i32
    %c0_i32_0 = arith.constant 0 : i32
    %c0_i32_1 = arith.constant 0 : i32
    return %c0_i32, %c0_i32_0 : i32, i32
  }
}

</mosaic_0001>

<llo_original>
// kernel: tpu_custom_call.1
$region0: #{tpu_custom_call.1}
  #allocation0 [shape = 'u32[]', space=smem, size = 0x4, offset = 0x4, fixed_abs, tag = 'smem constant byte address 0x4 - core index']
  #allocation1 [shape = 'u32[144,128]{1,0:T(1,128)}', space=vmem, size = 0x12000, scoped, tag = 'internal scratch']
  %s0 = inlined_call_operand.hbm [shape: f32[8,32], index: 0, kind: input, shape index: {}]
  %s1 = inlined_call_operand.hbm [shape: f32[8,32], index: 1, kind: input, shape index: {}]
  %s2 = inlined_call_operand.hbm [shape: f32[8,32], index: 2, kind: input, shape index: {}]
  %s3 = inlined_call_operand.hbm [shape: bf16[2,3,32,96], index: 3, kind: input, shape index: {}]
  %s4 = inlined_call_operand.hbm [shape: f32[2,3,1,96], index: 4, kind: input, shape index: {}]
  %s5 = inlined_call_operand.hbm [shape: bf16[2,3,32,32], index: 5, kind: input, shape index: {}]
  %s6 = inlined_call_operand.hbm [shape: f32[2,3,1,32], index: 6, kind: input, shape index: {}]
  %s7 = inlined_call_operand.hbm [shape: bf16[2,32,64], index: 7, kind: input, shape index: {}]
  %s8 = inlined_call_operand.hbm [shape: f32[2,1,64], index: 8, kind: input, shape index: {}]
  %s9 = inlined_call_operand.hbm [shape: bf16[2,64,32], index: 9, kind: input, shape index: {}]
  %s10 = inlined_call_operand.hbm [shape: f32[2,1,32], index: 10, kind: input, shape index: {}]
  %s11 = inlined_call_operand.hbm [shape: f32[2,4,1,32], index: 11, kind: input, shape index: {}]
  %s12 = inlined_call_operand.hbm [shape: f32[2,4,1,32], index: 12, kind: input, shape index: {}]
  %s13 = inlined_call_operand.hbm [shape: f32[2,1,32], index: 13, kind: input, shape index: {}]
  %s14 = inlined_call_operand.hbm [shape: f32[8,128], index: 14, kind: output, shape index: {}]
  %s15 = sld [smem:[#allocation0]]
  $region122: #{tpu_custom_call.1} parent=0
    _
  %s17 = ssub.s32 1, %s15
  %s18 = scalar_select 0, %s17, %s15
  $region1: #{tpu_custom_call.1} parent=0
    #allocation2 [shape = 'u8[4096]{0}', space=vmem, size = 0x1000, scoped, tag = 'input window, operand 0, single buffered']
    #allocation3 [shape = 's32[1]{0}', space=sflag, size = 0x4, scoped, tag = 'scoped memory for tpu_custom_call.1']
    #allocation4 [shape = 's32[1]{0}', space=sflag, size = 0x4, scoped, tag = 'scoped memory for tpu_custom_call.1']
    #allocation5 [shape = 'u8[4096]{0}', space=vmem, size = 0x1000, scoped, tag = 'input window, operand 1, single buffered']
    #allocation6 [shape = 's32[1]{0}', space=sflag, size = 0x4, scoped, tag = 'scoped memory for tpu_custom_call.1']
    #allocation7 [shape = 'u8[4096]{0}', space=vmem, size = 0x1000, scoped, tag = 'input window, operand 2, single buffered']
    #allocation8 [shape = 'u8[49152]{0}', space=vmem, size = 0xc000, scoped, tag = 'input window, operand 3, single buffered']
    #allocation9 [shape = 's32[1]{0}', space=sflag, size = 0x4, scoped, tag = 'scoped memory for tpu_custom_call.1']
    #allocation10 [shape = 'u8[3072]{0}', space=vmem, size = 0xc00, scoped, tag = 'input window, operand 4, single buffered']
    #allocation11 [shape = 'u8[49152]{0}', space=vmem, size = 0xc000, scoped, tag = 'input window, operand 5, single buffered']
    #allocation12 [shape = 's32[1]{0}', space=sflag, size = 0x4, scoped, tag = 'scoped memory for tpu_custom_call.1']
    #allocation13 [shape = 'u8[3072]{0}', space=vmem, size = 0xc00, scoped, tag = 'input window, operand 6, single buffered']
    #allocation14 [shape = 'u8[16384]{0}', space=vmem, size = 0x4000, scoped, tag = 'input window, operand 7, single buffered']
    #allocation15 [shape = 's32[1]{0}', space=sflag, size = 0x4, scoped, tag = 'scoped memory for tpu_custom_call.1']
    #allocation16 [shape = 'u8[1024]{0}', space=vmem, size = 0x400, scoped, tag = 'input window, operand 8, single buffered']
    #allocation17 [shape = 'u8[32768]{0}', space=vmem, size = 0x8000, scoped, tag = 'input window, operand 9, single buffered']
    #allocation18 [shape = 's32[1]{0}', space=sflag, size = 0x4, scoped, tag = 'scoped memory for tpu_custom_call.1']
    #allocation19 [shape = 'u8[1024]{0}', space=vmem, size = 0x400, scoped, tag = 'input window, operand 10, single buffered']
    #allocation20 [shape = 'u8[4096]{0}', space=vmem, size = 0x1000, scoped, tag = 'input window, operand 11, single buffered']
    #allocation21 [shape = 's32[1]{0}', space=sflag, size = 0x4, scoped, tag = 'scoped memory for tpu_custom_call.1']
    #allocation22 [shape = 'u8[4096]{0}', space=vmem, size = 0x1000, scoped, tag = 'input window, operand 12, single buffered']
    #allocation23 [shape = 'u8[1024]{0}', space=vmem, size = 0x400, scoped, tag = 'input window, operand 13, single buffered']
    #allocation24 [shape = 's32[1]{0}', space=sflag, size = 0x4, scoped, tag = 'scoped memory for tpu_custom_call.1']
    #allocation25 [shape = 'u8[4096]{0}', space=vmem, size = 0x1000, scoped, tag = 'output window, operand 0, single buffered']
    %19 = vsyncpa [#allocation3], 0
    %20 = vsyncpa [#allocation6], 0
    %21 = vsyncpa [#allocation9], 0
    %22 = vsyncpa [#allocation12], 0
    %23 = vsyncpa [#allocation15], 0
    %24 = vsyncpa [#allocation18], 0
    %25 = vsyncpa [#allocation21], 0
    %26 = vsyncpa [#allocation24], 0
    %27 = vsyncpa [#allocation4], 0
    // Predicated region
    $region2: #{tpu_custom_call.1} parent=1 // pred_check
      _
    $region3: #{tpu_custom_call.1} parent=1 // pred_check_branch
      %29 = sbr.rel (0) target = $region5
    $region4: #{tpu_custom_call.1} parent=1 // pred_region
      %s31 = ssub.s32 128, 128
      %32 = vsyncadd [#allocation3], %s31
      %s34 = sshll.u32 [#allocation2], 4
      %s35 = int_to_ptr.vmem [resolvable:$true] %s34
      %37 = dma.hbm_to_vmem [thread:$0]  %s0, 128, %s35, [#allocation3]
    $region5: #{tpu_custom_call.1} parent=1 // pred_fallthru
      _
    // Predicated region
    $region6: #{tpu_custom_call.1} parent=1 // pred_check
      _
    $region7: #{tpu_custom_call.1} parent=1 // pred_check_branch
      %39 = sbr.rel (0) target = $region9
    $region8: #{tpu_custom_call.1} parent=1 // pred_region
      %s41 = ssub.s32 128, 128
      %42 = vsyncadd [#allocation6], %s41
      %s44 = sshll.u32 [#allocation5], 4
      %s45 = int_to_ptr.vmem [resolvable:$true] %s44
      %47 = dma.hbm_to_vmem [thread:$0]  %s1, 128, %s45, [#allocation6]
    $region9: #{tpu_custom_call.1} parent=1 // pred_fallthru
      _
    // Predicated region
    $region10: #{tpu_custom_call.1} parent=1 // pred_check
      _
    $region11: #{tpu_custom_call.1} parent=1 // pred_check_branch
      %49 = sbr.rel (0) target = $region13
    $region12: #{tpu_custom_call.1} parent=1 // pred_region
      %s51 = ssub.s32 128, 128
      %52 = vsyncadd [#allocation6], %s51
      %s54 = sshll.u32 [#allocation7], 4
      %s55 = int_to_ptr.vmem [resolvable:$true] %s54
      %57 = dma.hbm_to_vmem [thread:$0]  %s2, 128, %s55, [#allocation6]
    $region13: #{tpu_custom_call.1} parent=1 // pred_fallthru
      _
    // Predicated region
    $region14: #{tpu_custom_call.1} parent=1 // pred_check
      _
    $region15: #{tpu_custom_call.1} parent=1 // pred_check_branch
      %59 = sbr.rel (0) target = $region17
    $region16: #{tpu_custom_call.1} parent=1 // pred_region
      %s61 = ssub.s32 1536, 1536
      %62 = vsyncadd [#allocation9], %s61
      %s63 = sshll.u32 [#allocation8], 4
      %s64 = int_to_ptr.vmem [resolvable:$true] %s63
      %69 = dma.hbm_to_vmem [thread:$0]  %s3, 1536, %s64, [#allocation9], 64, 64, 4
    $region17: #{tpu_custom_call.1} parent=1 // pred_fallthru
      _
    // Predicated region
    $region18: #{tpu_custom_call.1} parent=1 // pred_check
      _
    $region19: #{tpu_custom_call.1} parent=1 // pred_check_branch
      %71 = sbr.rel (0) target = $region21
    $region20: #{tpu_custom_call.1} parent=1 // pred_region
      %s73 = ssub.s32 96, 96
      %74 = vsyncadd [#allocation9], %s73
      %s75 = sshll.u32 [#allocation10], 4
      %s76 = int_to_ptr.vmem [resolvable:$true] %s75
      %81 = dma.hbm_to_vmem [thread:$0]  %s4, 96, %s76, [#allocation9], 16, 16, 1
    $region21: #{tpu_custom_call.1} parent=1 // pred_fallthru
      _
    // Predicated region
    $region22: #{tpu_custom_call.1} parent=1 // pred_check
      _
    $region23: #{tpu_custom_call.1} parent=1 // pred_check_branch
      %83 = sbr.rel (0) target = $region25
    $region24: #{tpu_custom_call.1} parent=1 // pred_region
      %s85 = ssub.s32 1536, 1536
      %86 = vsyncadd [#allocation12], %s85
      %s87 = sshll.u32 [#allocation11], 4
      %s88 = int_to_ptr.vmem [resolvable:$true] %s87
      %93 = dma.hbm_to_vmem [thread:$0]  %s5, 1536, %s88, [#allocation12], 64, 64, 4
    $region25: #{tpu_custom_call.1} parent=1 // pred_fallthru
      _
    // Predicated region
    $region26: #{tpu_custom_call.1} parent=1 // pred_check
      _
    $region27: #{tpu_custom_call.1} parent=1 // pred_check_branch
      %95 = sbr.rel (0) target = $region29
    $region28: #{tpu_custom_call.1} parent=1 // pred_region
      %s97 = ssub.s32 96, 96
      %98 = vsyncadd [#allocation12], %s97
      %s99 = sshll.u32 [#allocation13], 4
      %s100 = int_to_ptr.vmem [resolvable:$true] %s99
      %105 = dma.hbm_to_vmem [thread:$0]  %s6, 96, %s100, [#allocation12], 16, 16, 1
    $region29: #{tpu_custom_call.1} parent=1 // pred_fallthru
      _
    // Predicated region
    $region30: #{tpu_custom_call.1} parent=1 // pred_check
      _
    $region31: #{tpu_custom_call.1} parent=1 // pred_check_branch
      %107 = sbr.rel (0) target = $region33
    $region32: #{tpu_custom_call.1} parent=1 // pred_region
      %s109 = ssub.s32 512, 512
      %110 = vsyncadd [#allocation15], %s109
      %s111 = sshll.u32 [#allocation14], 4
      %s112 = int_to_ptr.vmem [resolvable:$true] %s111
      %117 = dma.hbm_to_vmem [thread:$0]  %s7, 512, %s112, [#allocation15], 64, 64, 4
    $region33: #{tpu_custom_call.1} parent=1 // pred_fallthru
      _
    // Predicated region
    $region34: #{tpu_custom_call.1} parent=1 // pred_check
      _
    $region35: #{tpu_custom_call.1} parent=1 // pred_check_branch
      %119 = sbr.rel (0) target = $region37
    $region36: #{tpu_custom_call.1} parent=1 // pred_region
      %s121 = ssub.s32 32, 32
      %122 = vsyncadd [#allocation15], %s121
      %s123 = sshll.u32 [#allocation16], 4
      %s124 = int_to_ptr.vmem [resolvable:$true] %s123
      %129 = dma.hbm_to_vmem [thread:$0]  %s8, 32, %s124, [#allocation15], 16, 16, 1
    $region37: #{tpu_custom_call.1} parent=1 // pred_fallthru
      _
    // Predicated region
    $region38: #{tpu_custom_call.1} parent=1 // pred_check
      _
    $region39: #{tpu_custom_call.1} parent=1 // pred_check_branch
      %131 = sbr.rel (0) target = $region41
    $region40: #{tpu_custom_call.1} parent=1 // pred_region
      %s133 = ssub.s32 1024, 1024
      %134 = vsyncadd [#allocation18], %s133
      %s135 = sshll.u32 [#allocation17], 4
      %s136 = int_to_ptr.vmem [resolvable:$true] %s135
      %141 = dma.hbm_to_vmem [thread:$0]  %s9, 1024, %s136, [#allocation18], 64, 64, 4
    $region41: #{tpu_custom_call.1} parent=1 // pred_fallthru
      _
    // Predicated region
    $region42: #{tpu_custom_call.1} parent=1 // pred_check
      _
    $region43: #{tpu_custom_call.1} parent=1 // pred_check_branch
      %143 = sbr.rel (0) target = $region45
    $region44: #{tpu_custom_call.1} parent=1 // pred_region
      %s145 = ssub.s32 32, 32
      %146 = vsyncadd [#allocation18], %s145
      %s147 = sshll.u32 [#allocation19], 4
      %s148 = int_to_ptr.vmem [resolvable:$true] %s147
      %153 = dma.hbm_to_vmem [thread:$0]  %s10, 32, %s148, [#allocation18], 16, 16, 1
    $region45: #{tpu_custom_call.1} parent=1 // pred_fallthru
      _
    // Predicated region
    $region46: #{tpu_custom_call.1} parent=1 // pred_check
      _
    $region47: #{tpu_custom_call.1} parent=1 // pred_check_branch
      %155 = sbr.rel (0) target = $region49
    $region48: #{tpu_custom_call.1} parent=1 // pred_region
      %s157 = ssub.s32 128, 128
      %158 = vsyncadd [#allocation21], %s157
      %s159 = sshll.u32 [#allocation20], 4
      %s160 = int_to_ptr.vmem [resolvable:$true] %s159
      %165 = dma.hbm_to_vmem [thread:$0]  %s11, 128, %s160, [#allocation21], 16, 16, 1
    $region49: #{tpu_custom_call.1} parent=1 // pred_fallthru
      _
    // Predicated region
    $region50: #{tpu_custom_call.1} parent=1 // pred_check
      _
    $region51: #{tpu_custom_call.1} parent=1 // pred_check_branch
      %167 = sbr.rel (0) target = $region53
    $region52: #{tpu_custom_call.1} parent=1 // pred_region
      %s169 = ssub.s32 128, 128
      %170 = vsyncadd [#allocation21], %s169
      %s171 = sshll.u32 [#allocation22], 4
      %s172 = int_to_ptr.vmem [resolvable:$true] %s171
      %177 = dma.hbm_to_vmem [thread:$0]  %s12, 128, %s172, [#allocation21], 16, 16, 1
    $region53: #{tpu_custom_call.1} parent=1 // pred_fallthru
      _
    // Predicated region
    $region54: #{tpu_custom_call.1} parent=1 // pred_check
      _
    $region55: #{tpu_custom_call.1} parent=1 // pred_check_branch
      %179 = sbr.rel (0) target = $region57
    $region56: #{tpu_custom_call.1} parent=1 // pred_region
      %s181 = ssub.s32 32, 32
      %182 = vsyncadd [#allocation24], %s181
      %s183 = sshll.u32 [#allocation23], 4
      %s184 = int_to_ptr.vmem [resolvable:$true] %s183
      %189 = dma.hbm_to_vmem [thread:$0]  %s13, 32, %s184, [#allocation24], 16, 16, 1
    $region57: #{tpu_custom_call.1} parent=1 // pred_fallthru
      _
    // Predicated region
    $region58: #{tpu_custom_call.1} parent=1 // pred_check
      _
    $region59: #{tpu_custom_call.1} parent=1 // pred_check_branch
      %191 = sbr.rel (0) target = $region61
    $region60: #{tpu_custom_call.1} parent=1 // pred_region
      %192 = dma.done [#allocation3], 128
    $region61: #{tpu_custom_call.1} parent=1 // pred_fallthru
      _
    // Predicated region
    $region62: #{tpu_custom_call.1} parent=1 // pred_check
      _
    $region63: #{tpu_custom_call.1} parent=1 // pred_check_branch
      %194 = sbr.rel (0) target = $region65
    $region64: #{tpu_custom_call.1} parent=1 // pred_region
      %195 = dma.done [#allocation6], 128
    $region65: #{tpu_custom_call.1} parent=1 // pred_fallthru
      _
    // Predicated region
    $region66: #{tpu_custom_call.1} parent=1 // pred_check
      _
    $region67: #{tpu_custom_call.1} parent=1 // pred_check_branch
      %197 = sbr.rel (0) target = $region69
    $region68: #{tpu_custom_call.1} parent=1 // pred_region
      %198 = dma.done [#allocation6], 128
    $region69: #{tpu_custom_call.1} parent=1 // pred_fallthru
      _
    // Predicated region
    $region70: #{tpu_custom_call.1} parent=1 // pred_check
      _
    $region71: #{tpu_custom_call.1} parent=1 // pred_check_branch
      %200 = sbr.rel (0) target = $region73
    $region72: #{tpu_custom_call.1} parent=1 // pred_region
      %201 = dma.done [#allocation9], 1536
    $region73: #{tpu_custom_call.1} parent=1 // pred_fallthru
      _
    // Predicated region
    $region74: #{tpu_custom_call.1} parent=1 // pred_check
      _
    $region75: #{tpu_custom_call.1} parent=1 // pred_check_branch
      %203 = sbr.rel (0) target = $region77
    $region76: #{tpu_custom_call.1} parent=1 // pred_region
      %204 = dma.done [#allocation9], 96
    $region77: #{tpu_custom_call.1} parent=1 // pred_fallthru
      _
    // Predicated region
    $region78: #{tpu_custom_call.1} parent=1 // pred_check
      _
    $region79: #{tpu_custom_call.1} parent=1 // pred_check_branch
      %206 = sbr.rel (0) target = $region81
    $region80: #{tpu_custom_call.1} parent=1 // pred_region
      %207 = dma.done [#allocation12], 1536
    $region81: #{tpu_custom_call.1} parent=1 // pred_fallthru
      _
    // Predicated region
    $region82: #{tpu_custom_call.1} parent=1 // pred_check
      _
    $region83: #{tpu_custom_call.1} parent=1 // pred_check_branch
      %209 = sbr.rel (0) target = $region85
    $region84: #{tpu_custom_call.1} parent=1 // pred_region
      %210 = dma.done [#allocation12], 96
    $region85: #{tpu_custom_call.1} parent=1 // pred_fallthru
      _
    // Predicated region
    $region86: #{tpu_custom_call.1} parent=1 // pred_check
      _
    $region87: #{tpu_custom_call.1} parent=1 // pred_check_branch
      %212 = sbr.rel (0) target = $region89
    $region88: #{tpu_custom_call.1} parent=1 // pred_region
      %213 = dma.done [#allocation15], 512
    $region89: #{tpu_custom_call.1} parent=1 // pred_fallthru
      _
    // Predicated region
    $region90: #{tpu_custom_call.1} parent=1 // pred_check
      _
    $region91: #{tpu_custom_call.1} parent=1 // pred_check_branch
      %215 = sbr.rel (0) target = $region93
    $region92: #{tpu_custom_call.1} parent=1 // pred_region
      %216 = dma.done [#allocation15], 32
    $region93: #{tpu_custom_call.1} parent=1 // pred_fallthru
      _
    // Predicated region
    $region94: #{tpu_custom_call.1} parent=1 // pred_check
      _
    $region95: #{tpu_custom_call.1} parent=1 // pred_check_branch
      %218 = sbr.rel (0) target = $region97
    $region96: #{tpu_custom_call.1} parent=1 // pred_region
      %219 = dma.done [#allocation18], 1024
    $region97: #{tpu_custom_call.1} parent=1 // pred_fallthru
      _
    // Predicated region
    $region98: #{tpu_custom_call.1} parent=1 // pred_check
      _
    $region99: #{tpu_custom_call.1} parent=1 // pred_check_branch
      %221 = sbr.rel (0) target = $region101
    $region100: #{tpu_custom_call.1} parent=1 // pred_region
      %222 = dma.done [#allocation18], 32
    $region101: #{tpu_custom_call.1} parent=1 // pred_fallthru
      _
    // Predicated region
    $region102: #{tpu_custom_call.1} parent=1 // pred_check
      _
    $region103: #{tpu_custom_call.1} parent=1 // pred_check_branch
      %224 = sbr.rel (0) target = $region105
    $region104: #{tpu_custom_call.1} parent=1 // pred_region
      %225 = dma.done [#allocation21], 128
    $region105: #{tpu_custom_call.1} parent=1 // pred_fallthru
      _
    // Predicated region
    $region106: #{tpu_custom_call.1} parent=1 // pred_check
      _
    $region107: #{tpu_custom_call.1} parent=1 // pred_check_branch
      %227 = sbr.rel (0) target = $region109
    $region108: #{tpu_custom_call.1} parent=1 // pred_region
      %228 = dma.done [#allocation21], 128
    $region109: #{tpu_custom_call.1} parent=1 // pred_fallthru
      _
    // Predicated region
    $region110: #{tpu_custom_call.1} parent=1 // pred_check
      _
    $region111: #{tpu_custom_call.1} parent=1 // pred_check_branch
      %230 = sbr.rel (0) target = $region113
    $region112: #{tpu_custom_call.1} parent=1 // pred_region
      %231 = dma.done [#allocation24], 32
    $region113: #{tpu_custom_call.1} parent=1 // pred_fallthru
      _
    %v235 = vld [vmem:[#allocation2] sm:$0xff]
    %v236 = vld [vmem:[#allocation5] sm:$0xff]
    %v237 = vld [vmem:[#allocation7] sm:$0xff]
    %v238 = vlaneseq
    %v239 = vand.u32 %v238, 127
    %vm240 = vcmp.ge.s32.totalorder %v239, 0
    %vm241 = vcmp.lt.s32.totalorder %v239, 16
    %vm242 = vmand %vm240, %vm241
    %vm243 = vcmp.ge.s32.totalorder %v239, 16
    %vm244 = vcmp.lt.s32.totalorder %v239, 32
    %vm245 = vmand %vm243, %vm244
    %v246 = vpack.c.bf16 %v236, %v236
    %v247 = vld [vmem:[#allocation20] sm:$0x1]
    %v248 = vld [vmem:[#allocation20 + $0x1] sm:$0x1]
    %v249 = vld [vmem:[#allocation20 + $0x2] sm:$0x1]
    %v250 = vld [vmem:[#allocation22] sm:$0x1]
    %v251 = vld [vmem:[#allocation22 + $0x1] sm:$0x1]
    %v252 = vld [vmem:[#allocation22 + $0x2] sm:$0x1]
    %v253 = vadd.f32 %v235, %v237
    %v254 = vpack.c.bf16 %v253, %v253
    %v255 = vld [vmem:[#allocation8] sm:$0xf]
    %v256 = vld [vmem:[#allocation8 + $0x4] sm:$0xf]
    %v257 = vld [vmem:[#allocation8 + $0x8] sm:$0xf]
    %v258 = vld [vmem:[#allocation8 + $0xc] sm:$0xf]
    %v259 = vld [vmem:[#allocation10] sm:$0x1]
    %v260 = vld [vmem:[#allocation11] sm:$0xf]
    %v261 = vld [vmem:[#allocation11 + $0x4] sm:$0xf]
    %v262 = vld [vmem:[#allocation11 + $0x8] sm:$0xf]
    %v263 = vld [vmem:[#allocation11 + $0xc] sm:$0xf]
    %v264 = vld [vmem:[#allocation13] sm:$0x1]
    %v266 = vlaneseq
    %v267 = vshrl.u32 %v266, 7
    %v268 = vsub.s32 0, %v267
    %v269 = vrot.slane %v259, %v268
    %v275 = vunpack.c.l.b16 %v255
    %v276 = vunpack.c.l.b16 %v256
    %v277 = vunpack.c.l.b16 %v257
    %v278 = vunpack.c.l.b16 %v258
    %v279 = vpack.c.b16 %v276, %v275
    %v280 = vpack.c.b16 %v278, %v277
    %vm283 = vcmask 261120
    %v285 = vsel %vm283, %v254, 0
    %287 = vmatprep.subr.bf16.mxu0 0
    %288 = vmatpush1.bf16.msra.mxu0 %v279
    %289 = vmatprep.subr.bf16.mxu0 0
    %290 = vmatpush1.bf16.msra.mxu0 %v280
    %291 = vmatprep.subr.bf16.mxu0 0
    %292 = vmatpush1.bf16.msra.mxu0 0
    %293 = vmatprep.subr.bf16.mxu0 0
    %294 = vmatpush1.bf16.msra.mxu0 0
    %295 = vmatprep.subr.bf16.mxu0 0
    %296 = vmatpush1.bf16.msra.mxu0 0
    %297 = vmatprep.subr.bf16.mxu0 0
    %298 = vmatpush1.bf16.msra.mxu0 0
    %299 = vmatprep.subr.bf16.mxu0 0
    %300 = vmatpush1.bf16.msra.mxu0 0
    %301 = vmatprep.subr.bf16.mxu0 0
    %302 = vmatpush1.bf16.msra.mxu0 0
    %303 = vmatprep.subr.bf16.mxu0 0
    %304 = vmatpush1.bf16.msra.mxu0 0
    %305 = vmatprep.subr.bf16.mxu0 0
    %306 = vmatpush1.bf16.msra.mxu0 0
    %307 = vmatprep.subr.bf16.mxu0 0
    %308 = vmatpush1.bf16.msra.mxu0 0
    %309 = vmatprep.subr.bf16.mxu0 0
    %310 = vmatpush1.bf16.msra.mxu0 0
    %311 = vmatprep.subr.bf16.mxu0 0
    %312 = vmatpush1.bf16.msra.mxu0 0
    %313 = vmatprep.subr.bf16.mxu0 0
    %314 = vmatpush1.bf16.msra.mxu0 0
    %315 = vmatprep.subr.bf16.mxu0 0
    %316 = vmatpush1.bf16.msra.mxu0 0
    %317 = vmatprep.subr.bf16.mxu0 0
    %318 = vmatpush1.bf16.msra.mxu0 0
    %319 = vmatprep.mubr.bf16.mxu0 0
    %320 = vmatmul.mubr.bf16.gmra.mrb[0].mxu0 %v285
    %v321 = vpop.f32.mrb[0].mxu0
    %v322 = vadd.f32 %v269, %v321
    %v323 = vpop.f32.mrb[0].mxu0
    %v324 = vpop.f32.mrb[0].mxu0
    %v325 = vpop.f32.mrb[0].mxu0
    %326 = vdwg.mxu0
    %v327 = vpack.c.bf16 %v322, %v322
    %v328 = vsel %vm242, 1, 0
    %vm329 = vcmp.eq.s32.totalorder %v328, 1
    %vm330 = vmpackc.low %vm329, %vm329
    %v331 = vsel %vm330, %v327, 0
    %333 = vrot.lane.b32.xlu0 %v327, 96
    %v334 = vpop.permute.xlu0 %333
    %v336 = vsel %vm283, %v331, 0
    %v339 = vsel %vm283, %v334, 0
    %341 = vmatprep.subr.bf16.mxu0 0
    %342 = vmatpush1.bf16.xpose.msra.mxu0 %v339
    %343 = vmatprep.subr.bf16.mxu0 0
    %344 = vmatpush1.bf16.xpose.msra.mxu0 0
    %345 = vmatprep.subr.bf16.mxu0 0
    %346 = vmatpush1.bf16.xpose.msra.mxu0 0
    %347 = vmatprep.subr.bf16.mxu0 0
    %348 = vmatpush1.bf16.xpose.msra.mxu0 0
    %349 = vmatprep.subr.bf16.mxu0 0
    %350 = vmatpush1.bf16.xpose.msra.mxu0 0
    %351 = vmatprep.subr.bf16.mxu0 0
    %352 = vmatpush1.bf16.xpose.msra.mxu0 0
    %353 = vmatprep.subr.bf16.mxu0 0
    %354 = vmatpush1.bf16.xpose.msra.mxu0 0
    %355 = vmatprep.subr.bf16.mxu0 0
    %356 = vmatpush1.bf16.xpose.msra.mxu0 0
    %357 = vmatprep.subr.bf16.mxu0 0
    %358 = vmatpush1.bf16.xpose.msra.mxu0 0
    %359 = vmatprep.subr.bf16.mxu0 0
    %360 = vmatpush1.bf16.xpose.msra.mxu0 0
    %361 = vmatprep.subr.bf16.mxu0 0
    %362 = vmatpush1.bf16.xpose.msra.mxu0 0
    %363 = vmatprep.subr.bf16.mxu0 0
    %364 = vmatpush1.bf16.xpose.msra.mxu0 0
    %365 = vmatprep.subr.bf16.mxu0 0
    %366 = vmatpush1.bf16.xpose.msra.mxu0 0
    %367 = vmatprep.subr.bf16.mxu0 0
    %368 = vmatpush1.bf16.xpose.msra.mxu0 0
    %369 = vmatprep.subr.bf16.mxu0 0
    %370 = vmatpush1.bf16.xpose.msra.mxu0 0
    %371 = vmatprep.subr.bf16.mxu0 0
    %372 = vmatpush1.bf16.xpose.msra.mxu0 0
    %373 = vmatprep.mubr.bf16.mxu0 0
    %374 = vmatmul.mubr.bf16.gmra.mrb[0].mxu0 %v336
    %v375 = vpop.f32.mrb[0].mxu0
    %v376 = vadd.f32 0.0, %v375
    %v377 = vpop.f32.mrb[0].mxu0
    %v378 = vpop.f32.mrb[0].mxu0
    %v379 = vpop.f32.mrb[0].mxu0
    %380 = vdwg.mxu0
    %v381 = vmul.f32 %v376, 0.25
    %vm382 = vcmask 64512
    %v383 = vsel %vm382, %v381, -inf
    %384 = vmax.xlane.f32.xlu0 %v383
    %v385 = vpop.xlane.xlu0 %384
    %v386 = vsub.f32 %v381, %v385
    %v387 = vmul.f32 %v386, 1.442695
    %v388 = vpow.pop %v387
    %v389 = vsel %vm382, %v388, 0.0
    %390 = vadd.xlane.f32.xlu0 %v389
    %v391 = vpop.xlane.xlu0 %390
    %v392 = vrcp.pop %v391
    %v393 = vmul.f32 %v388, %v392
    %v394 = vsel %vm330, 65537, 0
    %v395 = vlaneseq
    %v396 = vshrl.u32 %v395, 7
    %v397 = vsub.s32 0, %v396
    %v398 = vrot.slane %v394, %v397
    %399 = vrot.lane.b32.xlu0 %v398, 64
    %v400 = vpop.permute.xlu0 %399
    %vm401 = vcmp.ne.s16.totalorder %v400, 0
    %v402 = vsel %vm401, %v327, 0
    %v403 = vpack.c.bf16 %v393, %v393
    %v404 = vsel %vm245, 1, 0
    %vm405 = vcmp.eq.s32.totalorder %v404, 1
    %vm406 = vmpackc.low %vm405, %vm405
    %v407 = vsel %vm406, %v327, 0
    %v409 = vsel %vm283, %v407, 0
    %411 = vmatprep.subr.bf16.mxu0 0
    %412 = vmatpush1.bf16.xpose.msra.mxu0 %v339
    %413 = vmatprep.subr.bf16.mxu0 0
    %414 = vmatpush1.bf16.xpose.msra.mxu0 0
    %415 = vmatprep.subr.bf16.mxu0 0
    %416 = vmatpush1.bf16.xpose.msra.mxu0 0
    %417 = vmatprep.subr.bf16.mxu0 0
    %418 = vmatpush1.bf16.xpose.msra.mxu0 0
    %419 = vmatprep.subr.bf16.mxu0 0
    %420 = vmatpush1.bf16.xpose.msra.mxu0 0
    %421 = vmatprep.subr.bf16.mxu0 0
    %422 = vmatpush1.bf16.xpose.msra.mxu0 0
    %423 = vmatprep.subr.bf16.mxu0 0
    %424 = vmatpush1.bf16.xpose.msra.mxu0 0
    %425 = vmatprep.subr.bf16.mxu0 0
    %426 = vmatpush1.bf16.xpose.msra.mxu0 0
    %427 = vmatprep.subr.bf16.mxu0 0
    %428 = vmatpush1.bf16.xpose.msra.mxu0 0
    %429 = vmatprep.subr.bf16.mxu0 0
    %430 = vmatpush1.bf16.xpose.msra.mxu0 0
    %431 = vmatprep.subr.bf16.mxu0 0
    %432 = vmatpush1.bf16.xpose.msra.mxu0 0
    %433 = vmatprep.subr.bf16.mxu0 0
    %434 = vmatpush1.bf16.xpose.msra.mxu0 0
    %435 = vmatprep.subr.bf16.mxu0 0
    %436 = vmatpush1.bf16.xpose.msra.mxu0 0
    %437 = vmatprep.subr.bf16.mxu0 0
    %438 = vmatpush1.bf16.xpose.msra.mxu0 0
    %439 = vmatprep.subr.bf16.mxu0 0
    %440 = vmatpush1.bf16.xpose.msra.mxu0 0
    %441 = vmatprep.subr.bf16.mxu0 0
    %442 = vmatpush1.bf16.xpose.msra.mxu0 0
    %443 = vmatprep.mubr.bf16.mxu0 0
    %444 = vmatmul.mubr.bf16.gmra.mrb[0].mxu0 %v409
    %v445 = vpop.f32.mrb[0].mxu0
    %v446 = vadd.f32 0.0, %v445
    %v447 = vpop.f32.mrb[0].mxu0
    %v448 = vpop.f32.mrb[0].mxu0
    %v449 = vpop.f32.mrb[0].mxu0
    %450 = vdwg.mxu0
    %v451 = vmul.f32 %v446, 0.25
    %v452 = vsel %vm382, %v451, -inf
    %453 = vmax.xlane.f32.xlu0 %v452
    %v454 = vpop.xlane.xlu0 %453
    %v455 = vsub.f32 %v451, %v454
    %v456 = vmul.f32 %v455, 1.442695
    %v457 = vpow.pop %v456
    %v458 = vsel %vm382, %v457, 0.0
    %459 = vadd.xlane.f32.xlu0 %v458
    %v460 = vpop.xlane.xlu0 %459
    %v461 = vrcp.pop %v460
    %v462 = vmul.f32 %v457, %v461
    %v463 = vsel %vm406, 65537, 0
    %v464 = vlaneseq
    %v465 = vshrl.u32 %v464, 7
    %v466 = vsub.s32 0, %v465
    %v467 = vrot.slane %v463, %v466
    %468 = vrot.lane.b32.xlu0 %v467, 64
    %v469 = vpop.permute.xlu0 %468
    %vm470 = vcmp.ne.s16.totalorder %v469, 0
    %v471 = vsel %vm470, %v327, 0
    %v472 = vpack.c.bf16 %v462, %v462
    %474 = vrot.lane.b32.xlu0 %v471, 64
    %v475 = vpop.permute.xlu0 %474
    %v477 = vsel %vm382, %v472, 0
    %vm479 = vcmask 1043456
    %v481 = vsel %vm479, %v475, 0
    %483 = vmatprep.subr.bf16.mxu0 0
    %484 = vmatpush1.bf16.msra.mxu0 %v481
    %485 = vmatprep.subr.bf16.mxu0 0
    %486 = vmatpush1.bf16.msra.mxu0 0
    %487 = vmatprep.subr.bf16.mxu0 0
    %488 = vmatpush1.bf16.msra.mxu0 0
    %489 = vmatprep.subr.bf16.mxu0 0
    %490 = vmatpush1.bf16.msra.mxu0 0
    %491 = vmatprep.subr.bf16.mxu0 0
    %492 = vmatpush1.bf16.msra.mxu0 0
    %493 = vmatprep.subr.bf16.mxu0 0
    %494 = vmatpush1.bf16.msra.mxu0 0
    %495 = vmatprep.subr.bf16.mxu0 0
    %496 = vmatpush1.bf16.msra.mxu0 0
    %497 = vmatprep.subr.bf16.mxu0 0
    %498 = vmatpush1.bf16.msra.mxu0 0
    %499 = vmatprep.subr.bf16.mxu0 0
    %500 = vmatpush1.bf16.msra.mxu0 0
    %501 = vmatprep.subr.bf16.mxu0 0
    %502 = vmatpush1.bf16.msra.mxu0 0
    %503 = vmatprep.subr.bf16.mxu0 0
    %504 = vmatpush1.bf16.msra.mxu0 0
    %505 = vmatprep.subr.bf16.mxu0 0
    %506 = vmatpush1.bf16.msra.mxu0 0
    %507 = vmatprep.subr.bf16.mxu0 0
    %508 = vmatpush1.bf16.msra.mxu0 0
    %509 = vmatprep.subr.bf16.mxu0 0
    %510 = vmatpush1.bf16.msra.mxu0 0
    %511 = vmatprep.subr.bf16.mxu0 0
    %512 = vmatpush1.bf16.msra.mxu0 0
    %513 = vmatprep.subr.bf16.mxu0 0
    %514 = vmatpush1.bf16.msra.mxu0 0
    %515 = vmatprep.mubr.bf16.mxu0 0
    %516 = vmatmul.mubr.bf16.gmra.mrb[0].mxu0 %v477
    %v517 = vpop.f32.mrb[0].mxu0
    %v518 = vadd.f32 0.0, %v517
    %v519 = vpop.f32.mrb[0].mxu0
    %v520 = vpop.f32.mrb[0].mxu0
    %v521 = vpop.f32.mrb[0].mxu0
    %522 = vdwg.mxu0
    %524 = vrot.lane.b32.xlu0 %v402, 64
    %v525 = vpop.permute.xlu0 %524
    %v527 = vsel %vm382, %v403, 0
    %v530 = vsel %vm479, %v525, 0
    %532 = vmatprep.subr.bf16.mxu0 0
    %533 = vmatpush1.bf16.msra.mxu0 %v530
    %534 = vmatprep.subr.bf16.mxu0 0
    %535 = vmatpush1.bf16.msra.mxu0 0
    %536 = vmatprep.subr.bf16.mxu0 0
    %537 = vmatpush1.bf16.msra.mxu0 0
    %538 = vmatprep.subr.bf16.mxu0 0
    %539 = vmatpush1.bf16.msra.mxu0 0
    %540 = vmatprep.subr.bf16.mxu0 0
    %541 = vmatpush1.bf16.msra.mxu0 0
    %542 = vmatprep.subr.bf16.mxu0 0
    %543 = vmatpush1.bf16.msra.mxu0 0
    %544 = vmatprep.subr.bf16.mxu0 0
    %545 = vmatpush1.bf16.msra.mxu0 0
    %546 = vmatprep.subr.bf16.mxu0 0
    %547 = vmatpush1.bf16.msra.mxu0 0
    %548 = vmatprep.subr.bf16.mxu0 0
    %549 = vmatpush1.bf16.msra.mxu0 0
    %550 = vmatprep.subr.bf16.mxu0 0
    %551 = vmatpush1.bf16.msra.mxu0 0
    %552 = vmatprep.subr.bf16.mxu0 0
    %553 = vmatpush1.bf16.msra.mxu0 0
    %554 = vmatprep.subr.bf16.mxu0 0
    %555 = vmatpush1.bf16.msra.mxu0 0
    %556 = vmatprep.subr.bf16.mxu0 0
    %557 = vmatpush1.bf16.msra.mxu0 0
    %558 = vmatprep.subr.bf16.mxu0 0
    %559 = vmatpush1.bf16.msra.mxu0 0
    %560 = vmatprep.subr.bf16.mxu0 0
    %561 = vmatpush1.bf16.msra.mxu0 0
    %562 = vmatprep.subr.bf16.mxu0 0
    %563 = vmatpush1.bf16.msra.mxu0 0
    %564 = vmatprep.mubr.bf16.mxu0 0
    %565 = vmatmul.mubr.bf16.gmra.mrb[0].mxu0 %v527
    %v566 = vpop.f32.mrb[0].mxu0
    %v567 = vadd.f32 %v518, %v566
    %v568 = vpop.f32.mrb[0].mxu0
    %v569 = vpop.f32.mrb[0].mxu0
    %v570 = vpop.f32.mrb[0].mxu0
    %571 = vdwg.mxu0
    %v572 = vpack.c.bf16 %v567, %v567
    %v574 = vlaneseq
    %v575 = vshrl.u32 %v574, 7
    %v576 = vsub.s32 0, %v575
    %v577 = vrot.slane %v264, %v576
    %v583 = vunpack.c.l.b16 %v260
    %v584 = vunpack.c.l.b16 %v261
    %v585 = vunpack.c.l.b16 %v262
    %v586 = vunpack.c.l.b16 %v263
    %v587 = vpack.c.b16 %v584, %v583
    %v588 = vpack.c.b16 %v586, %v585
    %v592 = vsel %vm283, %v572, 0
    %594 = vmatprep.subr.bf16.mxu0 0
    %595 = vmatpush1.bf16.msra.mxu0 %v587
    %596 = vmatprep.subr.bf16.mxu0 0
    %597 = vmatpush1.bf16.msra.mxu0 %v588
    %598 = vmatprep.subr.bf16.mxu0 0
    %599 = vmatpush1.bf16.msra.mxu0 0
    %600 = vmatprep.subr.bf16.mxu0 0
    %601 = vmatpush1.bf16.msra.mxu0 0
    %602 = vmatprep.subr.bf16.mxu0 0
    %603 = vmatpush1.bf16.msra.mxu0 0
    %604 = vmatprep.subr.bf16.mxu0 0
    %605 = vmatpush1.bf16.msra.mxu0 0
    %606 = vmatprep.subr.bf16.mxu0 0
    %607 = vmatpush1.bf16.msra.mxu0 0
    %608 = vmatprep.subr.bf16.mxu0 0
    %609 = vmatpush1.bf16.msra.mxu0 0
    %610 = vmatprep.subr.bf16.mxu0 0
    %611 = vmatpush1.bf16.msra.mxu0 0
    %612 = vmatprep.subr.bf16.mxu0 0
    %613 = vmatpush1.bf16.msra.mxu0 0
    %614 = vmatprep.subr.bf16.mxu0 0
    %615 = vmatpush1.bf16.msra.mxu0 0
    %616 = vmatprep.subr.bf16.mxu0 0
    %617 = vmatpush1.bf16.msra.mxu0 0
    %618 = vmatprep.subr.bf16.mxu0 0
    %619 = vmatpush1.bf16.msra.mxu0 0
    %620 = vmatprep.subr.bf16.mxu0 0
    %621 = vmatpush1.bf16.msra.mxu0 0
    %622 = vmatprep.subr.bf16.mxu0 0
    %623 = vmatpush1.bf16.msra.mxu0 0
    %624 = vmatprep.subr.bf16.mxu0 0
    %625 = vmatpush1.bf16.msra.mxu0 0
    %626 = vmatprep.mubr.bf16.mxu0 0
    %627 = vmatmul.mubr.bf16.gmra.mrb[0].mxu0 %v592
    %v628 = vpop.f32.mrb[0].mxu0
    %v629 = vadd.f32 %v577, %v628
    %v630 = vpop.f32.mrb[0].mxu0
    %v631 = vpop.f32.mrb[0].mxu0
    %v632 = vpop.f32.mrb[0].mxu0
    %633 = vdwg.mxu0
    %v634 = vadd.f32 %v235, %v629
    %v635 = vsel %vm283, %v634, 0.0
    %636 = vadd.xlane.f32.xlu0 %v635
    %v637 = vpop.xlane.xlu0 %636
    %v638 = vrcp.pop 32.0
    %v639 = vmul.f32 %v637, %v638
    %v640 = vmul.f32 %v634, %v634
    %v641 = vsel %vm283, %v640, 0.0
    %642 = vadd.xlane.f32.xlu0 %v641
    %v643 = vpop.xlane.xlu0 %642
    %v644 = vmul.f32 %v643, %v638
    %v645 = vmul.f32 %v639, %v639
    %v646 = vsub.f32 %v644, %v645
    %v647 = vsub.f32 %v634, %v639
    %v648 = vadd.f32 %v646, 1e-05
    %v649 = vrsqrt.pop %v648
    %v650 = vmul.f32 %v647, %v649
    %v652 = vlaneseq
    %v653 = vshrl.u32 %v652, 7
    %v654 = vsub.s32 0, %v653
    %v655 = vrot.slane %v247, %v654
    %v657 = vmul.f32 %v650, %v655
    %v659 = vlaneseq
    %v660 = vshrl.u32 %v659, 7
    %v661 = vsub.s32 0, %v660
    %v662 = vrot.slane %v250, %v661
    %v664 = vadd.f32 %v657, %v662
    %v665 = vpack.c.bf16 %v664, %v664
    %s666 = scalar_lea.vmem [#allocation8], 16
    %v667 = vld [vmem:[%s666] sm:$0xf]
    %v668 = vld [vmem:[%s666 + $0x4] sm:$0xf]
    %v669 = vld [vmem:[%s666 + $0x8] sm:$0xf]
    %v670 = vld [vmem:[%s666 + $0xc] sm:$0xf]
    %s671 = scalar_lea.vmem [#allocation10], 1
    %v672 = vld [vmem:[%s671] sm:$0x1]
    %s673 = scalar_lea.vmem [#allocation11], 16
    %v674 = vld [vmem:[%s673] sm:$0xf]
    %v675 = vld [vmem:[%s673 + $0x4] sm:$0xf]
    %v676 = vld [vmem:[%s673 + $0x8] sm:$0xf]
    %v677 = vld [vmem:[%s673 + $0xc] sm:$0xf]
    %s678 = scalar_lea.vmem [#allocation13], 1
    %v679 = vld [vmem:[%s678] sm:$0x1]
    %v681 = vlaneseq
    %v682 = vshrl.u32 %v681, 7
    %v683 = vsub.s32 0, %v682
    %v684 = vrot.slane %v672, %v683
    %v690 = vunpack.c.l.b16 %v667
    %v691 = vunpack.c.l.b16 %v668
    %v692 = vunpack.c.l.b16 %v669
    %v693 = vunpack.c.l.b16 %v670
    %v694 = vpack.c.b16 %v691, %v690
    %v695 = vpack.c.b16 %v693, %v692
    %v699 = vsel %vm283, %v665, 0
    %701 = vmatprep.subr.bf16.mxu0 0
    %702 = vmatpush1.bf16.msra.mxu0 %v694
    %703 = vmatprep.subr.bf16.mxu0 0
    %704 = vmatpush1.bf16.msra.mxu0 %v695
    %705 = vmatprep.subr.bf16.mxu0 0
    %706 = vmatpush1.bf16.msra.mxu0 0
    %707 = vmatprep.subr.bf16.mxu0 0
    %708 = vmatpush1.bf16.msra.mxu0 0
    %709 = vmatprep.subr.bf16.mxu0 0
    %710 = vmatpush1.bf16.msra.mxu0 0
    %711 = vmatprep.subr.bf16.mxu0 0
    %712 = vmatpush1.bf16.msra.mxu0 0
    %713 = vmatprep.subr.bf16.mxu0 0
    %714 = vmatpush1.bf16.msra.mxu0 0
    %715 = vmatprep.subr.bf16.mxu0 0
    %716 = vmatpush1.bf16.msra.mxu0 0
    %717 = vmatprep.subr.bf16.mxu0 0
    %718 = vmatpush1.bf16.msra.mxu0 0
    %719 = vmatprep.subr.bf16.mxu0 0
    %720 = vmatpush1.bf16.msra.mxu0 0
    %721 = vmatprep.subr.bf16.mxu0 0
    %722 = vmatpush1.bf16.msra.mxu0 0
    %723 = vmatprep.subr.bf16.mxu0 0
    %724 = vmatpush1.bf16.msra.mxu0 0
    %725 = vmatprep.subr.bf16.mxu0 0
    %726 = vmatpush1.bf16.msra.mxu0 0
    %727 = vmatprep.subr.bf16.mxu0 0
    %728 = vmatpush1.bf16.msra.mxu0 0
    %729 = vmatprep.subr.bf16.mxu0 0
    %730 = vmatpush1.bf16.msra.mxu0 0
    %731 = vmatprep.subr.bf16.mxu0 0
    %732 = vmatpush1.bf16.msra.mxu0 0
    %733 = vmatprep.mubr.bf16.mxu0 0
    %734 = vmatmul.mubr.bf16.gmra.mrb[0].mxu0 %v699
    %v735 = vpop.f32.mrb[0].mxu0
    %v736 = vadd.f32 %v684, %v735
    %v737 = vpop.f32.mrb[0].mxu0
    %v738 = vpop.f32.mrb[0].mxu0
    %v739 = vpop.f32.mrb[0].mxu0
    %740 = vdwg.mxu0
    %741 = vrot.lane.b32.xlu0 %v694, 96
    %v742 = vpop.permute.xlu0 %741
    %743 = vrot.lane.b32.xlu0 %v695, 96
    %v744 = vpop.permute.xlu0 %743
    %747 = vrot.lane.b32.xlu0 %v684, 96
    %v748 = vpop.permute.xlu0 %747
    %v751 = vsel %vm283, %v246, 0
    %753 = vmatprep.subr.bf16.mxu0 0
    %754 = vmatpush1.bf16.msra.mxu0 %v742
    %755 = vmatprep.subr.bf16.mxu0 0
    %756 = vmatpush1.bf16.msra.mxu0 %v744
    %757 = vmatprep.subr.bf16.mxu0 0
    %758 = vmatpush1.bf16.msra.mxu0 0
    %759 = vmatprep.subr.bf16.mxu0 0
    %760 = vmatpush1.bf16.msra.mxu0 0
    %761 = vmatprep.subr.bf16.mxu0 0
    %762 = vmatpush1.bf16.msra.mxu0 0
    %763 = vmatprep.subr.bf16.mxu0 0
    %764 = vmatpush1.bf16.msra.mxu0 0
    %765 = vmatprep.subr.bf16.mxu0 0
    %766 = vmatpush1.bf16.msra.mxu0 0
    %767 = vmatprep.subr.bf16.mxu0 0
    %768 = vmatpush1.bf16.msra.mxu0 0
    %769 = vmatprep.subr.bf16.mxu0 0
    %770 = vmatpush1.bf16.msra.mxu0 0
    %771 = vmatprep.subr.bf16.mxu0 0
    %772 = vmatpush1.bf16.msra.mxu0 0
    %773 = vmatprep.subr.bf16.mxu0 0
    %774 = vmatpush1.bf16.msra.mxu0 0
    %775 = vmatprep.subr.bf16.mxu0 0
    %776 = vmatpush1.bf16.msra.mxu0 0
    %777 = vmatprep.subr.bf16.mxu0 0
    %778 = vmatpush1.bf16.msra.mxu0 0
    %779 = vmatprep.subr.bf16.mxu0 0
    %780 = vmatpush1.bf16.msra.mxu0 0
    %781 = vmatprep.subr.bf16.mxu0 0
    %782 = vmatpush1.bf16.msra.mxu0 0
    %783 = vmatprep.subr.bf16.mxu0 0
    %784 = vmatpush1.bf16.msra.mxu0 0
    %785 = vmatprep.mubr.bf16.mxu0 0
    %786 = vmatmul.mubr.bf16.gmra.mrb[0].mxu0 %v751
    %v787 = vpop.f32.mrb[0].mxu0
    %v788 = vadd.f32 %v748, %v787
    %v789 = vpop.f32.mrb[0].mxu0
    %v790 = vpop.f32.mrb[0].mxu0
    %v791 = vpop.f32.mrb[0].mxu0
    %792 = vdwg.mxu0
    %v793 = vpack.c.bf16 %v736, %v736
    %v794 = vpack.c.bf16 %v788, %v788
    %v795 = vsel %vm330, %v793, 0
    %v797 = vsel %vm283, %v795, 0
    %v800 = vsel %vm283, %v794, 0
    %802 = vmatprep.subr.bf16.mxu0 0
    %803 = vmatpush1.bf16.xpose.msra.mxu0 %v800
    %804 = vmatprep.subr.bf16.mxu0 0
    %805 = vmatpush1.bf16.xpose.msra.mxu0 0
    %806 = vmatprep.subr.bf16.mxu0 0
    %807 = vmatpush1.bf16.xpose.msra.mxu0 0
    %808 = vmatprep.subr.bf16.mxu0 0
    %809 = vmatpush1.bf16.xpose.msra.mxu0 0
    %810 = vmatprep.subr.bf16.mxu0 0
    %811 = vmatpush1.bf16.xpose.msra.mxu0 0
    %812 = vmatprep.subr.bf16.mxu0 0
    %813 = vmatpush1.bf16.xpose.msra.mxu0 0
    %814 = vmatprep.subr.bf16.mxu0 0
    %815 = vmatpush1.bf16.xpose.msra.mxu0 0
    %816 = vmatprep.subr.bf16.mxu0 0
    %817 = vmatpush1.bf16.xpose.msra.mxu0 0
    %818 = vmatprep.subr.bf16.mxu0 0
    %819 = vmatpush1.bf16.xpose.msra.mxu0 0
    %820 = vmatprep.subr.bf16.mxu0 0
    %821 = vmatpush1.bf16.xpose.msra.mxu0 0
    %822 = vmatprep.subr.bf16.mxu0 0
    %823 = vmatpush1.bf16.xpose.msra.mxu0 0
    %824 = vmatprep.subr.bf16.mxu0 0
    %825 = vmatpush1.bf16.xpose.msra.mxu0 0
    %826 = vmatprep.subr.bf16.mxu0 0
    %827 = vmatpush1.bf16.xpose.msra.mxu0 0
    %828 = vmatprep.subr.bf16.mxu0 0
    %829 = vmatpush1.bf16.xpose.msra.mxu0 0
    %830 = vmatprep.subr.bf16.mxu0 0
    %831 = vmatpush1.bf16.xpose.msra.mxu0 0
    %832 = vmatprep.subr.bf16.mxu0 0
    %833 = vmatpush1.bf16.xpose.msra.mxu0 0
    %834 = vmatprep.mubr.bf16.mxu0 0
    %835 = vmatmul.mubr.bf16.gmra.mrb[0].mxu0 %v797
    %v836 = vpop.f32.mrb[0].mxu0
    %v837 = vadd.f32 0.0, %v836
    %v838 = vpop.f32.mrb[0].mxu0
    %v839 = vpop.f32.mrb[0].mxu0
    %v840 = vpop.f32.mrb[0].mxu0
    %841 = vdwg.mxu0
    %v842 = vmul.f32 %v837, 0.25
    %v843 = vsel %vm382, %v842, -inf
    %844 = vmax.xlane.f32.xlu0 %v843
    %v845 = vpop.xlane.xlu0 %844
    %v846 = vsub.f32 %v842, %v845
    %v847 = vmul.f32 %v846, 1.442695
    %v848 = vpow.pop %v847
    %v849 = vsel %vm382, %v848, 0.0
    %850 = vadd.xlane.f32.xlu0 %v849
    %v851 = vpop.xlane.xlu0 %850
    %v852 = vrcp.pop %v851
    %v853 = vmul.f32 %v848, %v852
    %854 = vrot.lane.b32.xlu0 %v398, 32
    %v855 = vpop.permute.xlu0 %854
    %vm856 = vcmp.ne.s16.totalorder %v855, 0
    %v857 = vsel %vm856, %v794, 0
    %v858 = vpack.c.bf16 %v853, %v853
    %v859 = vsel %vm406, %v793, 0
    %v861 = vsel %vm283, %v859, 0
    %863 = vmatprep.subr.bf16.mxu0 0
    %864 = vmatpush1.bf16.xpose.msra.mxu0 %v800
    %865 = vmatprep.subr.bf16.mxu0 0
    %866 = vmatpush1.bf16.xpose.msra.mxu0 0
    %867 = vmatprep.subr.bf16.mxu0 0
    %868 = vmatpush1.bf16.xpose.msra.mxu0 0
    %869 = vmatprep.subr.bf16.mxu0 0
    %870 = vmatpush1.bf16.xpose.msra.mxu0 0
    %871 = vmatprep.subr.bf16.mxu0 0
    %872 = vmatpush1.bf16.xpose.msra.mxu0 0
    %873 = vmatprep.subr.bf16.mxu0 0
    %874 = vmatpush1.bf16.xpose.msra.mxu0 0
    %875 = vmatprep.subr.bf16.mxu0 0
    %876 = vmatpush1.bf16.xpose.msra.mxu0 0
    %877 = vmatprep.subr.bf16.mxu0 0
    %878 = vmatpush1.bf16.xpose.msra.mxu0 0
    %879 = vmatprep.subr.bf16.mxu0 0
    %880 = vmatpush1.bf16.xpose.msra.mxu0 0
    %881 = vmatprep.subr.bf16.mxu0 0
    %882 = vmatpush1.bf16.xpose.msra.mxu0 0
    %883 = vmatprep.subr.bf16.mxu0 0
    %884 = vmatpush1.bf16.xpose.msra.mxu0 0
    %885 = vmatprep.subr.bf16.mxu0 0
    %886 = vmatpush1.bf16.xpose.msra.mxu0 0
    %887 = vmatprep.subr.bf16.mxu0 0
    %888 = vmatpush1.bf16.xpose.msra.mxu0 0
    %889 = vmatprep.subr.bf16.mxu0 0
    %890 = vmatpush1.bf16.xpose.msra.mxu0 0
    %891 = vmatprep.subr.bf16.mxu0 0
    %892 = vmatpush1.bf16.xpose.msra.mxu0 0
    %893 = vmatprep.subr.bf16.mxu0 0
    %894 = vmatpush1.bf16.xpose.msra.mxu0 0
    %895 = vmatprep.mubr.bf16.mxu0 0
    %896 = vmatmul.mubr.bf16.gmra.mrb[0].mxu0 %v861
    %v897 = vpop.f32.mrb[0].mxu0
    %v898 = vadd.f32 0.0, %v897
    %v899 = vpop.f32.mrb[0].mxu0
    %v900 = vpop.f32.mrb[0].mxu0
    %v901 = vpop.f32.mrb[0].mxu0
    %902 = vdwg.mxu0
    %v903 = vmul.f32 %v898, 0.25
    %v904 = vsel %vm382, %v903, -inf
    %905 = vmax.xlane.f32.xlu0 %v904
    %v906 = vpop.xlane.xlu0 %905
    %v907 = vsub.f32 %v903, %v906
    %v908 = vmul.f32 %v907, 1.442695
    %v909 = vpow.pop %v908
    %v910 = vsel %vm382, %v909, 0.0
    %911 = vadd.xlane.f32.xlu0 %v910
    %v912 = vpop.xlane.xlu0 %911
    %v913 = vrcp.pop %v912
    %v914 = vmul.f32 %v909, %v913
    %915 = vrot.lane.b32.xlu0 %v467, 32
    %v916 = vpop.permute.xlu0 %915
    %vm917 = vcmp.ne.s16.totalorder %v916, 0
    %v918 = vsel %vm917, %v794, 0
    %v919 = vpack.c.bf16 %v914, %v914
    %921 = vrot.lane.b32.xlu0 %v918, 96
    %v922 = vpop.permute.xlu0 %921
    %v924 = vsel %vm382, %v919, 0
    %v927 = vsel %vm479, %v922, 0
    %929 = vmatprep.subr.bf16.mxu0 0
    %930 = vmatpush1.bf16.msra.mxu0 %v927
    %931 = vmatprep.subr.bf16.mxu0 0
    %932 = vmatpush1.bf16.msra.mxu0 0
    %933 = vmatprep.subr.bf16.mxu0 0
    %934 = vmatpush1.bf16.msra.mxu0 0
    %935 = vmatprep.subr.bf16.mxu0 0
    %936 = vmatpush1.bf16.msra.mxu0 0
    %937 = vmatprep.subr.bf16.mxu0 0
    %938 = vmatpush1.bf16.msra.mxu0 0
    %939 = vmatprep.subr.bf16.mxu0 0
    %940 = vmatpush1.bf16.msra.mxu0 0
    %941 = vmatprep.subr.bf16.mxu0 0
    %942 = vmatpush1.bf16.msra.mxu0 0
    %943 = vmatprep.subr.bf16.mxu0 0
    %944 = vmatpush1.bf16.msra.mxu0 0
    %945 = vmatprep.subr.bf16.mxu0 0
    %946 = vmatpush1.bf16.msra.mxu0 0
    %947 = vmatprep.subr.bf16.mxu0 0
    %948 = vmatpush1.bf16.msra.mxu0 0
    %949 = vmatprep.subr.bf16.mxu0 0
    %950 = vmatpush1.bf16.msra.mxu0 0
    %951 = vmatprep.subr.bf16.mxu0 0
    %952 = vmatpush1.bf16.msra.mxu0 0
    %953 = vmatprep.subr.bf16.mxu0 0
    %954 = vmatpush1.bf16.msra.mxu0 0
    %955 = vmatprep.subr.bf16.mxu0 0
    %956 = vmatpush1.bf16.msra.mxu0 0
    %957 = vmatprep.subr.bf16.mxu0 0
    %958 = vmatpush1.bf16.msra.mxu0 0
    %959 = vmatprep.subr.bf16.mxu0 0
    %960 = vmatpush1.bf16.msra.mxu0 0
    %961 = vmatprep.mubr.bf16.mxu0 0
    %962 = vmatmul.mubr.bf16.gmra.mrb[0].mxu0 %v924
    %v963 = vpop.f32.mrb[0].mxu0
    %v964 = vadd.f32 0.0, %v963
    %v965 = vpop.f32.mrb[0].mxu0
    %v966 = vpop.f32.mrb[0].mxu0
    %v967 = vpop.f32.mrb[0].mxu0
    %968 = vdwg.mxu0
    %970 = vrot.lane.b32.xlu0 %v857, 96
    %v971 = vpop.permute.xlu0 %970
    %v973 = vsel %vm382, %v858, 0
    %v976 = vsel %vm479, %v971, 0
    %978 = vmatprep.subr.bf16.mxu0 0
    %979 = vmatpush1.bf16.msra.mxu0 %v976
    %980 = vmatprep.subr.bf16.mxu0 0
    %981 = vmatpush1.bf16.msra.mxu0 0
    %982 = vmatprep.subr.bf16.mxu0 0
    %983 = vmatpush1.bf16.msra.mxu0 0
    %984 = vmatprep.subr.bf16.mxu0 0
    %985 = vmatpush1.bf16.msra.mxu0 0
    %986 = vmatprep.subr.bf16.mxu0 0
    %987 = vmatpush1.bf16.msra.mxu0 0
    %988 = vmatprep.subr.bf16.mxu0 0
    %989 = vmatpush1.bf16.msra.mxu0 0
    %990 = vmatprep.subr.bf16.mxu0 0
    %991 = vmatpush1.bf16.msra.mxu0 0
    %992 = vmatprep.subr.bf16.mxu0 0
    %993 = vmatpush1.bf16.msra.mxu0 0
    %994 = vmatprep.subr.bf16.mxu0 0
    %995 = vmatpush1.bf16.msra.mxu0 0
    %996 = vmatprep.subr.bf16.mxu0 0
    %997 = vmatpush1.bf16.msra.mxu0 0
    %998 = vmatprep.subr.bf16.mxu0 0
    %999 = vmatpush1.bf16.msra.mxu0 0
    %1000 = vmatprep.subr.bf16.mxu0 0
    %1001 = vmatpush1.bf16.msra.mxu0 0
    %1002 = vmatprep.subr.bf16.mxu0 0
    %1003 = vmatpush1.bf16.msra.mxu0 0
    %1004 = vmatprep.subr.bf16.mxu0 0
    %1005 = vmatpush1.bf16.msra.mxu0 0
    %1006 = vmatprep.subr.bf16.mxu0 0
    %1007 = vmatpush1.bf16.msra.mxu0 0
    %1008 = vmatprep.subr.bf16.mxu0 0
    %1009 = vmatpush1.bf16.msra.mxu0 0
    %1010 = vmatprep.mubr.bf16.mxu0 0
    %1011 = vmatmul.mubr.bf16.gmra.mrb[0].mxu0 %v973
    %v1012 = vpop.f32.mrb[0].mxu0
    %v1013 = vadd.f32 %v964, %v1012
    %v1014 = vpop.f32.mrb[0].mxu0
    %v1015 = vpop.f32.mrb[0].mxu0
    %v1016 = vpop.f32.mrb[0].mxu0
    %1017 = vdwg.mxu0
    %v1018 = vpack.c.bf16 %v1013, %v1013
    %v1020 = vlaneseq
    %v1021 = vshrl.u32 %v1020, 7
    %v1022 = vsub.s32 0, %v1021
    %v1023 = vrot.slane %v679, %v1022
    %v1029 = vunpack.c.l.b16 %v674
    %v1030 = vunpack.c.l.b16 %v675
    %v1031 = vunpack.c.l.b16 %v676
    %v1032 = vunpack.c.l.b16 %v677
    %v1033 = vpack.c.b16 %v1030, %v1029
    %v1034 = vpack.c.b16 %v1032, %v1031
    %v1038 = vsel %vm283, %v1018, 0
    %1040 = vmatprep.subr.bf16.mxu0 0
    %1041 = vmatpush1.bf16.msra.mxu0 %v1033
    %1042 = vmatprep.subr.bf16.mxu0 0
    %1043 = vmatpush1.bf16.msra.mxu0 %v1034
    %1044 = vmatprep.subr.bf16.mxu0 0
    %1045 = vmatpush1.bf16.msra.mxu0 0
    %1046 = vmatprep.subr.bf16.mxu0 0
    %1047 = vmatpush1.bf16.msra.mxu0 0
    %1048 = vmatprep.subr.bf16.mxu0 0
    %1049 = vmatpush1.bf16.msra.mxu0 0
    %1050 = vmatprep.subr.bf16.mxu0 0
    %1051 = vmatpush1.bf16.msra.mxu0 0
    %1052 = vmatprep.subr.bf16.mxu0 0
    %1053 = vmatpush1.bf16.msra.mxu0 0
    %1054 = vmatprep.subr.bf16.mxu0 0
    %1055 = vmatpush1.bf16.msra.mxu0 0
    %1056 = vmatprep.subr.bf16.mxu0 0
    %1057 = vmatpush1.bf16.msra.mxu0 0
    %1058 = vmatprep.subr.bf16.mxu0 0
    %1059 = vmatpush1.bf16.msra.mxu0 0
    %1060 = vmatprep.subr.bf16.mxu0 0
    %1061 = vmatpush1.bf16.msra.mxu0 0
    %1062 = vmatprep.subr.bf16.mxu0 0
    %1063 = vmatpush1.bf16.msra.mxu0 0
    %1064 = vmatprep.subr.bf16.mxu0 0
    %1065 = vmatpush1.bf16.msra.mxu0 0
    %1066 = vmatprep.subr.bf16.mxu0 0
    %1067 = vmatpush1.bf16.msra.mxu0 0
    %1068 = vmatprep.subr.bf16.mxu0 0
    %1069 = vmatpush1.bf16.msra.mxu0 0
    %1070 = vmatprep.subr.bf16.mxu0 0
    %1071 = vmatpush1.bf16.msra.mxu0 0
    %1072 = vmatprep.mubr.bf16.mxu0 0
    %1073 = vmatmul.mubr.bf16.gmra.mrb[0].mxu0 %v1038
    %v1074 = vpop.f32.mrb[0].mxu0
    %v1075 = vadd.f32 %v1023, %v1074
    %v1076 = vpop.f32.mrb[0].mxu0
    %v1077 = vpop.f32.mrb[0].mxu0
    %v1078 = vpop.f32.mrb[0].mxu0
    %1079 = vdwg.mxu0
    %v1080 = vadd.f32 %v664, %v1075
    %v1081 = vsel %vm283, %v1080, 0.0
    %1082 = vadd.xlane.f32.xlu0 %v1081
    %v1083 = vpop.xlane.xlu0 %1082
    %v1084 = vmul.f32 %v1083, %v638
    %v1085 = vmul.f32 %v1080, %v1080
    %v1086 = vsel %vm283, %v1085, 0.0
    %1087 = vadd.xlane.f32.xlu0 %v1086
    %v1088 = vpop.xlane.xlu0 %1087
    %v1089 = vmul.f32 %v1088, %v638
    %v1090 = vmul.f32 %v1084, %v1084
    %v1091 = vsub.f32 %v1089, %v1090
    %v1092 = vsub.f32 %v1080, %v1084
    %v1093 = vadd.f32 %v1091, 1e-05
    %v1094 = vrsqrt.pop %v1093
    %v1095 = vmul.f32 %v1092, %v1094
    %v1097 = vlaneseq
    %v1098 = vshrl.u32 %v1097, 7
    %v1099 = vsub.s32 0, %v1098
    %v1100 = vrot.slane %v248, %v1099
    %v1102 = vmul.f32 %v1095, %v1100
    %v1104 = vlaneseq
    %v1105 = vshrl.u32 %v1104, 7
    %v1106 = vsub.s32 0, %v1105
    %v1107 = vrot.slane %v251, %v1106
    %v1109 = vadd.f32 %v1102, %v1107
    %v1110 = vpack.c.bf16 %v1109, %v1109
    %v1111 = vld [vmem:[#allocation14] sm:$0xf]
    %v1112 = vld [vmem:[#allocation14 + $0x4] sm:$0xf]
    %v1113 = vld [vmem:[#allocation14 + $0x8] sm:$0xf]
    %v1114 = vld [vmem:[#allocation14 + $0xc] sm:$0xf]
    %v1115 = vld [vmem:[#allocation16] sm:$0x1]
    %v1116 = vld [vmem:[#allocation17] sm:$0xf]
    %v1117 = vld [vmem:[#allocation17 + $0x4] sm:$0xf]
    %v1118 = vld [vmem:[#allocation17 + $0x8] sm:$0xf]
    %v1119 = vld [vmem:[#allocation17 + $0xc] sm:$0xf]
    %v1120 = vld [vmem:[#allocation17 + $0x10] sm:$0xf]
    %v1121 = vld [vmem:[#allocation17 + $0x14] sm:$0xf]
    %v1122 = vld [vmem:[#allocation17 + $0x18] sm:$0xf]
    %v1123 = vld [vmem:[#allocation17 + $0x1c] sm:$0xf]
    %v1124 = vld [vmem:[#allocation19] sm:$0x1]
    %v1126 = vlaneseq
    %v1127 = vshrl.u32 %v1126, 7
    %v1128 = vsub.s32 0, %v1127
    %v1129 = vrot.slane %v1115, %v1128
    %v1135 = vunpack.c.l.b16 %v1111
    %v1136 = vunpack.c.l.b16 %v1112
    %v1137 = vunpack.c.l.b16 %v1113
    %v1138 = vunpack.c.l.b16 %v1114
    %v1139 = vpack.c.b16 %v1136, %v1135
    %v1140 = vpack.c.b16 %v1138, %v1137
    %v1144 = vsel %vm283, %v1110, 0
    %1146 = vmatprep.subr.bf16.mxu0 0
    %1147 = vmatpush1.bf16.msra.mxu0 %v1139
    %1148 = vmatprep.subr.bf16.mxu0 0
    %1149 = vmatpush1.bf16.msra.mxu0 %v1140
    %1150 = vmatprep.subr.bf16.mxu0 0
    %1151 = vmatpush1.bf16.msra.mxu0 0
    %1152 = vmatprep.subr.bf16.mxu0 0
    %1153 = vmatpush1.bf16.msra.mxu0 0
    %1154 = vmatprep.subr.bf16.mxu0 0
    %1155 = vmatpush1.bf16.msra.mxu0 0
    %1156 = vmatprep.subr.bf16.mxu0 0
    %1157 = vmatpush1.bf16.msra.mxu0 0
    %1158 = vmatprep.subr.bf16.mxu0 0
    %1159 = vmatpush1.bf16.msra.mxu0 0
    %1160 = vmatprep.subr.bf16.mxu0 0
    %1161 = vmatpush1.bf16.msra.mxu0 0
    %1162 = vmatprep.subr.bf16.mxu0 0
    %1163 = vmatpush1.bf16.msra.mxu0 0
    %1164 = vmatprep.subr.bf16.mxu0 0
    %1165 = vmatpush1.bf16.msra.mxu0 0
    %1166 = vmatprep.subr.bf16.mxu0 0
    %1167 = vmatpush1.bf16.msra.mxu0 0
    %1168 = vmatprep.subr.bf16.mxu0 0
    %1169 = vmatpush1.bf16.msra.mxu0 0
    %1170 = vmatprep.subr.bf16.mxu0 0
    %1171 = vmatpush1.bf16.msra.mxu0 0
    %1172 = vmatprep.subr.bf16.mxu0 0
    %1173 = vmatpush1.bf16.msra.mxu0 0
    %1174 = vmatprep.subr.bf16.mxu0 0
    %1175 = vmatpush1.bf16.msra.mxu0 0
    %1176 = vmatprep.subr.bf16.mxu0 0
    %1177 = vmatpush1.bf16.msra.mxu0 0
    %1178 = vmatprep.mubr.bf16.mxu0 0
    %1179 = vmatmul.mubr.bf16.gmra.mrb[0].mxu0 %v1144
    %v1180 = vpop.f32.mrb[0].mxu0
    %v1181 = vadd.f32 %v1129, %v1180
    %v1182 = vpop.f32.mrb[0].mxu0
    %v1183 = vpop.f32.mrb[0].mxu0
    %v1184 = vpop.f32.mrb[0].mxu0
    %1185 = vdwg.mxu0
    %v1186 = vmax.f32 %v1181, 0.0
    %v1187 = vpack.c.bf16 %v1186, %v1186
    %v1189 = vlaneseq
    %v1190 = vshrl.u32 %v1189, 7
    %v1191 = vsub.s32 0, %v1190
    %v1192 = vrot.slane %v1124, %v1191
    %v1202 = vunpack.c.l.b16 %v1116
    %v1203 = vunpack.c.l.b16 %v1117
    %v1204 = vunpack.c.l.b16 %v1118
    %v1205 = vunpack.c.l.b16 %v1119
    %v1206 = vunpack.c.l.b16 %v1120
    %v1207 = vunpack.c.l.b16 %v1121
    %v1208 = vunpack.c.l.b16 %v1122
    %v1209 = vunpack.c.l.b16 %v1123
    %v1210 = vpack.c.b16 %v1203, %v1202
    %v1211 = vpack.c.b16 %v1205, %v1204
    %v1212 = vpack.c.b16 %v1207, %v1206
    %v1213 = vpack.c.b16 %v1209, %v1208
    %vm1218 = vcmask 523264
    %v1220 = vsel %vm1218, %v1187, 0
    %1222 = vmatprep.subr.bf16.mxu0 0
    %1223 = vmatpush1.bf16.msra.mxu0 %v1210
    %1224 = vmatprep.subr.bf16.mxu0 0
    %1225 = vmatpush1.bf16.msra.mxu0 %v1211
    %1226 = vmatprep.subr.bf16.mxu0 0
    %1227 = vmatpush1.bf16.msra.mxu0 %v1212
    %1228 = vmatprep.subr.bf16.mxu0 0
    %1229 = vmatpush1.bf16.msra.mxu0 %v1213
    %1230 = vmatprep.subr.bf16.mxu0 0
    %1231 = vmatpush1.bf16.msra.mxu0 0
    %1232 = vmatprep.subr.bf16.mxu0 0
    %1233 = vmatpush1.bf16.msra.mxu0 0
    %1234 = vmatprep.subr.bf16.mxu0 0
    %1235 = vmatpush1.bf16.msra.mxu0 0
    %1236 = vmatprep.subr.bf16.mxu0 0
    %1237 = vmatpush1.bf16.msra.mxu0 0
    %1238 = vmatprep.subr.bf16.mxu0 0
    %1239 = vmatpush1.bf16.msra.mxu0 0
    %1240 = vmatprep.subr.bf16.mxu0 0
    %1241 = vmatpush1.bf16.msra.mxu0 0
    %1242 = vmatprep.subr.bf16.mxu0 0
    %1243 = vmatpush1.bf16.msra.mxu0 0
    %1244 = vmatprep.subr.bf16.mxu0 0
    %1245 = vmatpush1.bf16.msra.mxu0 0
    %1246 = vmatprep.subr.bf16.mxu0 0
    %1247 = vmatpush1.bf16.msra.mxu0 0
    %1248 = vmatprep.subr.bf16.mxu0 0
    %1249 = vmatpush1.bf16.msra.mxu0 0
    %1250 = vmatprep.subr.bf16.mxu0 0
    %1251 = vmatpush1.bf16.msra.mxu0 0
    %1252 = vmatprep.subr.bf16.mxu0 0
    %1253 = vmatpush1.bf16.msra.mxu0 0
    %1254 = vmatprep.mubr.bf16.mxu0 0
    %1255 = vmatmul.mubr.bf16.gmra.mrb[0].mxu0 %v1220
    %v1256 = vpop.f32.mrb[0].mxu0
    %v1257 = vadd.f32 %v1192, %v1256
    %v1258 = vpop.f32.mrb[0].mxu0
    %v1259 = vpop.f32.mrb[0].mxu0
    %v1260 = vpop.f32.mrb[0].mxu0
    %1261 = vdwg.mxu0
    %v1262 = vadd.f32 %v1109, %v1257
    %v1263 = vsel %vm283, %v1262, 0.0
    %1264 = vadd.xlane.f32.xlu0 %v1263
    %v1265 = vpop.xlane.xlu0 %1264
    %v1266 = vmul.f32 %v1265, %v638
    %v1267 = vmul.f32 %v1262, %v1262
    %v1268 = vsel %vm283, %v1267, 0.0
    %1269 = vadd.xlane.f32.xlu0 %v1268
    %v1270 = vpop.xlane.xlu0 %1269
    %v1271 = vmul.f32 %v1270, %v638
    %v1272 = vmul.f32 %v1266, %v1266
    %v1273 = vsub.f32 %v1271, %v1272
    %v1274 = vsub.f32 %v1262, %v1266
    %v1275 = vadd.f32 %v1273, 1e-05
    %v1276 = vrsqrt.pop %v1275
    %v1277 = vmul.f32 %v1274, %v1276
    %v1279 = vlaneseq
    %v1280 = vshrl.u32 %v1279, 7
    %v1281 = vsub.s32 0, %v1280
    %v1282 = vrot.slane %v249, %v1281
    %v1284 = vmul.f32 %v1277, %v1282
    %v1286 = vlaneseq
    %v1287 = vshrl.u32 %v1286, 7
    %v1288 = vsub.s32 0, %v1287
    %v1289 = vrot.slane %v252, %v1288
    %v1291 = vadd.f32 %v1284, %v1289
    %s1292 = scalar_lea.vmem [#allocation20], 4
    %v1293 = vld [vmem:[%s1292] sm:$0x1]
    %v1294 = vld [vmem:[%s1292 + $0x1] sm:$0x1]
    %v1295 = vld [vmem:[%s1292 + $0x2] sm:$0x1]
    %s1296 = scalar_lea.vmem [#allocation22], 4
    %v1297 = vld [vmem:[%s1296] sm:$0x1]
    %v1298 = vld [vmem:[%s1296 + $0x1] sm:$0x1]
    %v1299 = vld [vmem:[%s1296 + $0x2] sm:$0x1]
    %v1300 = vadd.f32 %v1291, %v237
    %v1301 = vpack.c.bf16 %v1300, %v1300
    %s1302 = scalar_lea.vmem [#allocation8], 48
    %v1303 = vld [vmem:[%s1302] sm:$0xf]
    %v1304 = vld [vmem:[%s1302 + $0x4] sm:$0xf]
    %v1305 = vld [vmem:[%s1302 + $0x8] sm:$0xf]
    %v1306 = vld [vmem:[%s1302 + $0xc] sm:$0xf]
    %s1307 = scalar_lea.vmem [#allocation10], 3
    %v1308 = vld [vmem:[%s1307] sm:$0x1]
    %s1309 = scalar_lea.vmem [#allocation11], 48
    %v1310 = vld [vmem:[%s1309] sm:$0xf]
    %v1311 = vld [vmem:[%s1309 + $0x4] sm:$0xf]
    %v1312 = vld [vmem:[%s1309 + $0x8] sm:$0xf]
    %v1313 = vld [vmem:[%s1309 + $0xc] sm:$0xf]
    %s1314 = scalar_lea.vmem [#allocation13], 3
    %v1315 = vld [vmem:[%s1314] sm:$0x1]
    %v1317 = vlaneseq
    %v1318 = vshrl.u32 %v1317, 7
    %v1319 = vsub.s32 0, %v1318
    %v1320 = vrot.slane %v1308, %v1319
    %v1326 = vunpack.c.l.b16 %v1303
    %v1327 = vunpack.c.l.b16 %v1304
    %v1328 = vunpack.c.l.b16 %v1305
    %v1329 = vunpack.c.l.b16 %v1306
    %v1330 = vpack.c.b16 %v1327, %v1326
    %v1331 = vpack.c.b16 %v1329, %v1328
    %v1335 = vsel %vm283, %v1301, 0
    %1337 = vmatprep.subr.bf16.mxu0 0
    %1338 = vmatpush1.bf16.msra.mxu0 %v1330
    %1339 = vmatprep.subr.bf16.mxu0 0
    %1340 = vmatpush1.bf16.msra.mxu0 %v1331
    %1341 = vmatprep.subr.bf16.mxu0 0
    %1342 = vmatpush1.bf16.msra.mxu0 0
    %1343 = vmatprep.subr.bf16.mxu0 0
    %1344 = vmatpush1.bf16.msra.mxu0 0
    %1345 = vmatprep.subr.bf16.mxu0 0
    %1346 = vmatpush1.bf16.msra.mxu0 0
    %1347 = vmatprep.subr.bf16.mxu0 0
    %1348 = vmatpush1.bf16.msra.mxu0 0
    %1349 = vmatprep.subr.bf16.mxu0 0
    %1350 = vmatpush1.bf16.msra.mxu0 0
    %1351 = vmatprep.subr.bf16.mxu0 0
    %1352 = vmatpush1.bf16.msra.mxu0 0
    %1353 = vmatprep.subr.bf16.mxu0 0
    %1354 = vmatpush1.bf16.msra.mxu0 0
    %1355 = vmatprep.subr.bf16.mxu0 0
    %1356 = vmatpush1.bf16.msra.mxu0 0
    %1357 = vmatprep.subr.bf16.mxu0 0
    %1358 = vmatpush1.bf16.msra.mxu0 0
    %1359 = vmatprep.subr.bf16.mxu0 0
    %1360 = vmatpush1.bf16.msra.mxu0 0
    %1361 = vmatprep.subr.bf16.mxu0 0
    %1362 = vmatpush1.bf16.msra.mxu0 0
    %1363 = vmatprep.subr.bf16.mxu0 0
    %1364 = vmatpush1.bf16.msra.mxu0 0
    %1365 = vmatprep.subr.bf16.mxu0 0
    %1366 = vmatpush1.bf16.msra.mxu0 0
    %1367 = vmatprep.subr.bf16.mxu0 0
    %1368 = vmatpush1.bf16.msra.mxu0 0
    %1369 = vmatprep.mubr.bf16.mxu0 0
    %1370 = vmatmul.mubr.bf16.gmra.mrb[0].mxu0 %v1335
    %v1371 = vpop.f32.mrb[0].mxu0
    %v1372 = vadd.f32 %v1320, %v1371
    %v1373 = vpop.f32.mrb[0].mxu0
    %v1374 = vpop.f32.mrb[0].mxu0
    %v1375 = vpop.f32.mrb[0].mxu0
    %1376 = vdwg.mxu0
    %v1377 = vpack.c.bf16 %v1372, %v1372
    %v1378 = vsel %vm330, %v1377, 0
    %1380 = vrot.lane.b32.xlu0 %v1377, 96
    %v1381 = vpop.permute.xlu0 %1380
    %v1383 = vsel %vm283, %v1378, 0
    %v1386 = vsel %vm283, %v1381, 0
    %1388 = vmatprep.subr.bf16.mxu0 0
    %1389 = vmatpush1.bf16.xpose.msra.mxu0 %v1386
    %1390 = vmatprep.subr.bf16.mxu0 0
    %1391 = vmatpush1.bf16.xpose.msra.mxu0 0
    %1392 = vmatprep.subr.bf16.mxu0 0
    %1393 = vmatpush1.bf16.xpose.msra.mxu0 0
    %1394 = vmatprep.subr.bf16.mxu0 0
    %1395 = vmatpush1.bf16.xpose.msra.mxu0 0
    %1396 = vmatprep.subr.bf16.mxu0 0
    %1397 = vmatpush1.bf16.xpose.msra.mxu0 0
    %1398 = vmatprep.subr.bf16.mxu0 0
    %1399 = vmatpush1.bf16.xpose.msra.mxu0 0
    %1400 = vmatprep.subr.bf16.mxu0 0
    %1401 = vmatpush1.bf16.xpose.msra.mxu0 0
    %1402 = vmatprep.subr.bf16.mxu0 0
    %1403 = vmatpush1.bf16.xpose.msra.mxu0 0
    %1404 = vmatprep.subr.bf16.mxu0 0
    %1405 = vmatpush1.bf16.xpose.msra.mxu0 0
    %1406 = vmatprep.subr.bf16.mxu0 0
    %1407 = vmatpush1.bf16.xpose.msra.mxu0 0
    %1408 = vmatprep.subr.bf16.mxu0 0
    %1409 = vmatpush1.bf16.xpose.msra.mxu0 0
    %1410 = vmatprep.subr.bf16.mxu0 0
    %1411 = vmatpush1.bf16.xpose.msra.mxu0 0
    %1412 = vmatprep.subr.bf16.mxu0 0
    %1413 = vmatpush1.bf16.xpose.msra.mxu0 0
    %1414 = vmatprep.subr.bf16.mxu0 0
    %1415 = vmatpush1.bf16.xpose.msra.mxu0 0
    %1416 = vmatprep.subr.bf16.mxu0 0
    %1417 = vmatpush1.bf16.xpose.msra.mxu0 0
    %1418 = vmatprep.subr.bf16.mxu0 0
    %1419 = vmatpush1.bf16.xpose.msra.mxu0 0
    %1420 = vmatprep.mubr.bf16.mxu0 0
    %1421 = vmatmul.mubr.bf16.gmra.mrb[0].mxu0 %v1383
    %v1422 = vpop.f32.mrb[0].mxu0
    %v1423 = vadd.f32 0.0, %v1422
    %v1424 = vpop.f32.mrb[0].mxu0
    %v1425 = vpop.f32.mrb[0].mxu0
    %v1426 = vpop.f32.mrb[0].mxu0
    %1427 = vdwg.mxu0
    %v1428 = vmul.f32 %v1423, 0.25
    %v1429 = vsel %vm382, %v1428, -inf
    %1430 = vmax.xlane.f32.xlu0 %v1429
    %v1431 = vpop.xlane.xlu0 %1430
    %v1432 = vsub.f32 %v1428, %v1431
    %v1433 = vmul.f32 %v1432, 1.442695
    %v1434 = vpow.pop %v1433
    %v1435 = vsel %vm382, %v1434, 0.0
    %1436 = vadd.xlane.f32.xlu0 %v1435
    %v1437 = vpop.xlane.xlu0 %1436
    %v1438 = vrcp.pop %v1437
    %v1439 = vmul.f32 %v1434, %v1438
    %v1440 = vsel %vm401, %v1377, 0
    %v1441 = vpack.c.bf16 %v1439, %v1439
    %v1442 = vsel %vm406, %v1377, 0
    %v1444 = vsel %vm283, %v1442, 0
    %1446 = vmatprep.subr.bf16.mxu0 0
    %1447 = vmatpush1.bf16.xpose.msra.mxu0 %v1386
    %1448 = vmatprep.subr.bf16.mxu0 0
    %1449 = vmatpush1.bf16.xpose.msra.mxu0 0
    %1450 = vmatprep.subr.bf16.mxu0 0
    %1451 = vmatpush1.bf16.xpose.msra.mxu0 0
    %1452 = vmatprep.subr.bf16.mxu0 0
    %1453 = vmatpush1.bf16.xpose.msra.mxu0 0
    %1454 = vmatprep.subr.bf16.mxu0 0
    %1455 = vmatpush1.bf16.xpose.msra.mxu0 0
    %1456 = vmatprep.subr.bf16.mxu0 0
    %1457 = vmatpush1.bf16.xpose.msra.mxu0 0
    %1458 = vmatprep.subr.bf16.mxu0 0
    %1459 = vmatpush1.bf16.xpose.msra.mxu0 0
    %1460 = vmatprep.subr.bf16.mxu0 0
    %1461 = vmatpush1.bf16.xpose.msra.mxu0 0
    %1462 = vmatprep.subr.bf16.mxu0 0
    %1463 = vmatpush1.bf16.xpose.msra.mxu0 0
    %1464 = vmatprep.subr.bf16.mxu0 0
    %1465 = vmatpush1.bf16.xpose.msra.mxu0 0
    %1466 = vmatprep.subr.bf16.mxu0 0
    %1467 = vmatpush1.bf16.xpose.msra.mxu0 0
    %1468 = vmatprep.subr.bf16.mxu0 0
    %1469 = vmatpush1.bf16.xpose.msra.mxu0 0
    %1470 = vmatprep.subr.bf16.mxu0 0
    %1471 = vmatpush1.bf16.xpose.msra.mxu0 0
    %1472 = vmatprep.subr.bf16.mxu0 0
    %1473 = vmatpush1.bf16.xpose.msra.mxu0 0
    %1474 = vmatprep.subr.bf16.mxu0 0
    %1475 = vmatpush1.bf16.xpose.msra.mxu0 0
    %1476 = vmatprep.subr.bf16.mxu0 0
    %1477 = vmatpush1.bf16.xpose.msra.mxu0 0
    %1478 = vmatprep.mubr.bf16.mxu0 0
    %1479 = vmatmul.mubr.bf16.gmra.mrb[0].mxu0 %v1444
    %v1480 = vpop.f32.mrb[0].mxu0
    %v1481 = vadd.f32 0.0, %v1480
    %v1482 = vpop.f32.mrb[0].mxu0
    %v1483 = vpop.f32.mrb[0].mxu0
    %v1484 = vpop.f32.mrb[0].mxu0
    %1485 = vdwg.mxu0
    %v1486 = vmul.f32 %v1481, 0.25
    %v1487 = vsel %vm382, %v1486, -inf
    %1488 = vmax.xlane.f32.xlu0 %v1487
    %v1489 = vpop.xlane.xlu0 %1488
    %v1490 = vsub.f32 %v1486, %v1489
    %v1491 = vmul.f32 %v1490, 1.442695
    %v1492 = vpow.pop %v1491
    %v1493 = vsel %vm382, %v1492, 0.0
    %1494 = vadd.xlane.f32.xlu0 %v1493
    %v1495 = vpop.xlane.xlu0 %1494
    %v1496 = vrcp.pop %v1495
    %v1497 = vmul.f32 %v1492, %v1496
    %v1498 = vsel %vm470, %v1377, 0
    %v1499 = vpack.c.bf16 %v1497, %v1497
    %1501 = vrot.lane.b32.xlu0 %v1498, 64
    %v1502 = vpop.permute.xlu0 %1501
    %v1504 = vsel %vm382, %v1499, 0
    %v1507 = vsel %vm479, %v1502, 0
    %1509 = vmatprep.subr.bf16.mxu0 0
    %1510 = vmatpush1.bf16.msra.mxu0 %v1507
    %1511 = vmatprep.subr.bf16.mxu0 0
    %1512 = vmatpush1.bf16.msra.mxu0 0
    %1513 = vmatprep.subr.bf16.mxu0 0
    %1514 = vmatpush1.bf16.msra.mxu0 0
    %1515 = vmatprep.subr.bf16.mxu0 0
    %1516 = vmatpush1.bf16.msra.mxu0 0
    %1517 = vmatprep.subr.bf16.mxu0 0
    %1518 = vmatpush1.bf16.msra.mxu0 0
    %1519 = vmatprep.subr.bf16.mxu0 0
    %1520 = vmatpush1.bf16.msra.mxu0 0
    %1521 = vmatprep.subr.bf16.mxu0 0
    %1522 = vmatpush1.bf16.msra.mxu0 0
    %1523 = vmatprep.subr.bf16.mxu0 0
    %1524 = vmatpush1.bf16.msra.mxu0 0
    %1525 = vmatprep.subr.bf16.mxu0 0
    %1526 = vmatpush1.bf16.msra.mxu0 0
    %1527 = vmatprep.subr.bf16.mxu0 0
    %1528 = vmatpush1.bf16.msra.mxu0 0
    %1529 = vmatprep.subr.bf16.mxu0 0
    %1530 = vmatpush1.bf16.msra.mxu0 0
    %1531 = vmatprep.subr.bf16.mxu0 0
    %1532 = vmatpush1.bf16.msra.mxu0 0
    %1533 = vmatprep.subr.bf16.mxu0 0
    %1534 = vmatpush1.bf16.msra.mxu0 0
    %1535 = vmatprep.subr.bf16.mxu0 0
    %1536 = vmatpush1.bf16.msra.mxu0 0
    %1537 = vmatprep.subr.bf16.mxu0 0
    %1538 = vmatpush1.bf16.msra.mxu0 0
    %1539 = vmatprep.subr.bf16.mxu0 0
    %1540 = vmatpush1.bf16.msra.mxu0 0
    %1541 = vmatprep.mubr.bf16.mxu0 0
    %1542 = vmatmul.mubr.bf16.gmra.mrb[0].mxu0 %v1504
    %v1543 = vpop.f32.mrb[0].mxu0
    %v1544 = vadd.f32 0.0, %v1543
    %v1545 = vpop.f32.mrb[0].mxu0
    %v1546 = vpop.f32.mrb[0].mxu0
    %v1547 = vpop.f32.mrb[0].mxu0
    %1548 = vdwg.mxu0
    %1550 = vrot.lane.b32.xlu0 %v1440, 64
    %v1551 = vpop.permute.xlu0 %1550
    %v1553 = vsel %vm382, %v1441, 0
    %v1556 = vsel %vm479, %v1551, 0
    %1558 = vmatprep.subr.bf16.mxu0 0
    %1559 = vmatpush1.bf16.msra.mxu0 %v1556
    %1560 = vmatprep.subr.bf16.mxu0 0
    %1561 = vmatpush1.bf16.msra.mxu0 0
    %1562 = vmatprep.subr.bf16.mxu0 0
    %1563 = vmatpush1.bf16.msra.mxu0 0
    %1564 = vmatprep.subr.bf16.mxu0 0
    %1565 = vmatpush1.bf16.msra.mxu0 0
    %1566 = vmatprep.subr.bf16.mxu0 0
    %1567 = vmatpush1.bf16.msra.mxu0 0
    %1568 = vmatprep.subr.bf16.mxu0 0
    %1569 = vmatpush1.bf16.msra.mxu0 0
    %1570 = vmatprep.subr.bf16.mxu0 0
    %1571 = vmatpush1.bf16.msra.mxu0 0
    %1572 = vmatprep.subr.bf16.mxu0 0
    %1573 = vmatpush1.bf16.msra.mxu0 0
    %1574 = vmatprep.subr.bf16.mxu0 0
    %1575 = vmatpush1.bf16.msra.mxu0 0
    %1576 = vmatprep.subr.bf16.mxu0 0
    %1577 = vmatpush1.bf16.msra.mxu0 0
    %1578 = vmatprep.subr.bf16.mxu0 0
    %1579 = vmatpush1.bf16.msra.mxu0 0
    %1580 = vmatprep.subr.bf16.mxu0 0
    %1581 = vmatpush1.bf16.msra.mxu0 0
    %1582 = vmatprep.subr.bf16.mxu0 0
    %1583 = vmatpush1.bf16.msra.mxu0 0
    %1584 = vmatprep.subr.bf16.mxu0 0
    %1585 = vmatpush1.bf16.msra.mxu0 0
    %1586 = vmatprep.subr.bf16.mxu0 0
    %1587 = vmatpush1.bf16.msra.mxu0 0
    %1588 = vmatprep.subr.bf16.mxu0 0
    %1589 = vmatpush1.bf16.msra.mxu0 0
    %1590 = vmatprep.mubr.bf16.mxu0 0
    %1591 = vmatmul.mubr.bf16.gmra.mrb[0].mxu0 %v1553
    %v1592 = vpop.f32.mrb[0].mxu0
    %v1593 = vadd.f32 %v1544, %v1592
    %v1594 = vpop.f32.mrb[0].mxu0
    %v1595 = vpop.f32.mrb[0].mxu0
    %v1596 = vpop.f32.mrb[0].mxu0
    %1597 = vdwg.mxu0
    %v1598 = vpack.c.bf16 %v1593, %v1593
    %v1600 = vlaneseq
    %v1601 = vshrl.u32 %v1600, 7
    %v1602 = vsub.s32 0, %v1601
    %v1603 = vrot.slane %v1315, %v1602
    %v1609 = vunpack.c.l.b16 %v1310
    %v1610 = vunpack.c.l.b16 %v1311
    %v1611 = vunpack.c.l.b16 %v1312
    %v1612 = vunpack.c.l.b16 %v1313
    %v1613 = vpack.c.b16 %v1610, %v1609
    %v1614 = vpack.c.b16 %v1612, %v1611
    %v1618 = vsel %vm283, %v1598, 0
    %1620 = vmatprep.subr.bf16.mxu0 0
    %1621 = vmatpush1.bf16.msra.mxu0 %v1613
    %1622 = vmatprep.subr.bf16.mxu0 0
    %1623 = vmatpush1.bf16.msra.mxu0 %v1614
    %1624 = vmatprep.subr.bf16.mxu0 0
    %1625 = vmatpush1.bf16.msra.mxu0 0
    %1626 = vmatprep.subr.bf16.mxu0 0
    %1627 = vmatpush1.bf16.msra.mxu0 0
    %1628 = vmatprep.subr.bf16.mxu0 0
    %1629 = vmatpush1.bf16.msra.mxu0 0
    %1630 = vmatprep.subr.bf16.mxu0 0
    %1631 = vmatpush1.bf16.msra.mxu0 0
    %1632 = vmatprep.subr.bf16.mxu0 0
    %1633 = vmatpush1.bf16.msra.mxu0 0
    %1634 = vmatprep.subr.bf16.mxu0 0
    %1635 = vmatpush1.bf16.msra.mxu0 0
    %1636 = vmatprep.subr.bf16.mxu0 0
    %1637 = vmatpush1.bf16.msra.mxu0 0
    %1638 = vmatprep.subr.bf16.mxu0 0
    %1639 = vmatpush1.bf16.msra.mxu0 0
    %1640 = vmatprep.subr.bf16.mxu0 0
    %1641 = vmatpush1.bf16.msra.mxu0 0
    %1642 = vmatprep.subr.bf16.mxu0 0
    %1643 = vmatpush1.bf16.msra.mxu0 0
    %1644 = vmatprep.subr.bf16.mxu0 0
    %1645 = vmatpush1.bf16.msra.mxu0 0
    %1646 = vmatprep.subr.bf16.mxu0 0
    %1647 = vmatpush1.bf16.msra.mxu0 0
    %1648 = vmatprep.subr.bf16.mxu0 0
    %1649 = vmatpush1.bf16.msra.mxu0 0
    %1650 = vmatprep.subr.bf16.mxu0 0
    %1651 = vmatpush1.bf16.msra.mxu0 0
    %1652 = vmatprep.mubr.bf16.mxu0 0
    %1653 = vmatmul.mubr.bf16.gmra.mrb[0].mxu0 %v1618
    %v1654 = vpop.f32.mrb[0].mxu0
    %v1655 = vadd.f32 %v1603, %v1654
    %v1656 = vpop.f32.mrb[0].mxu0
    %v1657 = vpop.f32.mrb[0].mxu0
    %v1658 = vpop.f32.mrb[0].mxu0
    %1659 = vdwg.mxu0
    %v1660 = vadd.f32 %v629, %v1655
    %v1661 = vadd.f32 %v1291, %v1655
    %v1662 = vsel %vm283, %v1661, 0.0
    %1663 = vadd.xlane.f32.xlu0 %v1662
    %v1664 = vpop.xlane.xlu0 %1663
    %v1665 = vmul.f32 %v1664, %v638
    %v1666 = vmul.f32 %v1661, %v1661
    %v1667 = vsel %vm283, %v1666, 0.0
    %1668 = vadd.xlane.f32.xlu0 %v1667
    %v1669 = vpop.xlane.xlu0 %1668
    %v1670 = vmul.f32 %v1669, %v638
    %v1671 = vmul.f32 %v1665, %v1665
    %v1672 = vsub.f32 %v1670, %v1671
    %v1673 = vsub.f32 %v1661, %v1665
    %v1674 = vadd.f32 %v1672, 1e-05
    %v1675 = vrsqrt.pop %v1674
    %v1676 = vmul.f32 %v1673, %v1675
    %v1678 = vlaneseq
    %v1679 = vshrl.u32 %v1678, 7
    %v1680 = vsub.s32 0, %v1679
    %v1681 = vrot.slane %v1293, %v1680
    %v1683 = vmul.f32 %v1676, %v1681
    %v1685 = vlaneseq
    %v1686 = vshrl.u32 %v1685, 7
    %v1687 = vsub.s32 0, %v1686
    %v1688 = vrot.slane %v1297, %v1687
    %v1690 = vadd.f32 %v1683, %v1688
    %v1691 = vpack.c.bf16 %v1690, %v1690
    %s1692 = scalar_lea.vmem [#allocation8], 64
    %v1693 = vld [vmem:[%s1692] sm:$0xf]
    %v1694 = vld [vmem:[%s1692 + $0x4] sm:$0xf]
    %v1695 = vld [vmem:[%s1692 + $0x8] sm:$0xf]
    %v1696 = vld [vmem:[%s1692 + $0xc] sm:$0xf]
    %s1697 = scalar_lea.vmem [#allocation10], 4
    %v1698 = vld [vmem:[%s1697] sm:$0x1]
    %s1699 = scalar_lea.vmem [#allocation11], 64
    %v1700 = vld [vmem:[%s1699] sm:$0xf]
    %v1701 = vld [vmem:[%s1699 + $0x4] sm:$0xf]
    %v1702 = vld [vmem:[%s1699 + $0x8] sm:$0xf]
    %v1703 = vld [vmem:[%s1699 + $0xc] sm:$0xf]
    %s1704 = scalar_lea.vmem [#allocation13], 4
    %v1705 = vld [vmem:[%s1704] sm:$0x1]
    %v1707 = vlaneseq
    %v1708 = vshrl.u32 %v1707, 7
    %v1709 = vsub.s32 0, %v1708
    %v1710 = vrot.slane %v1698, %v1709
    %v1716 = vunpack.c.l.b16 %v1693
    %v1717 = vunpack.c.l.b16 %v1694
    %v1718 = vunpack.c.l.b16 %v1695
    %v1719 = vunpack.c.l.b16 %v1696
    %v1720 = vpack.c.b16 %v1717, %v1716
    %v1721 = vpack.c.b16 %v1719, %v1718
    %v1725 = vsel %vm283, %v1691, 0
    %1727 = vmatprep.subr.bf16.mxu0 0
    %1728 = vmatpush1.bf16.msra.mxu0 %v1720
    %1729 = vmatprep.subr.bf16.mxu0 0
    %1730 = vmatpush1.bf16.msra.mxu0 %v1721
    %1731 = vmatprep.subr.bf16.mxu0 0
    %1732 = vmatpush1.bf16.msra.mxu0 0
    %1733 = vmatprep.subr.bf16.mxu0 0
    %1734 = vmatpush1.bf16.msra.mxu0 0
    %1735 = vmatprep.subr.bf16.mxu0 0
    %1736 = vmatpush1.bf16.msra.mxu0 0
    %1737 = vmatprep.subr.bf16.mxu0 0
    %1738 = vmatpush1.bf16.msra.mxu0 0
    %1739 = vmatprep.subr.bf16.mxu0 0
    %1740 = vmatpush1.bf16.msra.mxu0 0
    %1741 = vmatprep.subr.bf16.mxu0 0
    %1742 = vmatpush1.bf16.msra.mxu0 0
    %1743 = vmatprep.subr.bf16.mxu0 0
    %1744 = vmatpush1.bf16.msra.mxu0 0
    %1745 = vmatprep.subr.bf16.mxu0 0
    %1746 = vmatpush1.bf16.msra.mxu0 0
    %1747 = vmatprep.subr.bf16.mxu0 0
    %1748 = vmatpush1.bf16.msra.mxu0 0
    %1749 = vmatprep.subr.bf16.mxu0 0
    %1750 = vmatpush1.bf16.msra.mxu0 0
    %1751 = vmatprep.subr.bf16.mxu0 0
    %1752 = vmatpush1.bf16.msra.mxu0 0
    %1753 = vmatprep.subr.bf16.mxu0 0
    %1754 = vmatpush1.bf16.msra.mxu0 0
    %1755 = vmatprep.subr.bf16.mxu0 0
    %1756 = vmatpush1.bf16.msra.mxu0 0
    %1757 = vmatprep.subr.bf16.mxu0 0
    %1758 = vmatpush1.bf16.msra.mxu0 0
    %1759 = vmatprep.mubr.bf16.mxu0 0
    %1760 = vmatmul.mubr.bf16.gmra.mrb[0].mxu0 %v1725
    %v1761 = vpop.f32.mrb[0].mxu0
    %v1762 = vadd.f32 %v1710, %v1761
    %v1763 = vpop.f32.mrb[0].mxu0
    %v1764 = vpop.f32.mrb[0].mxu0
    %v1765 = vpop.f32.mrb[0].mxu0
    %1766 = vdwg.mxu0
    %1767 = vrot.lane.b32.xlu0 %v1720, 96
    %v1768 = vpop.permute.xlu0 %1767
    %1769 = vrot.lane.b32.xlu0 %v1721, 96
    %v1770 = vpop.permute.xlu0 %1769
    %1773 = vrot.lane.b32.xlu0 %v1710, 96
    %v1774 = vpop.permute.xlu0 %1773
    %1776 = vmatprep.subr.bf16.mxu0 0
    %1777 = vmatpush1.bf16.msra.mxu0 %v1768
    %1778 = vmatprep.subr.bf16.mxu0 0
    %1779 = vmatpush1.bf16.msra.mxu0 %v1770
    %1780 = vmatprep.subr.bf16.mxu0 0
    %1781 = vmatpush1.bf16.msra.mxu0 0
    %1782 = vmatprep.subr.bf16.mxu0 0
    %1783 = vmatpush1.bf16.msra.mxu0 0
    %1784 = vmatprep.subr.bf16.mxu0 0
    %1785 = vmatpush1.bf16.msra.mxu0 0
    %1786 = vmatprep.subr.bf16.mxu0 0
    %1787 = vmatpush1.bf16.msra.mxu0 0
    %1788 = vmatprep.subr.bf16.mxu0 0
    %1789 = vmatpush1.bf16.msra.mxu0 0
    %1790 = vmatprep.subr.bf16.mxu0 0
    %1791 = vmatpush1.bf16.msra.mxu0 0
    %1792 = vmatprep.subr.bf16.mxu0 0
    %1793 = vmatpush1.bf16.msra.mxu0 0
    %1794 = vmatprep.subr.bf16.mxu0 0
    %1795 = vmatpush1.bf16.msra.mxu0 0
    %1796 = vmatprep.subr.bf16.mxu0 0
    %1797 = vmatpush1.bf16.msra.mxu0 0
    %1798 = vmatprep.subr.bf16.mxu0 0
    %1799 = vmatpush1.bf16.msra.mxu0 0
    %1800 = vmatprep.subr.bf16.mxu0 0
    %1801 = vmatpush1.bf16.msra.mxu0 0
    %1802 = vmatprep.subr.bf16.mxu0 0
    %1803 = vmatpush1.bf16.msra.mxu0 0
    %1804 = vmatprep.subr.bf16.mxu0 0
    %1805 = vmatpush1.bf16.msra.mxu0 0
    %1806 = vmatprep.subr.bf16.mxu0 0
    %1807 = vmatpush1.bf16.msra.mxu0 0
    %1808 = vmatprep.mubr.bf16.mxu0 0
    %1809 = vmatmul.mubr.bf16.gmra.mrb[0].mxu0 %v751
    %v1810 = vpop.f32.mrb[0].mxu0
    %v1811 = vadd.f32 %v1774, %v1810
    %v1812 = vpop.f32.mrb[0].mxu0
    %v1813 = vpop.f32.mrb[0].mxu0
    %v1814 = vpop.f32.mrb[0].mxu0
    %1815 = vdwg.mxu0
    %v1816 = vpack.c.bf16 %v1762, %v1762
    %v1817 = vpack.c.bf16 %v1811, %v1811
    %v1818 = vsel %vm330, %v1816, 0
    %v1820 = vsel %vm283, %v1818, 0
    %v1823 = vsel %vm283, %v1817, 0
    %1825 = vmatprep.subr.bf16.mxu0 0
    %1826 = vmatpush1.bf16.xpose.msra.mxu0 %v1823
    %1827 = vmatprep.subr.bf16.mxu0 0
    %1828 = vmatpush1.bf16.xpose.msra.mxu0 0
    %1829 = vmatprep.subr.bf16.mxu0 0
    %1830 = vmatpush1.bf16.xpose.msra.mxu0 0
    %1831 = vmatprep.subr.bf16.mxu0 0
    %1832 = vmatpush1.bf16.xpose.msra.mxu0 0
    %1833 = vmatprep.subr.bf16.mxu0 0
    %1834 = vmatpush1.bf16.xpose.msra.mxu0 0
    %1835 = vmatprep.subr.bf16.mxu0 0
    %1836 = vmatpush1.bf16.xpose.msra.mxu0 0
    %1837 = vmatprep.subr.bf16.mxu0 0
    %1838 = vmatpush1.bf16.xpose.msra.mxu0 0
    %1839 = vmatprep.subr.bf16.mxu0 0
    %1840 = vmatpush1.bf16.xpose.msra.mxu0 0
    %1841 = vmatprep.subr.bf16.mxu0 0
    %1842 = vmatpush1.bf16.xpose.msra.mxu0 0
    %1843 = vmatprep.subr.bf16.mxu0 0
    %1844 = vmatpush1.bf16.xpose.msra.mxu0 0
    %1845 = vmatprep.subr.bf16.mxu0 0
    %1846 = vmatpush1.bf16.xpose.msra.mxu0 0
    %1847 = vmatprep.subr.bf16.mxu0 0
    %1848 = vmatpush1.bf16.xpose.msra.mxu0 0
    %1849 = vmatprep.subr.bf16.mxu0 0
    %1850 = vmatpush1.bf16.xpose.msra.mxu0 0
    %1851 = vmatprep.subr.bf16.mxu0 0
    %1852 = vmatpush1.bf16.xpose.msra.mxu0 0
    %1853 = vmatprep.subr.bf16.mxu0 0
    %1854 = vmatpush1.bf16.xpose.msra.mxu0 0
    %1855 = vmatprep.subr.bf16.mxu0 0
    %1856 = vmatpush1.bf16.xpose.msra.mxu0 0
    %1857 = vmatprep.mubr.bf16.mxu0 0
    %1858 = vmatmul.mubr.bf16.gmra.mrb[0].mxu0 %v1820
    %v1859 = vpop.f32.mrb[0].mxu0
    %v1860 = vadd.f32 0.0, %v1859
    %v1861 = vpop.f32.mrb[0].mxu0
    %v1862 = vpop.f32.mrb[0].mxu0
    %v1863 = vpop.f32.mrb[0].mxu0
    %1864 = vdwg.mxu0
    %v1865 = vmul.f32 %v1860, 0.25
    %v1866 = vsel %vm382, %v1865, -inf
    %1867 = vmax.xlane.f32.xlu0 %v1866
    %v1868 = vpop.xlane.xlu0 %1867
    %v1869 = vsub.f32 %v1865, %v1868
    %v1870 = vmul.f32 %v1869, 1.442695
    %v1871 = vpow.pop %v1870
    %v1872 = vsel %vm382, %v1871, 0.0
    %1873 = vadd.xlane.f32.xlu0 %v1872
    %v1874 = vpop.xlane.xlu0 %1873
    %v1875 = vrcp.pop %v1874
    %v1876 = vmul.f32 %v1871, %v1875
    %v1877 = vsel %vm856, %v1817, 0
    %v1878 = vpack.c.bf16 %v1876, %v1876
    %v1879 = vsel %vm406, %v1816, 0
    %v1881 = vsel %vm283, %v1879, 0
    %1883 = vmatprep.subr.bf16.mxu0 0
    %1884 = vmatpush1.bf16.xpose.msra.mxu0 %v1823
    %1885 = vmatprep.subr.bf16.mxu0 0
    %1886 = vmatpush1.bf16.xpose.msra.mxu0 0
    %1887 = vmatprep.subr.bf16.mxu0 0
    %1888 = vmatpush1.bf16.xpose.msra.mxu0 0
    %1889 = vmatprep.subr.bf16.mxu0 0
    %1890 = vmatpush1.bf16.xpose.msra.mxu0 0
    %1891 = vmatprep.subr.bf16.mxu0 0
    %1892 = vmatpush1.bf16.xpose.msra.mxu0 0
    %1893 = vmatprep.subr.bf16.mxu0 0
    %1894 = vmatpush1.bf16.xpose.msra.mxu0 0
    %1895 = vmatprep.subr.bf16.mxu0 0
    %1896 = vmatpush1.bf16.xpose.msra.mxu0 0
    %1897 = vmatprep.subr.bf16.mxu0 0
    %1898 = vmatpush1.bf16.xpose.msra.mxu0 0
    %1899 = vmatprep.subr.bf16.mxu0 0
    %1900 = vmatpush1.bf16.xpose.msra.mxu0 0
    %1901 = vmatprep.subr.bf16.mxu0 0
    %1902 = vmatpush1.bf16.xpose.msra.mxu0 0
    %1903 = vmatprep.subr.bf16.mxu0 0
    %1904 = vmatpush1.bf16.xpose.msra.mxu0 0
    %1905 = vmatprep.subr.bf16.mxu0 0
    %1906 = vmatpush1.bf16.xpose.msra.mxu0 0
    %1907 = vmatprep.subr.bf16.mxu0 0
    %1908 = vmatpush1.bf16.xpose.msra.mxu0 0
    %1909 = vmatprep.subr.bf16.mxu0 0
    %1910 = vmatpush1.bf16.xpose.msra.mxu0 0
    %1911 = vmatprep.subr.bf16.mxu0 0
    %1912 = vmatpush1.bf16.xpose.msra.mxu0 0
    %1913 = vmatprep.subr.bf16.mxu0 0
    %1914 = vmatpush1.bf16.xpose.msra.mxu0 0
    %1915 = vmatprep.mubr.bf16.mxu0 0
    %1916 = vmatmul.mubr.bf16.gmra.mrb[0].mxu0 %v1881
    %v1917 = vpop.f32.mrb[0].mxu0
    %v1918 = vadd.f32 0.0, %v1917
    %v1919 = vpop.f32.mrb[0].mxu0
    %v1920 = vpop.f32.mrb[0].mxu0
    %v1921 = vpop.f32.mrb[0].mxu0
    %1922 = vdwg.mxu0
    %v1923 = vmul.f32 %v1918, 0.25
    %v1924 = vsel %vm382, %v1923, -inf
    %1925 = vmax.xlane.f32.xlu0 %v1924
    %v1926 = vpop.xlane.xlu0 %1925
    %v1927 = vsub.f32 %v1923, %v1926
    %v1928 = vmul.f32 %v1927, 1.442695
    %v1929 = vpow.pop %v1928
    %v1930 = vsel %vm382, %v1929, 0.0
    %1931 = vadd.xlane.f32.xlu0 %v1930
    %v1932 = vpop.xlane.xlu0 %1931
    %v1933 = vrcp.pop %v1932
    %v1934 = vmul.f32 %v1929, %v1933
    %v1935 = vsel %vm917, %v1817, 0
    %v1936 = vpack.c.bf16 %v1934, %v1934
    %1938 = vrot.lane.b32.xlu0 %v1935, 96
    %v1939 = vpop.permute.xlu0 %1938
    %v1941 = vsel %vm382, %v1936, 0
    %v1944 = vsel %vm479, %v1939, 0
    %1946 = vmatprep.subr.bf16.mxu0 0
    %1947 = vmatpush1.bf16.msra.mxu0 %v1944
    %1948 = vmatprep.subr.bf16.mxu0 0
    %1949 = vmatpush1.bf16.msra.mxu0 0
    %1950 = vmatprep.subr.bf16.mxu0 0
    %1951 = vmatpush1.bf16.msra.mxu0 0
    %1952 = vmatprep.subr.bf16.mxu0 0
    %1953 = vmatpush1.bf16.msra.mxu0 0
    %1954 = vmatprep.subr.bf16.mxu0 0
    %1955 = vmatpush1.bf16.msra.mxu0 0
    %1956 = vmatprep.subr.bf16.mxu0 0
    %1957 = vmatpush1.bf16.msra.mxu0 0
    %1958 = vmatprep.subr.bf16.mxu0 0
    %1959 = vmatpush1.bf16.msra.mxu0 0
    %1960 = vmatprep.subr.bf16.mxu0 0
    %1961 = vmatpush1.bf16.msra.mxu0 0
    %1962 = vmatprep.subr.bf16.mxu0 0
    %1963 = vmatpush1.bf16.msra.mxu0 0
    %1964 = vmatprep.subr.bf16.mxu0 0
    %1965 = vmatpush1.bf16.msra.mxu0 0
    %1966 = vmatprep.subr.bf16.mxu0 0
    %1967 = vmatpush1.bf16.msra.mxu0 0
    %1968 = vmatprep.subr.bf16.mxu0 0
    %1969 = vmatpush1.bf16.msra.mxu0 0
    %1970 = vmatprep.subr.bf16.mxu0 0
    %1971 = vmatpush1.bf16.msra.mxu0 0
    %1972 = vmatprep.subr.bf16.mxu0 0
    %1973 = vmatpush1.bf16.msra.mxu0 0
    %1974 = vmatprep.subr.bf16.mxu0 0
    %1975 = vmatpush1.bf16.msra.mxu0 0
    %1976 = vmatprep.subr.bf16.mxu0 0
    %1977 = vmatpush1.bf16.msra.mxu0 0
    %1978 = vmatprep.mubr.bf16.mxu0 0
    %1979 = vmatmul.mubr.bf16.gmra.mrb[0].mxu0 %v1941
    %v1980 = vpop.f32.mrb[0].mxu0
    %v1981 = vadd.f32 0.0, %v1980
    %v1982 = vpop.f32.mrb[0].mxu0
    %v1983 = vpop.f32.mrb[0].mxu0
    %v1984 = vpop.f32.mrb[0].mxu0
    %1985 = vdwg.mxu0
    %1987 = vrot.lane.b32.xlu0 %v1877, 96
    %v1988 = vpop.permute.xlu0 %1987
    %v1990 = vsel %vm382, %v1878, 0
    %v1993 = vsel %vm479, %v1988, 0
    %1995 = vmatprep.subr.bf16.mxu0 0
    %1996 = vmatpush1.bf16.msra.mxu0 %v1993
    %1997 = vmatprep.subr.bf16.mxu0 0
    %1998 = vmatpush1.bf16.msra.mxu0 0
    %1999 = vmatprep.subr.bf16.mxu0 0
    %2000 = vmatpush1.bf16.msra.mxu0 0
    %2001 = vmatprep.subr.bf16.mxu0 0
    %2002 = vmatpush1.bf16.msra.mxu0 0
    %2003 = vmatprep.subr.bf16.mxu0 0
    %2004 = vmatpush1.bf16.msra.mxu0 0
    %2005 = vmatprep.subr.bf16.mxu0 0
    %2006 = vmatpush1.bf16.msra.mxu0 0
    %2007 = vmatprep.subr.bf16.mxu0 0
    %2008 = vmatpush1.bf16.msra.mxu0 0
    %2009 = vmatprep.subr.bf16.mxu0 0
    %2010 = vmatpush1.bf16.msra.mxu0 0
    %2011 = vmatprep.subr.bf16.mxu0 0
    %2012 = vmatpush1.bf16.msra.mxu0 0
    %2013 = vmatprep.subr.bf16.mxu0 0
    %2014 = vmatpush1.bf16.msra.mxu0 0
    %2015 = vmatprep.subr.bf16.mxu0 0
    %2016 = vmatpush1.bf16.msra.mxu0 0
    %2017 = vmatprep.subr.bf16.mxu0 0
    %2018 = vmatpush1.bf16.msra.mxu0 0
    %2019 = vmatprep.subr.bf16.mxu0 0
    %2020 = vmatpush1.bf16.msra.mxu0 0
    %2021 = vmatprep.subr.bf16.mxu0 0
    %2022 = vmatpush1.bf16.msra.mxu0 0
    %2023 = vmatprep.subr.bf16.mxu0 0
    %2024 = vmatpush1.bf16.msra.mxu0 0
    %2025 = vmatprep.subr.bf16.mxu0 0
    %2026 = vmatpush1.bf16.msra.mxu0 0
    %2027 = vmatprep.mubr.bf16.mxu0 0
    %2028 = vmatmul.mubr.bf16.gmra.mrb[0].mxu0 %v1990
    %v2029 = vpop.f32.mrb[0].mxu0
    %v2030 = vadd.f32 %v1981, %v2029
    %v2031 = vpop.f32.mrb[0].mxu0
    %v2032 = vpop.f32.mrb[0].mxu0
    %v2033 = vpop.f32.mrb[0].mxu0
    %2034 = vdwg.mxu0
    %v2035 = vpack.c.bf16 %v2030, %v2030
    %v2037 = vlaneseq
    %v2038 = vshrl.u32 %v2037, 7
    %v2039 = vsub.s32 0, %v2038
    %v2040 = vrot.slane %v1705, %v2039
    %v2046 = vunpack.c.l.b16 %v1700
    %v2047 = vunpack.c.l.b16 %v1701
    %v2048 = vunpack.c.l.b16 %v1702
    %v2049 = vunpack.c.l.b16 %v1703
    %v2050 = vpack.c.b16 %v2047, %v2046
    %v2051 = vpack.c.b16 %v2049, %v2048
    %v2055 = vsel %vm283, %v2035, 0
    %2057 = vmatprep.subr.bf16.mxu0 0
    %2058 = vmatpush1.bf16.msra.mxu0 %v2050
    %2059 = vmatprep.subr.bf16.mxu0 0
    %2060 = vmatpush1.bf16.msra.mxu0 %v2051
    %2061 = vmatprep.subr.bf16.mxu0 0
    %2062 = vmatpush1.bf16.msra.mxu0 0
    %2063 = vmatprep.subr.bf16.mxu0 0
    %2064 = vmatpush1.bf16.msra.mxu0 0
    %2065 = vmatprep.subr.bf16.mxu0 0
    %2066 = vmatpush1.bf16.msra.mxu0 0
    %2067 = vmatprep.subr.bf16.mxu0 0
    %2068 = vmatpush1.bf16.msra.mxu0 0
    %2069 = vmatprep.subr.bf16.mxu0 0
    %2070 = vmatpush1.bf16.msra.mxu0 0
    %2071 = vmatprep.subr.bf16.mxu0 0
    %2072 = vmatpush1.bf16.msra.mxu0 0
    %2073 = vmatprep.subr.bf16.mxu0 0
    %2074 = vmatpush1.bf16.msra.mxu0 0
    %2075 = vmatprep.subr.bf16.mxu0 0
    %2076 = vmatpush1.bf16.msra.mxu0 0
    %2077 = vmatprep.subr.bf16.mxu0 0
    %2078 = vmatpush1.bf16.msra.mxu0 0
    %2079 = vmatprep.subr.bf16.mxu0 0
    %2080 = vmatpush1.bf16.msra.mxu0 0
    %2081 = vmatprep.subr.bf16.mxu0 0
    %2082 = vmatpush1.bf16.msra.mxu0 0
    %2083 = vmatprep.subr.bf16.mxu0 0
    %2084 = vmatpush1.bf16.msra.mxu0 0
    %2085 = vmatprep.subr.bf16.mxu0 0
    %2086 = vmatpush1.bf16.msra.mxu0 0
    %2087 = vmatprep.subr.bf16.mxu0 0
    %2088 = vmatpush1.bf16.msra.mxu0 0
    %2089 = vmatprep.mubr.bf16.mxu0 0
    %2090 = vmatmul.mubr.bf16.gmra.mrb[0].mxu0 %v2055
    %v2091 = vpop.f32.mrb[0].mxu0
    %v2092 = vadd.f32 %v2040, %v2091
    %v2093 = vpop.f32.mrb[0].mxu0
    %v2094 = vpop.f32.mrb[0].mxu0
    %v2095 = vpop.f32.mrb[0].mxu0
    %2096 = vdwg.mxu0
    %v2097 = vadd.f32 %v1075, %v2092
    %v2098 = vadd.f32 %v1690, %v2092
    %v2099 = vsel %vm283, %v2098, 0.0
    %2100 = vadd.xlane.f32.xlu0 %v2099
    %v2101 = vpop.xlane.xlu0 %2100
    %v2102 = vmul.f32 %v2101, %v638
    %v2103 = vmul.f32 %v2098, %v2098
    %v2104 = vsel %vm283, %v2103, 0.0
    %2105 = vadd.xlane.f32.xlu0 %v2104
    %v2106 = vpop.xlane.xlu0 %2105
    %v2107 = vmul.f32 %v2106, %v638
    %v2108 = vmul.f32 %v2102, %v2102
    %v2109 = vsub.f32 %v2107, %v2108
    %v2110 = vsub.f32 %v2098, %v2102
    %v2111 = vadd.f32 %v2109, 1e-05
    %v2112 = vrsqrt.pop %v2111
    %v2113 = vmul.f32 %v2110, %v2112
    %v2115 = vlaneseq
    %v2116 = vshrl.u32 %v2115, 7
    %v2117 = vsub.s32 0, %v2116
    %v2118 = vrot.slane %v1294, %v2117
    %v2120 = vmul.f32 %v2113, %v2118
    %v2122 = vlaneseq
    %v2123 = vshrl.u32 %v2122, 7
    %v2124 = vsub.s32 0, %v2123
    %v2125 = vrot.slane %v1298, %v2124
    %v2127 = vadd.f32 %v2120, %v2125
    %v2128 = vpack.c.bf16 %v2127, %v2127
    %s2129 = scalar_lea.vmem [#allocation14], 16
    %v2130 = vld [vmem:[%s2129] sm:$0xf]
    %v2131 = vld [vmem:[%s2129 + $0x4] sm:$0xf]
    %v2132 = vld [vmem:[%s2129 + $0x8] sm:$0xf]
    %v2133 = vld [vmem:[%s2129 + $0xc] sm:$0xf]
    %s2134 = scalar_lea.vmem [#allocation16], 1
    %v2135 = vld [vmem:[%s2134] sm:$0x1]
    %s2136 = scalar_lea.vmem [#allocation17], 32
    %v2137 = vld [vmem:[%s2136] sm:$0xf]
    %v2138 = vld [vmem:[%s2136 + $0x4] sm:$0xf]
    %v2139 = vld [vmem:[%s2136 + $0x8] sm:$0xf]
    %v2140 = vld [vmem:[%s2136 + $0xc] sm:$0xf]
    %v2141 = vld [vmem:[%s2136 + $0x10] sm:$0xf]
    %v2142 = vld [vmem:[%s2136 + $0x14] sm:$0xf]
    %v2143 = vld [vmem:[%s2136 + $0x18] sm:$0xf]
    %v2144 = vld [vmem:[%s2136 + $0x1c] sm:$0xf]
    %s2145 = scalar_lea.vmem [#allocation19], 1
    %v2146 = vld [vmem:[%s2145] sm:$0x1]
    %v2148 = vlaneseq
    %v2149 = vshrl.u32 %v2148, 7
    %v2150 = vsub.s32 0, %v2149
    %v2151 = vrot.slane %v2135, %v2150
    %v2157 = vunpack.c.l.b16 %v2130
    %v2158 = vunpack.c.l.b16 %v2131
    %v2159 = vunpack.c.l.b16 %v2132
    %v2160 = vunpack.c.l.b16 %v2133
    %v2161 = vpack.c.b16 %v2158, %v2157
    %v2162 = vpack.c.b16 %v2160, %v2159
    %v2166 = vsel %vm283, %v2128, 0
    %2168 = vmatprep.subr.bf16.mxu0 0
    %2169 = vmatpush1.bf16.msra.mxu0 %v2161
    %2170 = vmatprep.subr.bf16.mxu0 0
    %2171 = vmatpush1.bf16.msra.mxu0 %v2162
    %2172 = vmatprep.subr.bf16.mxu0 0
    %2173 = vmatpush1.bf16.msra.mxu0 0
    %2174 = vmatprep.subr.bf16.mxu0 0
    %2175 = vmatpush1.bf16.msra.mxu0 0
    %2176 = vmatprep.subr.bf16.mxu0 0
    %2177 = vmatpush1.bf16.msra.mxu0 0
    %2178 = vmatprep.subr.bf16.mxu0 0
    %2179 = vmatpush1.bf16.msra.mxu0 0
    %2180 = vmatprep.subr.bf16.mxu0 0
    %2181 = vmatpush1.bf16.msra.mxu0 0
    %2182 = vmatprep.subr.bf16.mxu0 0
    %2183 = vmatpush1.bf16.msra.mxu0 0
    %2184 = vmatprep.subr.bf16.mxu0 0
    %2185 = vmatpush1.bf16.msra.mxu0 0
    %2186 = vmatprep.subr.bf16.mxu0 0
    %2187 = vmatpush1.bf16.msra.mxu0 0
    %2188 = vmatprep.subr.bf16.mxu0 0
    %2189 = vmatpush1.bf16.msra.mxu0 0
    %2190 = vmatprep.subr.bf16.mxu0 0
    %2191 = vmatpush1.bf16.msra.mxu0 0
    %2192 = vmatprep.subr.bf16.mxu0 0
    %2193 = vmatpush1.bf16.msra.mxu0 0
    %2194 = vmatprep.subr.bf16.mxu0 0
    %2195 = vmatpush1.bf16.msra.mxu0 0
    %2196 = vmatprep.subr.bf16.mxu0 0
    %2197 = vmatpush1.bf16.msra.mxu0 0
    %2198 = vmatprep.subr.bf16.mxu0 0
    %2199 = vmatpush1.bf16.msra.mxu0 0
    %2200 = vmatprep.mubr.bf16.mxu0 0
    %2201 = vmatmul.mubr.bf16.gmra.mrb[0].mxu0 %v2166
    %v2202 = vpop.f32.mrb[0].mxu0
    %v2203 = vadd.f32 %v2151, %v2202
    %v2204 = vpop.f32.mrb[0].mxu0
    %v2205 = vpop.f32.mrb[0].mxu0
    %v2206 = vpop.f32.mrb[0].mxu0
    %2207 = vdwg.mxu0
    %v2208 = vmax.f32 %v2203, 0.0
    %v2209 = vpack.c.bf16 %v2208, %v2208
    %v2211 = vlaneseq
    %v2212 = vshrl.u32 %v2211, 7
    %v2213 = vsub.s32 0, %v2212
    %v2214 = vrot.slane %v2146, %v2213
    %v2224 = vunpack.c.l.b16 %v2137
    %v2225 = vunpack.c.l.b16 %v2138
    %v2226 = vunpack.c.l.b16 %v2139
    %v2227 = vunpack.c.l.b16 %v2140
    %v2228 = vunpack.c.l.b16 %v2141
    %v2229 = vunpack.c.l.b16 %v2142
    %v2230 = vunpack.c.l.b16 %v2143
    %v2231 = vunpack.c.l.b16 %v2144
    %v2232 = vpack.c.b16 %v2225, %v2224
    %v2233 = vpack.c.b16 %v2227, %v2226
    %v2234 = vpack.c.b16 %v2229, %v2228
    %v2235 = vpack.c.b16 %v2231, %v2230
    %v2241 = vsel %vm1218, %v2209, 0
    %2243 = vmatprep.subr.bf16.mxu0 0
    %2244 = vmatpush1.bf16.msra.mxu0 %v2232
    %2245 = vmatprep.subr.bf16.mxu0 0
    %2246 = vmatpush1.bf16.msra.mxu0 %v2233
    %2247 = vmatprep.subr.bf16.mxu0 0
    %2248 = vmatpush1.bf16.msra.mxu0 %v2234
    %2249 = vmatprep.subr.bf16.mxu0 0
    %2250 = vmatpush1.bf16.msra.mxu0 %v2235
    %2251 = vmatprep.subr.bf16.mxu0 0
    %2252 = vmatpush1.bf16.msra.mxu0 0
    %2253 = vmatprep.subr.bf16.mxu0 0
    %2254 = vmatpush1.bf16.msra.mxu0 0
    %2255 = vmatprep.subr.bf16.mxu0 0
    %2256 = vmatpush1.bf16.msra.mxu0 0
    %2257 = vmatprep.subr.bf16.mxu0 0
    %2258 = vmatpush1.bf16.msra.mxu0 0
    %2259 = vmatprep.subr.bf16.mxu0 0
    %2260 = vmatpush1.bf16.msra.mxu0 0
    %2261 = vmatprep.subr.bf16.mxu0 0
    %2262 = vmatpush1.bf16.msra.mxu0 0
    %2263 = vmatprep.subr.bf16.mxu0 0
    %2264 = vmatpush1.bf16.msra.mxu0 0
    %2265 = vmatprep.subr.bf16.mxu0 0
    %2266 = vmatpush1.bf16.msra.mxu0 0
    %2267 = vmatprep.subr.bf16.mxu0 0
    %2268 = vmatpush1.bf16.msra.mxu0 0
    %2269 = vmatprep.subr.bf16.mxu0 0
    %2270 = vmatpush1.bf16.msra.mxu0 0
    %2271 = vmatprep.subr.bf16.mxu0 0
    %2272 = vmatpush1.bf16.msra.mxu0 0
    %2273 = vmatprep.subr.bf16.mxu0 0
    %2274 = vmatpush1.bf16.msra.mxu0 0
    %2275 = vmatprep.mubr.bf16.mxu0 0
    %2276 = vmatmul.mubr.bf16.gmra.mrb[0].mxu0 %v2241
    %v2277 = vpop.f32.mrb[0].mxu0
    %v2278 = vadd.f32 %v2214, %v2277
    %v2279 = vpop.f32.mrb[0].mxu0
    %v2280 = vpop.f32.mrb[0].mxu0
    %v2281 = vpop.f32.mrb[0].mxu0
    %2282 = vdwg.mxu0
    %v2283 = vadd.f32 %v2127, %v2278
    %v2284 = vsel %vm283, %v2283, 0.0
    %2285 = vadd.xlane.f32.xlu0 %v2284
    %v2286 = vpop.xlane.xlu0 %2285
    %v2287 = vmul.f32 %v2286, %v638
    %v2288 = vmul.f32 %v2283, %v2283
    %v2289 = vsel %vm283, %v2288, 0.0
    %2290 = vadd.xlane.f32.xlu0 %v2289
    %v2291 = vpop.xlane.xlu0 %2290
    %v2292 = vmul.f32 %v2291, %v638
    %v2293 = vmul.f32 %v2287, %v2287
    %v2294 = vsub.f32 %v2292, %v2293
    %v2295 = vsub.f32 %v2283, %v2287
    %v2296 = vadd.f32 %v2294, 1e-05
    %v2297 = vrsqrt.pop %v2296
    %v2298 = vmul.f32 %v2295, %v2297
    %v2300 = vlaneseq
    %v2301 = vshrl.u32 %v2300, 7
    %v2302 = vsub.s32 0, %v2301
    %v2303 = vrot.slane %v1295, %v2302
    %v2305 = vmul.f32 %v2298, %v2303
    %v2307 = vlaneseq
    %v2308 = vshrl.u32 %v2307, 7
    %v2309 = vsub.s32 0, %v2308
    %v2310 = vrot.slane %v1299, %v2309
    %v2312 = vadd.f32 %v2305, %v2310
    %v2313 = vld [vmem:[#allocation23] sm:$0x1]
    %s2314 = scalar_lea.vmem [#allocation23], 1
    %v2315 = vld [vmem:[%s2314] sm:$0x1]
    %v2316 = vsel %vm283, %v2312, 0.0
    %2317 = vadd.xlane.f32.xlu0 %v2316
    %v2318 = vpop.xlane.xlu0 %2317
    %v2319 = vmul.f32 %v2318, %v638
    %v2320 = vmul.f32 %v2312, %v2312
    %v2321 = vsel %vm283, %v2320, 0.0
    %2322 = vadd.xlane.f32.xlu0 %v2321
    %v2323 = vpop.xlane.xlu0 %2322
    %v2324 = vmul.f32 %v2323, %v638
    %v2325 = vmul.f32 %v2319, %v2319
    %v2326 = vsub.f32 %v2324, %v2325
    %v2327 = vsub.f32 %v2312, %v2319
    %v2328 = vadd.f32 %v2326, 1e-05
    %v2329 = vrsqrt.pop %v2328
    %v2330 = vmul.f32 %v2327, %v2329
    %v2332 = vlaneseq
    %v2333 = vshrl.u32 %v2332, 7
    %v2334 = vsub.s32 0, %v2333
    %v2335 = vrot.slane %v2313, %v2334
    %v2337 = vmul.f32 %v2330, %v2335
    %v2339 = vlaneseq
    %v2340 = vshrl.u32 %v2339, 7
    %v2341 = vsub.s32 0, %v2340
    %v2342 = vrot.slane %v2315, %v2341
    %v2344 = vadd.f32 %v2337, %v2342
    %2346 = vrot.lane.b32.xlu0 %v1660, 32
    %v2347 = vpop.permute.xlu0 %2346
    %2350 = vrot.lane.b32.xlu0 %v2097, 64
    %v2351 = vpop.permute.xlu0 %2350
    %v2353 = vsel %vm283, %v2344, %v2347
    %v2354 = vsel %vm1218, %v2353, %v2351
    %vm2355 = vcmask 785408
    %v2356 = vsel %vm2355, %v2354, 0.0
    %2357 = vst [vmem:[#allocation25] sm:$0xff] %v2356
    // Predicated region
    $region114: #{tpu_custom_call.1} parent=1 // pred_check
      _
    $region115: #{tpu_custom_call.1} parent=1 // pred_check_branch
      %2359 = sbr.rel (0) target = $region117
    $region116: #{tpu_custom_call.1} parent=1 // pred_region
      %s2361 = ssub.s32 128, 128
      %2362 = vsyncadd [#allocation4], %s2361
      %s2364 = sshll.u32 [#allocation25], 4
      %s2365 = int_to_ptr.vmem [resolvable:$true] %s2364
      %2367 = dma.vmem_to_hbm [thread:$0]  %s2365, 128, %s14, [#allocation4]
    $region117: #{tpu_custom_call.1} parent=1 // pred_fallthru
      _
    // Predicated region
    $region118: #{tpu_custom_call.1} parent=1 // pred_check
      _
    $region119: #{tpu_custom_call.1} parent=1 // pred_check_branch
      %2369 = sbr.rel (0) target = $region121
    $region120: #{tpu_custom_call.1} parent=1 // pred_region
      %2370 = dma.done [#allocation4], 128
    $region121: #{tpu_custom_call.1} parent=1 // pred_fallthru
      _
    %2371 = vsyncpa [#allocation3], 1
    %2372 = vsyncpa [#allocation6], 1
    %2373 = vsyncpa [#allocation9], 1
    %2374 = vsyncpa [#allocation12], 1
    %2375 = vsyncpa [#allocation15], 1
    %2376 = vsyncpa [#allocation18], 1
    %2377 = vsyncpa [#allocation21], 1
    %2378 = vsyncpa [#allocation24], 1
    %2379 = vsyncpa [#allocation4], 1

</llo_original>
